<compile_context>
chip_gen: v5e
topology: v5e:2x2
jax: 0.10.0
libtpu: 0.0.40
codegen_flags: <defaults>
</compile_context>

<pallas_src>
import math

import jax
import jax.numpy as jnp
from jax.experimental import pallas as pl
from jax.experimental.pallas import tpu as pltpu


def _softshrink(v, lambd):
    return jnp.where(v > lambd, v - lambd,
                     jnp.where(v < -lambd, v + lambd, jnp.zeros_like(v)))


def _vmem_limit_bytes(N, C):
    """Footprint-derived VMEM limit, clamped to the device's capacity."""
    bf, f32 = 2, 4
    consts = 2 * N * N * bf                                        # FnR, FnI
    consts += (2 * (C * 2 * C) + (2 * C) * (2 * C)
               + 2 * (2 * C) * C) * bf                             # S1L,S1R,S2,SGt,SGb
    consts += 2 * (2 * C) * f32                                    # biases
    blocks = N * C * bf + N * C * f32                              # x tile + out tile
    live = 6 * N * 2 * C * f32                                     # in-flight f32 temps
    need = 2 * (consts + blocks) + live + (4 << 20)                # dbl-buffer + headroom
    try:
        cap = pltpu.get_tpu_info().vmem_capacity_bytes
    except Exception:
        cap = 64 * 1024 * 1024
    return int(max(16 << 20, min(need, int(cap * 0.9))))


def make_einfft(dim, num_blocks=4, sparsity_threshold=0.01):
    NB = num_blocks
    assert dim % NB == 0
    BS = dim // NB
    lambd = float(sparsity_threshold)

    # ------------------------------ kernel ------------------------------
    def kernel(x_ref, fnr_ref, fni_ref, s1l_ref, s1r_ref, s2_ref,
               sgt_ref, sgb_ref, b1_ref, b2_ref, o_ref):
        f32, bf16 = jnp.float32, jnp.bfloat16

        x = x_ref[0]                               # (N, C)  bf16
        fnr = fnr_ref[...]                         # (N, N)  bf16
        fni = fni_ref[...]

        # Forward ortho DFT along N: real input -> complex (ar, ai).
        ar = jnp.dot(fnr, x, preferred_element_type=f32)            # (N, C) f32
        ai = jnp.dot(fni, x, preferred_element_type=f32)

        # Layer 1: forward block-axis DFT fused into the weights; the complex
        # multiply is one stacked [re | im] slab of shape (N, 2C).
        h1 = jnp.maximum(
            jnp.dot(ar.astype(bf16), s1l_ref[...], preferred_element_type=f32)
            + jnp.dot(ai.astype(bf16), s1r_ref[...], preferred_element_type=f32)
            + b1_ref[...], 0.0)                    # (N, 2C) f32

        # Layer 2: single stacked (2C, 2C) complex-as-real matmul + softshrink.
        h2 = (jnp.dot(h1.astype(bf16), s2_ref[...], preferred_element_type=f32)
              + b2_ref[...])
        z = _softshrink(h2, lambd).astype(bf16)    # (N, 2C)

        # Inverse block-axis DFT (conjugate), splitting the slab back to re/im.
        ur = jnp.dot(z, sgt_ref[...], preferred_element_type=f32).astype(bf16)  # (N, C)
        ui = jnp.dot(z, sgb_ref[...], preferred_element_type=f32).astype(bf16)

        # Inverse ortho DFT along N; keep only the real part (torch .to(float32)):
        #   Gn = conj(Fn)  =>  Re(Gn @ u) = FnR @ ur + FnI @ ui
        o_ref[0] = (jnp.dot(fnr, ur, preferred_element_type=f32)
                    + jnp.dot(fni, ui, preferred_element_type=f32))

    # ----------------------------- wrapper ------------------------------
    def apply(x, params):
        w1, w2, b1, b2 = params
        B, N, C = x.shape
        assert C == dim
        f32, bf = jnp.float32, jnp.bfloat16

        # (N, N) ortho DFT pair, shared by the forward and inverse stages.
        n = jnp.arange(N, dtype=f32)
        ang_n = 2.0 * jnp.pi * (n[:, None] * n[None, :]) / N
        sn = 1.0 / math.sqrt(N)
        FnR = (jnp.cos(ang_n) * sn).astype(bf)
        FnI = (-jnp.sin(ang_n) * sn).astype(bf)

        # Size-NB block-axis DFT lifted to (C, C) via kron with I_BS.
        q = jnp.arange(NB, dtype=f32)
        ang_b = 2.0 * jnp.pi * (q[:, None] * q[None, :]) / NB
        sb = 1.0 / math.sqrt(NB)
        FbR = jnp.kron(jnp.cos(ang_b) * sb, jnp.eye(BS, dtype=f32))
        FbI = jnp.kron(-jnp.sin(ang_b) * sb, jnp.eye(BS, dtype=f32))

        eye_nb = jnp.eye(NB, dtype=f32)

        def block_diag(w):                         # (NB, BS, BS) -> (C, C)
            return jnp.einsum('ak,kdj->adkj', eye_nb, w).reshape(C, C)

        W1R, W1I = block_diag(w1[0]), block_diag(w1[1])
        W2R, W2I = block_diag(w2[0]), block_diag(w2[1])

        # Fuse the forward block DFT into layer-1 weights: M1 = Fb @ W1 (complex).
        M1R = FbR @ W1R - FbI @ W1I
        M1I = FbR @ W1I + FbI @ W1R

        # Stacked complex-as-real matrices (right-multiplication convention).
        S1L = jnp.concatenate([M1R, M1I], axis=1).astype(bf)     # (C, 2C)
        S1R = jnp.concatenate([-M1I, M1R], axis=1).astype(bf)    # (C, 2C)
        S2 = jnp.concatenate(
            [jnp.concatenate([W2R, W2I], axis=1),
             jnp.concatenate([-W2I, W2R], axis=1)], axis=0).astype(bf)  # (2C, 2C)
        # Inverse block DFT Gb = conj(Fb): GbR = FbR, GbI = -FbI.
        SGt = jnp.concatenate([FbR, FbI], axis=0).astype(bf)     # (2C, C): [GbR; -GbI]
        SGb = jnp.concatenate([-FbI, FbR], axis=0).astype(bf)    # (2C, C): [GbI;  GbR]

        b1row = jnp.concatenate([b1[0].reshape(-1), b1[1].reshape(-1)]
                                ).reshape(1, 2 * C).astype(f32)
        b2row = jnp.concatenate([b2[0].reshape(-1), b2[1].reshape(-1)]
                                ).reshape(1, 2 * C).astype(f32)

        x_spec = pl.BlockSpec((1, N, C), lambda b: (b, 0, 0))
        nmat_spec = pl.BlockSpec((N, N), lambda b: (0, 0))
        s1_spec = pl.BlockSpec((C, 2 * C), lambda b: (0, 0))
        s2_spec = pl.BlockSpec((2 * C, 2 * C), lambda b: (0, 0))
        sg_spec = pl.BlockSpec((2 * C, C), lambda b: (0, 0))
        bias_spec = pl.BlockSpec((1, 2 * C), lambda b: (0, 0))

        out = pl.pallas_call(
            kernel,
            out_shape=jax.ShapeDtypeStruct((B, N, C), jnp.float32),
            grid=(B,),
            in_specs=[x_spec, nmat_spec, nmat_spec, s1_spec, s1_spec, s2_spec,
                      sg_spec, sg_spec, bias_spec, bias_spec],
            out_specs=x_spec,
            compiler_params=pltpu.CompilerParams(
                dimension_semantics=("parallel",),
                vmem_limit_bytes=_vmem_limit_bytes(N, C)),
        )(x.astype(bf), FnR, FnI, S1L, S1R, S2, SGt, SGb, b1row, b2row)
        return out

    return jax.jit(apply)


def einfft_reference(x, params, num_blocks=4, lambd=0.01):
    """Pure-JAX reference mirroring the PyTorch forward (for sanity check)."""
    w1, w2, b1, b2 = params
    B, N, C = x.shape
    bs = C // num_blocks
    xv = x.reshape(B, N, num_blocks, bs)
    Xf = jnp.fft.fft2(xv.astype(jnp.complex64), axes=(1, 2), norm="ortho")

    def mul(inp, w):
        return jnp.einsum("...bd,bdk->...bk", inp, w)

    xr1 = jax.nn.relu(mul(Xf.real, w1[0]) - mul(Xf.imag, w1[1]) + b1[0])
    xi1 = jax.nn.relu(mul(Xf.real, w1[1]) + mul(Xf.imag, w1[0]) + b1[1])
    xr2 = mul(xr1, w2[0]) - mul(xi1, w2[1]) + b2[0]
    xi2 = mul(xr1, w2[1]) + mul(xi1, w2[0]) + b2[1]
    xr2 = _softshrink(xr2, lambd)
    xi2 = _softshrink(xi2, lambd)
    Xc = (xr2 + 1j * xi2).astype(jnp.complex64)
    y = jnp.fft.ifft2(Xc, axes=(1, 2), norm="ortho")
    # torch `.to(torch.float32)` on a complex tensor keeps the real part.
    return jnp.real(y).reshape(B, N, C).astype(jnp.float32)


if __name__ == "__main__":
    B, H, W = 2, 16, 16
    C = 128                       # hidden dim -> num_blocks=4, block_size=32
    N = H * W
    NB, BS = 4, C // 4

    key = jax.random.PRNGKey(0)
    k1, k2, k3, k4, kx = jax.random.split(key, 5)
    scale = 0.02
    w1 = scale * jax.random.normal(k1, (2, NB, BS, BS), jnp.float32)
    w2 = scale * jax.random.normal(k2, (2, NB, BS, BS), jnp.float32)
    b1 = scale * jax.random.normal(k3, (2, NB, BS), jnp.float32)
    b2 = scale * jax.random.normal(k4, (2, NB, BS), jnp.float32)
    params = (w1, w2, b1, b2)

    x = jax.random.normal(kx, (B, N, C), jnp.float32)

    einfft = make_einfft(C, num_blocks=NB, sparsity_threshold=0.01)
    out = jax.block_until_ready(einfft(x, params))

    # Sanity check against the pure-JAX reference (FFT-based).
    ref = jax.block_until_ready(einfft_reference(x, params, num_blocks=NB, lambd=0.01))
    assert out.shape == (B, N, C) and out.dtype == jnp.float32
    max_err = float(jnp.max(jnp.abs(out - ref)))
    assert jnp.allclose(out, ref, atol=3e-3, rtol=2e-2), max_err
    print("KERNEL_OK")
</pallas_src>

<mosaic_0001>
module attributes {stable_mosaic.version = 11 : i64} {
  func.func @kernel(%arg0: i32, %arg1: memref<1x256x128xbf16, #tpu.memory_space<vmem>>, %arg2: memref<256x256xbf16, #tpu.memory_space<vmem>>, %arg3: memref<256x256xbf16, #tpu.memory_space<vmem>>, %arg4: memref<128x256xbf16, #tpu.memory_space<vmem>>, %arg5: memref<128x256xbf16, #tpu.memory_space<vmem>>, %arg6: memref<256x256xbf16, #tpu.memory_space<vmem>>, %arg7: memref<256x128xbf16, #tpu.memory_space<vmem>>, %arg8: memref<256x128xbf16, #tpu.memory_space<vmem>>, %arg9: memref<1x256xf32, #tpu.memory_space<vmem>>, %arg10: memref<1x256xf32, #tpu.memory_space<vmem>>, %arg11: memref<1x256x128xf32, #tpu.memory_space<vmem>>) attributes {dimension_semantics = [#tpu.dimension_semantics<parallel>], iteration_bounds = array<i64: 2>, scalar_prefetch = 0 : i64, scratch_operands = 0 : i64, tpu.core_type = #tpu.core_type<tc>, window_params = [{transform_indices = @transform_0, window_bounds = array<i64: 1, 256, 128>}, {pipeline_mode = #tpu.pipeline_mode<synchronous>, transform_indices = @transform_1, window_bounds = array<i64: 256, 256>}, {pipeline_mode = #tpu.pipeline_mode<synchronous>, transform_indices = @transform_2, window_bounds = array<i64: 256, 256>}, {pipeline_mode = #tpu.pipeline_mode<synchronous>, transform_indices = @transform_3, window_bounds = array<i64: 128, 256>}, {pipeline_mode = #tpu.pipeline_mode<synchronous>, transform_indices = @transform_4, window_bounds = array<i64: 128, 256>}, {pipeline_mode = #tpu.pipeline_mode<synchronous>, transform_indices = @transform_5, window_bounds = array<i64: 256, 256>}, {pipeline_mode = #tpu.pipeline_mode<synchronous>, transform_indices = @transform_6, window_bounds = array<i64: 256, 128>}, {pipeline_mode = #tpu.pipeline_mode<synchronous>, transform_indices = @transform_7, window_bounds = array<i64: 256, 128>}, {pipeline_mode = #tpu.pipeline_mode<synchronous>, transform_indices = @transform_8, window_bounds = array<i64: 1, 256>}, {pipeline_mode = #tpu.pipeline_mode<synchronous>, transform_indices = @transform_9, window_bounds = array<i64: 1, 256>}, {transform_indices = @transform_10, window_bounds = array<i64: 1, 256, 128>}]} {
    %c0 = arith.constant 0 : index
    %c0_0 = arith.constant 0 : index
    %c0_1 = arith.constant 0 : index
    %0 = vector.load %arg1[%c0, %c0_0, %c0_1] : memref<1x256x128xbf16, #tpu.memory_space<vmem>>, vector<1x256x128xbf16>
    %1 = vector.shape_cast %0 : vector<1x256x128xbf16> to vector<256x128xbf16>
    %c0_2 = arith.constant 0 : index
    %c0_3 = arith.constant 0 : index
    %2 = vector.load %arg2[%c0_2, %c0_3] : memref<256x256xbf16, #tpu.memory_space<vmem>>, vector<256x256xbf16>
    %c0_4 = arith.constant 0 : index
    %c0_5 = arith.constant 0 : index
    %3 = vector.load %arg3[%c0_4, %c0_5] : memref<256x256xbf16, #tpu.memory_space<vmem>>, vector<256x256xbf16>
    %cst = arith.constant dense<0.000000e+00> : vector<256x128xf32>
    %4 = tpu.matmul %2, %1, %cst {dimension_numbers = #tpu.dot_dimension_numbers<[1], [0], [0], [1], [0, 0, 1, 1], [], []>} : vector<256x256xbf16>, vector<256x128xbf16>, vector<256x128xf32> -> vector<256x128xf32>
    %cst_6 = arith.constant dense<0.000000e+00> : vector<256x128xf32>
    %5 = tpu.matmul %3, %1, %cst_6 {dimension_numbers = #tpu.dot_dimension_numbers<[1], [0], [0], [1], [0, 0, 1, 1], [], []>} : vector<256x256xbf16>, vector<256x128xbf16>, vector<256x128xf32> -> vector<256x128xf32>
    %6 = arith.truncf %4 : vector<256x128xf32> to vector<256x128xbf16>
    %c0_7 = arith.constant 0 : index
    %c0_8 = arith.constant 0 : index
    %7 = vector.load %arg4[%c0_7, %c0_8] : memref<128x256xbf16, #tpu.memory_space<vmem>>, vector<128x256xbf16>
    %cst_9 = arith.constant dense<0.000000e+00> : vector<256x256xf32>
    %8 = tpu.matmul %6, %7, %cst_9 {dimension_numbers = #tpu.dot_dimension_numbers<[1], [0], [0], [1], [0, 0, 1, 1], [], []>} : vector<256x128xbf16>, vector<128x256xbf16>, vector<256x256xf32> -> vector<256x256xf32>
    %9 = arith.truncf %5 : vector<256x128xf32> to vector<256x128xbf16>
    %c0_10 = arith.constant 0 : index
    %c0_11 = arith.constant 0 : index
    %10 = vector.load %arg5[%c0_10, %c0_11] : memref<128x256xbf16, #tpu.memory_space<vmem>>, vector<128x256xbf16>
    %cst_12 = arith.constant dense<0.000000e+00> : vector<256x256xf32>
    %11 = tpu.matmul %9, %10, %cst_12 {dimension_numbers = #tpu.dot_dimension_numbers<[1], [0], [0], [1], [0, 0, 1, 1], [], []>} : vector<256x128xbf16>, vector<128x256xbf16>, vector<256x256xf32> -> vector<256x256xf32>
    %12 = arith.addf %8, %11 : vector<256x256xf32>
    %c0_13 = arith.constant 0 : index
    %c0_14 = arith.constant 0 : index
    %13 = vector.load %arg9[%c0_13, %c0_14] : memref<1x256xf32, #tpu.memory_space<vmem>>, vector<1x256xf32>
    %14 = vector.broadcast %13 : vector<1x256xf32> to vector<256x256xf32>
    %15 = arith.addf %12, %14 : vector<256x256xf32>
    %cst_15 = arith.constant 0.000000e+00 : f32
    %16 = vector.broadcast %cst_15 : f32 to vector<256x256xf32>
    %17 = arith.maximumf %15, %16 : vector<256x256xf32>
    %18 = arith.truncf %17 : vector<256x256xf32> to vector<256x256xbf16>
    %c0_16 = arith.constant 0 : index
    %c0_17 = arith.constant 0 : index
    %19 = vector.load %arg6[%c0_16, %c0_17] : memref<256x256xbf16, #tpu.memory_space<vmem>>, vector<256x256xbf16>
    %cst_18 = arith.constant dense<0.000000e+00> : vector<256x256xf32>
    %20 = tpu.matmul %18, %19, %cst_18 {dimension_numbers = #tpu.dot_dimension_numbers<[1], [0], [0], [1], [0, 0, 1, 1], [], []>} : vector<256x256xbf16>, vector<256x256xbf16>, vector<256x256xf32> -> vector<256x256xf32>
    %c0_19 = arith.constant 0 : index
    %c0_20 = arith.constant 0 : index
    %21 = vector.load %arg10[%c0_19, %c0_20] : memref<1x256xf32, #tpu.memory_space<vmem>>, vector<1x256xf32>
    %22 = vector.broadcast %21 : vector<1x256xf32> to vector<256x256xf32>
    %23 = arith.addf %20, %22 : vector<256x256xf32>
    %cst_21 = arith.constant 0.00999999977 : f32
    %24 = vector.broadcast %cst_21 : f32 to vector<256x256xf32>
    %25 = arith.cmpf ogt, %23, %24 : vector<256x256xf32>
    %cst_22 = arith.constant 0.00999999977 : f32
    %26 = vector.broadcast %cst_22 : f32 to vector<256x256xf32>
    %27 = arith.subf %23, %26 : vector<256x256xf32>
    %cst_23 = arith.constant -0.00999999977 : f32
    %28 = vector.broadcast %cst_23 : f32 to vector<256x256xf32>
    %29 = arith.cmpf olt, %23, %28 : vector<256x256xf32>
    %cst_24 = arith.constant 0.00999999977 : f32
    %30 = vector.broadcast %cst_24 : f32 to vector<256x256xf32>
    %31 = arith.addf %23, %30 : vector<256x256xf32>
    %cst_25 = arith.constant 0.000000e+00 : f32
    %32 = vector.broadcast %cst_25 : f32 to vector<256x256xf32>
    %33 = arith.select %29, %31, %32 : vector<256x256xi1>, vector<256x256xf32>
    %34 = arith.select %25, %27, %33 : vector<256x256xi1>, vector<256x256xf32>
    %35 = arith.truncf %34 : vector<256x256xf32> to vector<256x256xbf16>
    %c0_26 = arith.constant 0 : index
    %c0_27 = arith.constant 0 : index
    %36 = vector.load %arg7[%c0_26, %c0_27] : memref<256x128xbf16, #tpu.memory_space<vmem>>, vector<256x128xbf16>
    %cst_28 = arith.constant dense<0.000000e+00> : vector<256x128xf32>
    %37 = tpu.matmul %35, %36, %cst_28 {dimension_numbers = #tpu.dot_dimension_numbers<[1], [0], [0], [1], [0, 0, 1, 1], [], []>} : vector<256x256xbf16>, vector<256x128xbf16>, vector<256x128xf32> -> vector<256x128xf32>
    %38 = arith.truncf %37 : vector<256x128xf32> to vector<256x128xbf16>
    %c0_29 = arith.constant 0 : index
    %c0_30 = arith.constant 0 : index
    %39 = vector.load %arg8[%c0_29, %c0_30] : memref<256x128xbf16, #tpu.memory_space<vmem>>, vector<256x128xbf16>
    %cst_31 = arith.constant dense<0.000000e+00> : vector<256x128xf32>
    %40 = tpu.matmul %35, %39, %cst_31 {dimension_numbers = #tpu.dot_dimension_numbers<[1], [0], [0], [1], [0, 0, 1, 1], [], []>} : vector<256x256xbf16>, vector<256x128xbf16>, vector<256x128xf32> -> vector<256x128xf32>
    %41 = arith.truncf %40 : vector<256x128xf32> to vector<256x128xbf16>
    %cst_32 = arith.constant dense<0.000000e+00> : vector<256x128xf32>
    %42 = tpu.matmul %2, %38, %cst_32 {dimension_numbers = #tpu.dot_dimension_numbers<[1], [0], [0], [1], [0, 0, 1, 1], [], []>} : vector<256x256xbf16>, vector<256x128xbf16>, vector<256x128xf32> -> vector<256x128xf32>
    %cst_33 = arith.constant dense<0.000000e+00> : vector<256x128xf32>
    %43 = tpu.matmul %3, %41, %cst_33 {dimension_numbers = #tpu.dot_dimension_numbers<[1], [0], [0], [1], [0, 0, 1, 1], [], []>} : vector<256x256xbf16>, vector<256x128xbf16>, vector<256x128xf32> -> vector<256x128xf32>
    %44 = arith.addf %42, %43 : vector<256x128xf32>
    %c0_34 = arith.constant 0 : index
    %c0_35 = arith.constant 0 : index
    %c0_36 = arith.constant 0 : index
    %45 = vector.load %arg11[%c0_34, %c0_35, %c0_36] : memref<1x256x128xf32, #tpu.memory_space<vmem>>, vector<1x256x128xf32>
    %46 = vector.shape_cast %45 : vector<1x256x128xf32> to vector<256x128xf32>
    %47 = vector.shape_cast %44 : vector<256x128xf32> to vector<1x256x128xf32>
    tpu.vector_store %arg11[%c0_34, %c0_35, %c0_36], %47 {strides = array<i32>} : memref<1x256x128xf32, #tpu.memory_space<vmem>>, vector<1x256x128xf32>,
    return
  }
  func.func @transform_0(%arg0: i32) -> (i32, i32, i32) {
    %c0_i32 = arith.constant 0 : i32
    %c0_i32_0 = arith.constant 0 : i32
    %c0_i32_1 = arith.constant 0 : i32
    return %arg0, %c0_i32, %c0_i32_0 : i32, i32, i32
  }
  func.func @transform_1(%arg0: i32) -> (i32, i32) {
    %c0_i32 = arith.constant 0 : i32
    %c0_i32_0 = arith.constant 0 : i32
    %c0_i32_1 = arith.constant 0 : i32
    return %c0_i32, %c0_i32_0 : i32, i32
  }
  func.func @transform_2(%arg0: i32) -> (i32, i32) {
    %c0_i32 = arith.constant 0 : i32
    %c0_i32_0 = arith.constant 0 : i32
    %c0_i32_1 = arith.constant 0 : i32
    return %c0_i32, %c0_i32_0 : i32, i32
  }
  func.func @transform_3(%arg0: i32) -> (i32, i32) {
    %c0_i32 = arith.constant 0 : i32
    %c0_i32_0 = arith.constant 0 : i32
    %c0_i32_1 = arith.constant 0 : i32
    return %c0_i32, %c0_i32_0 : i32, i32
  }
  func.func @transform_4(%arg0: i32) -> (i32, i32) {
    %c0_i32 = arith.constant 0 : i32
    %c0_i32_0 = arith.constant 0 : i32
    %c0_i32_1 = arith.constant 0 : i32
    return %c0_i32, %c0_i32_0 : i32, i32
  }
  func.func @transform_5(%arg0: i32) -> (i32, i32) {
    %c0_i32 = arith.constant 0 : i32
    %c0_i32_0 = arith.constant 0 : i32
    %c0_i32_1 = arith.constant 0 : i32
    return %c0_i32, %c0_i32_0 : i32, i32
  }
  func.func @transform_6(%arg0: i32) -> (i32, i32) {
    %c0_i32 = arith.constant 0 : i32
    %c0_i32_0 = arith.constant 0 : i32
    %c0_i32_1 = arith.constant 0 : i32
    return %c0_i32, %c0_i32_0 : i32, i32
  }
  func.func @transform_7(%arg0: i32) -> (i32, i32) {
    %c0_i32 = arith.constant 0 : i32
    %c0_i32_0 = arith.constant 0 : i32
    %c0_i32_1 = arith.constant 0 : i32
    return %c0_i32, %c0_i32_0 : i32, i32
  }
  func.func @transform_8(%arg0: i32) -> (i32, i32) {
    %c0_i32 = arith.constant 0 : i32
    %c0_i32_0 = arith.constant 0 : i32
    %c0_i32_1 = arith.constant 0 : i32
    return %c0_i32, %c0_i32_0 : i32, i32
  }
  func.func @transform_9(%arg0: i32) -> (i32, i32) {
    %c0_i32 = arith.constant 0 : i32
    %c0_i32_0 = arith.constant 0 : i32
    %c0_i32_1 = arith.constant 0 : i32
    return %c0_i32, %c0_i32_0 : i32, i32
  }
  func.func @transform_10(%arg0: i32) -> (i32, i32, i32) {
    %c0_i32 = arith.constant 0 : i32
    %c0_i32_0 = arith.constant 0 : i32
    %c0_i32_1 = arith.constant 0 : i32
    return %arg0, %c0_i32, %c0_i32_0 : i32, i32, i32
  }
}

</mosaic_0001>

<llo_original>
// kernel: squeeze.12
$region0: #{squeeze.12}
  %s0 = inlined_call_operand.vmem [shape: f32[1,4,32], index: 0, kind: input, shape index: {}]
  %s1 = inlined_call_operand.vmem [shape: f32[128], index: 1, kind: output, shape index: {}]
  $region1: #{squeeze.12} parent=0
    #allocation0 [shape = 'u8[4096]{0}', space=vmem, size = 0x1000, scoped, tag = 'scoped mem for output reshape']
    #allocation1 [shape = 'u8[4096]{0}', space=vmem, size = 0x1000, scoped, tag = 'scoped mem for input reshape']
    %s3 = ssub.s32 16, 1
    %v4 = vld [vmem:[%s0] sm:%s3]
    %5 = vst [vmem:[#allocation1] sm:%s3] %v4
    %v6 = vld [vmem:[#allocation1] sm:$0x1]
    %vm7 = vcmask 261120
    %8 = vst.msk [vmem:[#allocation0] sm:$0x1] %vm7, %v6
    %s9 = scalar_lea.vmem [#allocation1], 3
    %v10 = vld [vmem:[%s9] sm:$0x1]
    %11 = vrot.lane.b32.xlu0 %v10, 96
    %v12 = vpop.permute.xlu0 %11
    %vm13 = vcmask 1048320
    %14 = vst.msk [vmem:[#allocation0] sm:$0x1] %vm13, %v12
    %s15 = scalar_lea.vmem [#allocation1], 2
    %v16 = vld [vmem:[%s15] sm:$0x1]
    %17 = vrot.lane.b32.xlu0 %v16, 64
    %v18 = vpop.permute.xlu0 %17
    %vm19 = vcmask 785920
    %20 = vst.msk [vmem:[#allocation0] sm:$0x1] %vm19, %v18
    %s21 = scalar_lea.vmem [#allocation1], 1
    %v22 = vld [vmem:[%s21] sm:$0x1]
    %23 = vrot.lane.b32.xlu0 %v22, 32
    %v24 = vpop.permute.xlu0 %23
    %vm25 = vcmask 523520
    %26 = vst.msk [vmem:[#allocation0] sm:$0x1] %vm25, %v24
    %s28 = ssub.s32 2, 1
    %v29 = vld [vmem:[#allocation0] sm:%s28]
    %s31 = ssub.s32 2, 1
    %32 = vst [vmem:[%s1] sm:%s31] %v29

// kernel: apply.1
$region0: #{apply.1}
  #allocation0 [shape = 'u32[]', space=smem, size = 0x4, offset = 0x4, fixed_abs, tag = 'smem constant byte address 0x4 - core index']
  #allocation1 [shape = 'u32[72,128]{1,0:T(1,128)}', space=vmem, size = 0x9000, scoped, tag = 'internal scratch']
  %s0 = inlined_call_operand.vmem [shape: bf16[2,256,128], index: 0, kind: input, shape index: {}]
  %s1 = inlined_call_operand.vmem [shape: bf16[256,256], index: 1, kind: input, shape index: {}]
  %s2 = inlined_call_operand.vmem [shape: bf16[256,256], index: 2, kind: input, shape index: {}]
  %s3 = inlined_call_operand.vmem [shape: bf16[128,256], index: 3, kind: input, shape index: {}]
  %s4 = inlined_call_operand.vmem [shape: bf16[128,256], index: 4, kind: input, shape index: {}]
  %s5 = inlined_call_operand.vmem [shape: bf16[256,256], index: 5, kind: input, shape index: {}]
  %s6 = inlined_call_operand.vmem [shape: bf16[256,128], index: 6, kind: input, shape index: {}]
  %s7 = inlined_call_operand.vmem [shape: bf16[256,128], index: 7, kind: input, shape index: {}]
  %s8 = inlined_call_operand.vmem [shape: f32[1,256], index: 8, kind: input, shape index: {}]
  %s9 = inlined_call_operand.vmem [shape: f32[1,256], index: 9, kind: input, shape index: {}]
  %s10 = inlined_call_operand.hbm [shape: f32[2,256,128], index: 10, kind: output, shape index: {}]
  %s11 = sld [smem:[#allocation0]]
  $region73: #{apply.1} parent=0
    _
  %s13 = ssub.s32 1, %s11
  %s14 = scalar_select 0, %s13, %s11
  $region1: #{apply.1} parent=0
    #allocation2 [shape = 'u8[262144]{0}', space=vmem, size = 0x40000, scoped, tag = 'output window, operand 0']
    #allocation3 [shape = 's32[2]{0}', space=sflag, size = 0x8, scoped, tag = 'scoped memory for apply.1']
    %15 = vsyncpa [#allocation3], 0
    %s16 = scalar_lea.sflag [#allocation3], 1
    %17 = vsyncpa %s16, 0
    loop: start=0, step=1, limit=4
    $region2: #{apply.1} parent=1 // loop_pre_header
      _
    $region3: #{apply.1} parent=1 // loop_header
      %s19 = sphi 0, %s23
      %p20 = scmp.ge.s32.totalorder %s19, 4
      %s29 = sphi 0, %s31
      %s32 = sphi 0, %s29
      %s33 = sphi 0, %s32
      %s49 = sphi 0, %s33
      %s53 = sphi 0, %s53
      %s55 = sphi 0, %s53
      %s56 = sphi 0, %s55
      %s70 = sphi 0, %s56
      %s74 = sphi 0, %s74
      %s76 = sphi 0, %s74
      %s77 = sphi 0, %s76
      %s91 = sphi 0, %s77
      %s95 = sphi 0, %s95
      %s97 = sphi 0, %s95
      %s98 = sphi 0, %s97
      %s112 = sphi 0, %s98
      %s116 = sphi 0, %s116
      %s118 = sphi 0, %s116
      %s119 = sphi 0, %s118
      %s133 = sphi 0, %s119
      %s137 = sphi 0, %s137
      %s139 = sphi 0, %s137
      %s140 = sphi 0, %s139
      %s154 = sphi 0, %s140
      %s158 = sphi 0, %s158
      %s160 = sphi 0, %s158
      %s161 = sphi 0, %s160
      %s175 = sphi 0, %s161
      %s179 = sphi 0, %s179
      %s181 = sphi 0, %s179
      %s182 = sphi 0, %s181
      %s196 = sphi 0, %s182
      %s200 = sphi 0, %s200
      %s202 = sphi 0, %s200
      %s203 = sphi 0, %s202
      %s217 = sphi 0, %s203
      %s221 = sphi 0, %s221
      %s223 = sphi 0, %s221
      %s224 = sphi 0, %s223
      %s238 = sphi 0, %s224
      %s244 = sphi 0, %s246
      %s247 = sphi 0, %s244
      %s248 = sphi 0, %s247
      %s264 = sphi 0, %s248
    $region4: #{apply.1} parent=1 // loop_header_branch
      %22 = sbr.rel (%p20) target = $region8
    $region5: #{apply.1} parent=1 // loop_body
      %s24 = ssub.s32 %s19, 1
      %s25 = ssub.s32 %s19, 2
      %s26 = sadd.s32 %s19, 1
      %s27 = ssub.s32 %s19, %s26
      %p28 = scmp.eq.s32.totalorder %s27, 0
      %s30 = sadd.s32 %s29, 1
      %s31 = scalar_select %p28, %s29, %s30
      %p34 = pneg %p28
      %p35 = scmp.eq.s32.totalorder %s19, 1
      %p36 = por %p34, %p35
      %p37 = scmp.ne.s32.totalorder %s29, %s32
      %p38 = scmp.eq.s32.totalorder %s19, 0
      %p39 = por %p37, %p38
      %p40 = scmp.ne.s32.totalorder %s29, %s32
      %p41 = scmp.eq.s32.totalorder %s24, 1
      %p42 = por %p40, %p41
      %p43 = scmp.ne.s32.totalorder %s32, %s33
      %p44 = scmp.eq.s32.totalorder %s24, 0
      %p45 = por %p43, %p44
      %p46 = scmp.ne.s32.totalorder %s32, %s33
      %p47 = scmp.eq.s32.totalorder %s25, 1
      %p48 = por %p46, %p47
      %p50 = scmp.ne.s32.totalorder %s33, %s49
      %p51 = scmp.eq.s32.totalorder %s25, 0
      %p52 = por %p50, %p51
      %s54 = sadd.s32 %s53, 1
      %p57 = scmp.eq.s32.totalorder %s19, 1
      %p58 = scmp.ne.s32.totalorder %s53, %s55
      %p59 = scmp.eq.s32.totalorder %s19, 0
      %p60 = por %p58, %p59
      %p61 = scmp.ne.s32.totalorder %s53, %s55
      %p62 = scmp.eq.s32.totalorder %s24, 1
      %p63 = por %p61, %p62
      %p64 = scmp.ne.s32.totalorder %s55, %s56
      %p65 = scmp.eq.s32.totalorder %s24, 0
      %p66 = por %p64, %p65
      %p67 = scmp.ne.s32.totalorder %s55, %s56
      %p68 = scmp.eq.s32.totalorder %s25, 1
      %p69 = por %p67, %p68
      %p71 = scmp.ne.s32.totalorder %s56, %s70
      %p72 = scmp.eq.s32.totalorder %s25, 0
      %p73 = por %p71, %p72
      %s75 = sadd.s32 %s74, 1
      %p78 = scmp.eq.s32.totalorder %s19, 1
      %p79 = scmp.ne.s32.totalorder %s74, %s76
      %p80 = scmp.eq.s32.totalorder %s19, 0
      %p81 = por %p79, %p80
      %p82 = scmp.ne.s32.totalorder %s74, %s76
      %p83 = scmp.eq.s32.totalorder %s24, 1
      %p84 = por %p82, %p83
      %p85 = scmp.ne.s32.totalorder %s76, %s77
      %p86 = scmp.eq.s32.totalorder %s24, 0
      %p87 = por %p85, %p86
      %p88 = scmp.ne.s32.totalorder %s76, %s77
      %p89 = scmp.eq.s32.totalorder %s25, 1
      %p90 = por %p88, %p89
      %p92 = scmp.ne.s32.totalorder %s77, %s91
      %p93 = scmp.eq.s32.totalorder %s25, 0
      %p94 = por %p92, %p93
      %s96 = sadd.s32 %s95, 1
      %p99 = scmp.eq.s32.totalorder %s19, 1
      %p100 = scmp.ne.s32.totalorder %s95, %s97
      %p101 = scmp.eq.s32.totalorder %s19, 0
      %p102 = por %p100, %p101
      %p103 = scmp.ne.s32.totalorder %s95, %s97
      %p104 = scmp.eq.s32.totalorder %s24, 1
      %p105 = por %p103, %p104
      %p106 = scmp.ne.s32.totalorder %s97, %s98
      %p107 = scmp.eq.s32.totalorder %s24, 0
      %p108 = por %p106, %p107
      %p109 = scmp.ne.s32.totalorder %s97, %s98
      %p110 = scmp.eq.s32.totalorder %s25, 1
      %p111 = por %p109, %p110
      %p113 = scmp.ne.s32.totalorder %s98, %s112
      %p114 = scmp.eq.s32.totalorder %s25, 0
      %p115 = por %p113, %p114
      %s117 = sadd.s32 %s116, 1
      %p120 = scmp.eq.s32.totalorder %s19, 1
      %p121 = scmp.ne.s32.totalorder %s116, %s118
      %p122 = scmp.eq.s32.totalorder %s19, 0
      %p123 = por %p121, %p122
      %p124 = scmp.ne.s32.totalorder %s116, %s118
      %p125 = scmp.eq.s32.totalorder %s24, 1
      %p126 = por %p124, %p125
      %p127 = scmp.ne.s32.totalorder %s118, %s119
      %p128 = scmp.eq.s32.totalorder %s24, 0
      %p129 = por %p127, %p128
      %p130 = scmp.ne.s32.totalorder %s118, %s119
      %p131 = scmp.eq.s32.totalorder %s25, 1
      %p132 = por %p130, %p131
      %p134 = scmp.ne.s32.totalorder %s119, %s133
      %p135 = scmp.eq.s32.totalorder %s25, 0
      %p136 = por %p134, %p135
      %s138 = sadd.s32 %s137, 1
      %p141 = scmp.eq.s32.totalorder %s19, 1
      %p142 = scmp.ne.s32.totalorder %s137, %s139
      %p143 = scmp.eq.s32.totalorder %s19, 0
      %p144 = por %p142, %p143
      %p145 = scmp.ne.s32.totalorder %s137, %s139
      %p146 = scmp.eq.s32.totalorder %s24, 1
      %p147 = por %p145, %p146
      %p148 = scmp.ne.s32.totalorder %s139, %s140
      %p149 = scmp.eq.s32.totalorder %s24, 0
      %p150 = por %p148, %p149
      %p151 = scmp.ne.s32.totalorder %s139, %s140
      %p152 = scmp.eq.s32.totalorder %s25, 1
      %p153 = por %p151, %p152
      %p155 = scmp.ne.s32.totalorder %s140, %s154
      %p156 = scmp.eq.s32.totalorder %s25, 0
      %p157 = por %p155, %p156
      %s159 = sadd.s32 %s158, 1
      %p162 = scmp.eq.s32.totalorder %s19, 1
      %p163 = scmp.ne.s32.totalorder %s158, %s160
      %p164 = scmp.eq.s32.totalorder %s19, 0
      %p165 = por %p163, %p164
      %p166 = scmp.ne.s32.totalorder %s158, %s160
      %p167 = scmp.eq.s32.totalorder %s24, 1
      %p168 = por %p166, %p167
      %p169 = scmp.ne.s32.totalorder %s160, %s161
      %p170 = scmp.eq.s32.totalorder %s24, 0
      %p171 = por %p169, %p170
      %p172 = scmp.ne.s32.totalorder %s160, %s161
      %p173 = scmp.eq.s32.totalorder %s25, 1
      %p174 = por %p172, %p173
      %p176 = scmp.ne.s32.totalorder %s161, %s175
      %p177 = scmp.eq.s32.totalorder %s25, 0
      %p178 = por %p176, %p177
      %s180 = sadd.s32 %s179, 1
      %p183 = scmp.eq.s32.totalorder %s19, 1
      %p184 = scmp.ne.s32.totalorder %s179, %s181
      %p185 = scmp.eq.s32.totalorder %s19, 0
      %p186 = por %p184, %p185
      %p187 = scmp.ne.s32.totalorder %s179, %s181
      %p188 = scmp.eq.s32.totalorder %s24, 1
      %p189 = por %p187, %p188
      %p190 = scmp.ne.s32.totalorder %s181, %s182
      %p191 = scmp.eq.s32.totalorder %s24, 0
      %p192 = por %p190, %p191
      %p193 = scmp.ne.s32.totalorder %s181, %s182
      %p194 = scmp.eq.s32.totalorder %s25, 1
      %p195 = por %p193, %p194
      %p197 = scmp.ne.s32.totalorder %s182, %s196
      %p198 = scmp.eq.s32.totalorder %s25, 0
      %p199 = por %p197, %p198
      %s201 = sadd.s32 %s200, 1
      %p204 = scmp.eq.s32.totalorder %s19, 1
      %p205 = scmp.ne.s32.totalorder %s200, %s202
      %p206 = scmp.eq.s32.totalorder %s19, 0
      %p207 = por %p205, %p206
      %p208 = scmp.ne.s32.totalorder %s200, %s202
      %p209 = scmp.eq.s32.totalorder %s24, 1
      %p210 = por %p208, %p209
      %p211 = scmp.ne.s32.totalorder %s202, %s203
      %p212 = scmp.eq.s32.totalorder %s24, 0
      %p213 = por %p211, %p212
      %p214 = scmp.ne.s32.totalorder %s202, %s203
      %p215 = scmp.eq.s32.totalorder %s25, 1
      %p216 = por %p214, %p215
      %p218 = scmp.ne.s32.totalorder %s203, %s217
      %p219 = scmp.eq.s32.totalorder %s25, 0
      %p220 = por %p218, %p219
      %s222 = sadd.s32 %s221, 1
      %p225 = scmp.eq.s32.totalorder %s19, 1
      %p226 = scmp.ne.s32.totalorder %s221, %s223
      %p227 = scmp.eq.s32.totalorder %s19, 0
      %p228 = por %p226, %p227
      %p229 = scmp.ne.s32.totalorder %s221, %s223
      %p230 = scmp.eq.s32.totalorder %s24, 1
      %p231 = por %p229, %p230
      %p232 = scmp.ne.s32.totalorder %s223, %s224
      %p233 = scmp.eq.s32.totalorder %s24, 0
      %p234 = por %p232, %p233
      %p235 = scmp.ne.s32.totalorder %s223, %s224
      %p236 = scmp.eq.s32.totalorder %s25, 1
      %p237 = por %p235, %p236
      %p239 = scmp.ne.s32.totalorder %s224, %s238
      %p240 = scmp.eq.s32.totalorder %s25, 0
      %p241 = por %p239, %p240
      %s242 = ssub.s32 %s19, %s26
      %p243 = scmp.eq.s32.totalorder %s242, 0
      %s245 = sadd.s32 %s244, 1
      %s246 = scalar_select %p243, %s244, %s245
      %p249 = pneg %p243
      %p250 = scmp.eq.s32.totalorder %s19, 1
      %p251 = por %p249, %p250
      %p252 = scmp.ne.s32.totalorder %s244, %s247
      %p253 = scmp.eq.s32.totalorder %s19, 0
      %p254 = por %p252, %p253
      %p255 = scmp.ne.s32.totalorder %s244, %s247
      %p256 = scmp.eq.s32.totalorder %s24, 1
      %p257 = por %p255, %p256
      %p258 = scmp.ne.s32.totalorder %s247, %s248
      %p259 = scmp.eq.s32.totalorder %s24, 0
      %p260 = por %p258, %p259
      %p261 = scmp.ne.s32.totalorder %s247, %s248
      %p262 = scmp.eq.s32.totalorder %s25, 1
      %p263 = por %p261, %p262
      %p265 = scmp.ne.s32.totalorder %s248, %s264
      %p266 = scmp.eq.s32.totalorder %s25, 0
      %p267 = por %p265, %p266
      %p268 = scmp.le.s32.totalorder 1, %s19
      %p269 = scmp.lt.s32.totalorder %s19, 3
      %p270 = pnand %p268, %p269
      %p271 = pneg %p270
      // Predicated region
      $region9: #{apply.1} parent=5 // pred_check
        _
      $region10: #{apply.1} parent=5 // pred_check_branch
        %273 = sbr.rel (%p270) target = $region12
      $region11: #{apply.1} parent=5 // pred_region
        %s274 = ssub.s32 %s19, 1
        // Predicated region
        $region13: #{apply.1} parent=11 // pred_check
          %p275 = pneg %p66
        $region14: #{apply.1} parent=11 // pred_check_branch
          %277 = sbr.rel (%p275) target = $region16
        $region15: #{apply.1} parent=11 // pred_region
          _
        $region16: #{apply.1} parent=11 // pred_fallthru
          _
        // Predicated region
        $region17: #{apply.1} parent=11 // pred_check
          %p278 = pneg %p87
        $region18: #{apply.1} parent=11 // pred_check_branch
          %280 = sbr.rel (%p278) target = $region20
        $region19: #{apply.1} parent=11 // pred_region
          _
        $region20: #{apply.1} parent=11 // pred_fallthru
          _
        // Predicated region
        $region21: #{apply.1} parent=11 // pred_check
          %p281 = pneg %p108
        $region22: #{apply.1} parent=11 // pred_check_branch
          %283 = sbr.rel (%p281) target = $region24
        $region23: #{apply.1} parent=11 // pred_region
          _
        $region24: #{apply.1} parent=11 // pred_fallthru
          _
        // Predicated region
        $region25: #{apply.1} parent=11 // pred_check
          %p284 = pneg %p129
        $region26: #{apply.1} parent=11 // pred_check_branch
          %286 = sbr.rel (%p284) target = $region28
        $region27: #{apply.1} parent=11 // pred_region
          _
        $region28: #{apply.1} parent=11 // pred_fallthru
          _
        // Predicated region
        $region29: #{apply.1} parent=11 // pred_check
          %p287 = pneg %p150
        $region30: #{apply.1} parent=11 // pred_check_branch
          %289 = sbr.rel (%p287) target = $region32
        $region31: #{apply.1} parent=11 // pred_region
          _
        $region32: #{apply.1} parent=11 // pred_fallthru
          _
        // Predicated region
        $region33: #{apply.1} parent=11 // pred_check
          %p290 = pneg %p171
        $region34: #{apply.1} parent=11 // pred_check_branch
          %292 = sbr.rel (%p290) target = $region36
        $region35: #{apply.1} parent=11 // pred_region
          _
        $region36: #{apply.1} parent=11 // pred_fallthru
          _
        // Predicated region
        $region37: #{apply.1} parent=11 // pred_check
          %p293 = pneg %p192
        $region38: #{apply.1} parent=11 // pred_check_branch
          %295 = sbr.rel (%p293) target = $region40
        $region39: #{apply.1} parent=11 // pred_region
          _
        $region40: #{apply.1} parent=11 // pred_fallthru
          _
        // Predicated region
        $region41: #{apply.1} parent=11 // pred_check
          %p296 = pneg %p213
        $region42: #{apply.1} parent=11 // pred_check_branch
          %298 = sbr.rel (%p296) target = $region44
        $region43: #{apply.1} parent=11 // pred_region
          _
        $region44: #{apply.1} parent=11 // pred_fallthru
          _
        // Predicated region
        $region45: #{apply.1} parent=11 // pred_check
          %p299 = pneg %p234
        $region46: #{apply.1} parent=11 // pred_check_branch
          %301 = sbr.rel (%p299) target = $region48
        $region47: #{apply.1} parent=11 // pred_region
          _
        $region48: #{apply.1} parent=11 // pred_fallthru
          _
      $region12: #{apply.1} parent=5 // pred_fallthru
        _
      %p302 = scmp.lt.s32.totalorder %s19, 2
      // Predicated region
      $region49: #{apply.1} parent=5 // pred_check
        %p303 = pneg %p302
      $region50: #{apply.1} parent=5 // pred_check_branch
        %305 = sbr.rel (%p303) target = $region52
      $region51: #{apply.1} parent=5 // pred_region
        // Predicated region
        $region53: #{apply.1} parent=51 // pred_check
          %p306 = pneg %p39
        $region54: #{apply.1} parent=51 // pred_check_branch
          %308 = sbr.rel (%p306) target = $region56
        $region55: #{apply.1} parent=51 // pred_region
          %p309 = scmp.lt.s32.totalorder %s19, 1
          %s310 = scalar_select %p309, %s19, 1
          %s311 = smul.addr %s310, 32
          %s312 = smul.addr %s311, 4
          %s313 = scalar_lea.vmem %s0, %s312
        $region56: #{apply.1} parent=51 // pred_fallthru
          _
      $region52: #{apply.1} parent=5 // pred_fallthru
        _
      %p314 = scmp.le.s32.totalorder 1, %s19
      %p315 = scmp.lt.s32.totalorder %s19, 3
      %p316 = pnand %p314, %p315
      %p317 = pneg %p316
      // Predicated region
      $region57: #{apply.1} parent=5 // pred_check
        _
      $region58: #{apply.1} parent=5 // pred_check_branch
        %319 = sbr.rel (%p316) target = $region60
      $region59: #{apply.1} parent=5 // pred_region
        %s320 = ssub.s32 %s19, 1
        %p321 = scmp.lt.s32.totalorder %s24, 1
        %s322 = scalar_select %p321, %s24, 1
        %s323 = smul.addr %s322, 32
        %s324 = smul.addr %s323, 4
        %s325 = scalar_lea.vmem %s0, %s324
        %p326 = pneg %p45
        %p327 = pneg %p42
        %p328 = pneg %p66
        %p329 = pneg %p63
        %p330 = pneg %p87
        %p331 = pneg %p84
        %p332 = pneg %p108
        %p333 = pneg %p105
        %p334 = pneg %p129
        %p335 = pneg %p126
        %p336 = pneg %p150
        %p337 = pneg %p147
        %p338 = pneg %p171
        %p339 = pneg %p168
        %p340 = pneg %p192
        %p341 = pneg %p189
        %p342 = pneg %p213
        %p343 = pneg %p210
        %p344 = pneg %p234
        %p345 = pneg %p231
        %p346 = pneg %p260
        %p347 = pneg %p257
        %s348 = sand.u32 %s247, 1
        %s349 = scalar_lea.sflag [#allocation3], %s348
        %s350 = sand.u32 %s247, 1
        %s351 = smul.addr %s350, 256
        %s352 = scalar_lea.vmem [#allocation2], %s351
        %p353 = scmp.lt.s32.totalorder %s24, 1
        %s354 = scalar_select %p353, %s24, 1
        %s355 = smul.addr %s354, 32
        %s356 = smul.addr %s355, 4
        %s357 = scalar_lea.vmem %s0, %s356
        %v358 = vld [vmem:[%s357] sm:$0xf]
        %v359 = vld [vmem:[%s357 + $0x4] sm:$0xf]
        %v360 = vld [vmem:[%s357 + $0x8] sm:$0xf]
        %v361 = vld [vmem:[%s357 + $0xc] sm:$0xf]
        %v362 = vld [vmem:[%s357 + $0x10] sm:$0xf]
        %v363 = vld [vmem:[%s357 + $0x14] sm:$0xf]
        %v364 = vld [vmem:[%s357 + $0x18] sm:$0xf]
        %v365 = vld [vmem:[%s357 + $0x1c] sm:$0xf]
        %v366 = vld [vmem:[%s357 + $0x20] sm:$0xf]
        %v367 = vld [vmem:[%s357 + $0x24] sm:$0xf]
        %v368 = vld [vmem:[%s357 + $0x28] sm:$0xf]
        %v369 = vld [vmem:[%s357 + $0x2c] sm:$0xf]
        %v370 = vld [vmem:[%s357 + $0x30] sm:$0xf]
        %v371 = vld [vmem:[%s357 + $0x34] sm:$0xf]
        %v372 = vld [vmem:[%s357 + $0x38] sm:$0xf]
        %v373 = vld [vmem:[%s357 + $0x3c] sm:$0xf]
        %v374 = vld [vmem:[%s357 + $0x40] sm:$0xf]
        %v375 = vld [vmem:[%s357 + $0x44] sm:$0xf]
        %v376 = vld [vmem:[%s357 + $0x48] sm:$0xf]
        %v377 = vld [vmem:[%s357 + $0x4c] sm:$0xf]
        %v378 = vld [vmem:[%s357 + $0x50] sm:$0xf]
        %v379 = vld [vmem:[%s357 + $0x54] sm:$0xf]
        %v380 = vld [vmem:[%s357 + $0x58] sm:$0xf]
        %v381 = vld [vmem:[%s357 + $0x5c] sm:$0xf]
        %v382 = vld [vmem:[%s357 + $0x60] sm:$0xf]
        %v383 = vld [vmem:[%s357 + $0x64] sm:$0xf]
        %v384 = vld [vmem:[%s357 + $0x68] sm:$0xf]
        %v385 = vld [vmem:[%s357 + $0x6c] sm:$0xf]
        %v386 = vld [vmem:[%s357 + $0x70] sm:$0xf]
        %v387 = vld [vmem:[%s357 + $0x74] sm:$0xf]
        %v388 = vld [vmem:[%s357 + $0x78] sm:$0xf]
        %v389 = vld [vmem:[%s357 + $0x7c] sm:$0xf]
        %v390 = vld [vmem:[%s1] sm:$0xff]
        %v391 = vld [vmem:[%s1 + $0x8] sm:$0xff]
        %v392 = vld [vmem:[%s1 + $0x10] sm:$0xff]
        %v393 = vld [vmem:[%s1 + $0x18] sm:$0xff]
        %v394 = vld [vmem:[%s1 + $0x20] sm:$0xff]
        %v395 = vld [vmem:[%s1 + $0x28] sm:$0xff]
        %v396 = vld [vmem:[%s1 + $0x30] sm:$0xff]
        %v397 = vld [vmem:[%s1 + $0x38] sm:$0xff]
        %v398 = vld [vmem:[%s1 + $0x40] sm:$0xff]
        %v399 = vld [vmem:[%s1 + $0x48] sm:$0xff]
        %v400 = vld [vmem:[%s1 + $0x50] sm:$0xff]
        %v401 = vld [vmem:[%s1 + $0x58] sm:$0xff]
        %v402 = vld [vmem:[%s1 + $0x60] sm:$0xff]
        %v403 = vld [vmem:[%s1 + $0x68] sm:$0xff]
        %v404 = vld [vmem:[%s1 + $0x70] sm:$0xff]
        %v405 = vld [vmem:[%s1 + $0x78] sm:$0xff]
        %v406 = vld [vmem:[%s1 + $0x80] sm:$0xff]
        %v407 = vld [vmem:[%s1 + $0x88] sm:$0xff]
        %v408 = vld [vmem:[%s1 + $0x90] sm:$0xff]
        %v409 = vld [vmem:[%s1 + $0x98] sm:$0xff]
        %v410 = vld [vmem:[%s1 + $0xa0] sm:$0xff]
        %v411 = vld [vmem:[%s1 + $0xa8] sm:$0xff]
        %v412 = vld [vmem:[%s1 + $0xb0] sm:$0xff]
        %v413 = vld [vmem:[%s1 + $0xb8] sm:$0xff]
        %v414 = vld [vmem:[%s1 + $0xc0] sm:$0xff]
        %v415 = vld [vmem:[%s1 + $0xc8] sm:$0xff]
        %v416 = vld [vmem:[%s1 + $0xd0] sm:$0xff]
        %v417 = vld [vmem:[%s1 + $0xd8] sm:$0xff]
        %v418 = vld [vmem:[%s1 + $0xe0] sm:$0xff]
        %v419 = vld [vmem:[%s1 + $0xe8] sm:$0xff]
        %v420 = vld [vmem:[%s1 + $0xf0] sm:$0xff]
        %v421 = vld [vmem:[%s1 + $0xf8] sm:$0xff]
        %v422 = vld [vmem:[%s2] sm:$0xff]
        %v423 = vld [vmem:[%s2 + $0x8] sm:$0xff]
        %v424 = vld [vmem:[%s2 + $0x10] sm:$0xff]
        %v425 = vld [vmem:[%s2 + $0x18] sm:$0xff]
        %v426 = vld [vmem:[%s2 + $0x20] sm:$0xff]
        %v427 = vld [vmem:[%s2 + $0x28] sm:$0xff]
        %v428 = vld [vmem:[%s2 + $0x30] sm:$0xff]
        %v429 = vld [vmem:[%s2 + $0x38] sm:$0xff]
        %v430 = vld [vmem:[%s2 + $0x40] sm:$0xff]
        %v431 = vld [vmem:[%s2 + $0x48] sm:$0xff]
        %v432 = vld [vmem:[%s2 + $0x50] sm:$0xff]
        %v433 = vld [vmem:[%s2 + $0x58] sm:$0xff]
        %v434 = vld [vmem:[%s2 + $0x60] sm:$0xff]
        %v435 = vld [vmem:[%s2 + $0x68] sm:$0xff]
        %v436 = vld [vmem:[%s2 + $0x70] sm:$0xff]
        %v437 = vld [vmem:[%s2 + $0x78] sm:$0xff]
        %v438 = vld [vmem:[%s2 + $0x80] sm:$0xff]
        %v439 = vld [vmem:[%s2 + $0x88] sm:$0xff]
        %v440 = vld [vmem:[%s2 + $0x90] sm:$0xff]
        %v441 = vld [vmem:[%s2 + $0x98] sm:$0xff]
        %v442 = vld [vmem:[%s2 + $0xa0] sm:$0xff]
        %v443 = vld [vmem:[%s2 + $0xa8] sm:$0xff]
        %v444 = vld [vmem:[%s2 + $0xb0] sm:$0xff]
        %v445 = vld [vmem:[%s2 + $0xb8] sm:$0xff]
        %v446 = vld [vmem:[%s2 + $0xc0] sm:$0xff]
        %v447 = vld [vmem:[%s2 + $0xc8] sm:$0xff]
        %v448 = vld [vmem:[%s2 + $0xd0] sm:$0xff]
        %v449 = vld [vmem:[%s2 + $0xd8] sm:$0xff]
        %v450 = vld [vmem:[%s2 + $0xe0] sm:$0xff]
        %v451 = vld [vmem:[%s2 + $0xe8] sm:$0xff]
        %v452 = vld [vmem:[%s2 + $0xf0] sm:$0xff]
        %v453 = vld [vmem:[%s2 + $0xf8] sm:$0xff]
        %v486 = vunpack.c.l.b16 %v390
        %v487 = vunpack.c.h.b16 %v390
        %v488 = vunpack.c.l.b16 %v391
        %v489 = vunpack.c.h.b16 %v391
        %v490 = vunpack.c.l.b16 %v392
        %v491 = vunpack.c.h.b16 %v392
        %v492 = vunpack.c.l.b16 %v393
        %v493 = vunpack.c.h.b16 %v393
        %v494 = vunpack.c.l.b16 %v394
        %v495 = vunpack.c.h.b16 %v394
        %v496 = vunpack.c.l.b16 %v395
        %v497 = vunpack.c.h.b16 %v395
        %v498 = vunpack.c.l.b16 %v396
        %v499 = vunpack.c.h.b16 %v396
        %v500 = vunpack.c.l.b16 %v397
        %v501 = vunpack.c.h.b16 %v397
        %v502 = vunpack.c.l.b16 %v398
        %v503 = vunpack.c.h.b16 %v398
        %v504 = vunpack.c.l.b16 %v399
        %v505 = vunpack.c.h.b16 %v399
        %v506 = vunpack.c.l.b16 %v400
        %v507 = vunpack.c.h.b16 %v400
        %v508 = vunpack.c.l.b16 %v401
        %v509 = vunpack.c.h.b16 %v401
        %v510 = vunpack.c.l.b16 %v402
        %v511 = vunpack.c.h.b16 %v402
        %v512 = vunpack.c.l.b16 %v403
        %v513 = vunpack.c.h.b16 %v403
        %v514 = vunpack.c.l.b16 %v404
        %v515 = vunpack.c.h.b16 %v404
        %v516 = vunpack.c.l.b16 %v405
        %v517 = vunpack.c.h.b16 %v405
        %v518 = vunpack.c.l.b16 %v406
        %v519 = vunpack.c.h.b16 %v406
        %v520 = vunpack.c.l.b16 %v407
        %v521 = vunpack.c.h.b16 %v407
        %v522 = vunpack.c.l.b16 %v408
        %v523 = vunpack.c.h.b16 %v408
        %v524 = vunpack.c.l.b16 %v409
        %v525 = vunpack.c.h.b16 %v409
        %v526 = vunpack.c.l.b16 %v410
        %v527 = vunpack.c.h.b16 %v410
        %v528 = vunpack.c.l.b16 %v411
        %v529 = vunpack.c.h.b16 %v411
        %v530 = vunpack.c.l.b16 %v412
        %v531 = vunpack.c.h.b16 %v412
        %v532 = vunpack.c.l.b16 %v413
        %v533 = vunpack.c.h.b16 %v413
        %v534 = vunpack.c.l.b16 %v414
        %v535 = vunpack.c.h.b16 %v414
        %v536 = vunpack.c.l.b16 %v415
        %v537 = vunpack.c.h.b16 %v415
        %v538 = vunpack.c.l.b16 %v416
        %v539 = vunpack.c.h.b16 %v416
        %v540 = vunpack.c.l.b16 %v417
        %v541 = vunpack.c.h.b16 %v417
        %v542 = vunpack.c.l.b16 %v418
        %v543 = vunpack.c.h.b16 %v418
        %v544 = vunpack.c.l.b16 %v419
        %v545 = vunpack.c.h.b16 %v419
        %v546 = vunpack.c.l.b16 %v420
        %v547 = vunpack.c.h.b16 %v420
        %v548 = vunpack.c.l.b16 %v421
        %v549 = vunpack.c.h.b16 %v421
        %v550 = vpack.c.b16 %v488, %v486
        %v551 = vpack.c.b16 %v489, %v487
        %v552 = vpack.c.b16 %v492, %v490
        %v553 = vpack.c.b16 %v493, %v491
        %v554 = vpack.c.b16 %v496, %v494
        %v555 = vpack.c.b16 %v497, %v495
        %v556 = vpack.c.b16 %v500, %v498
        %v557 = vpack.c.b16 %v501, %v499
        %v558 = vpack.c.b16 %v504, %v502
        %v559 = vpack.c.b16 %v505, %v503
        %v560 = vpack.c.b16 %v508, %v506
        %v561 = vpack.c.b16 %v509, %v507
        %v562 = vpack.c.b16 %v512, %v510
        %v563 = vpack.c.b16 %v513, %v511
        %v564 = vpack.c.b16 %v516, %v514
        %v565 = vpack.c.b16 %v517, %v515
        %v566 = vpack.c.b16 %v520, %v518
        %v567 = vpack.c.b16 %v521, %v519
        %v568 = vpack.c.b16 %v524, %v522
        %v569 = vpack.c.b16 %v525, %v523
        %v570 = vpack.c.b16 %v528, %v526
        %v571 = vpack.c.b16 %v529, %v527
        %v572 = vpack.c.b16 %v532, %v530
        %v573 = vpack.c.b16 %v533, %v531
        %v574 = vpack.c.b16 %v536, %v534
        %v575 = vpack.c.b16 %v537, %v535
        %v576 = vpack.c.b16 %v540, %v538
        %v577 = vpack.c.b16 %v541, %v539
        %v578 = vpack.c.b16 %v544, %v542
        %v579 = vpack.c.b16 %v545, %v543
        %v580 = vpack.c.b16 %v548, %v546
        %v581 = vpack.c.b16 %v549, %v547
        %v646 = vunpack.c.l.b16 %v358
        %v647 = vunpack.c.l.b16 %v359
        %v648 = vunpack.c.l.b16 %v360
        %v649 = vunpack.c.l.b16 %v361
        %v650 = vunpack.c.l.b16 %v362
        %v651 = vunpack.c.l.b16 %v363
        %v652 = vunpack.c.l.b16 %v364
        %v653 = vunpack.c.l.b16 %v365
        %v654 = vunpack.c.l.b16 %v366
        %v655 = vunpack.c.l.b16 %v367
        %v656 = vunpack.c.l.b16 %v368
        %v657 = vunpack.c.l.b16 %v369
        %v658 = vunpack.c.l.b16 %v370
        %v659 = vunpack.c.l.b16 %v371
        %v660 = vunpack.c.l.b16 %v372
        %v661 = vunpack.c.l.b16 %v373
        %v662 = vunpack.c.l.b16 %v374
        %v663 = vunpack.c.l.b16 %v375
        %v664 = vunpack.c.l.b16 %v376
        %v665 = vunpack.c.l.b16 %v377
        %v666 = vunpack.c.l.b16 %v378
        %v667 = vunpack.c.l.b16 %v379
        %v668 = vunpack.c.l.b16 %v380
        %v669 = vunpack.c.l.b16 %v381
        %v670 = vunpack.c.l.b16 %v382
        %v671 = vunpack.c.l.b16 %v383
        %v672 = vunpack.c.l.b16 %v384
        %v673 = vunpack.c.l.b16 %v385
        %v674 = vunpack.c.l.b16 %v386
        %v675 = vunpack.c.l.b16 %v387
        %v676 = vunpack.c.l.b16 %v388
        %v677 = vunpack.c.l.b16 %v389
        %v678 = vpack.c.b16 %v647, %v646
        %v679 = vpack.c.b16 %v649, %v648
        %v680 = vpack.c.b16 %v651, %v650
        %v681 = vpack.c.b16 %v653, %v652
        %v682 = vpack.c.b16 %v655, %v654
        %v683 = vpack.c.b16 %v657, %v656
        %v684 = vpack.c.b16 %v659, %v658
        %v685 = vpack.c.b16 %v661, %v660
        %v686 = vpack.c.b16 %v663, %v662
        %v687 = vpack.c.b16 %v665, %v664
        %v688 = vpack.c.b16 %v667, %v666
        %v689 = vpack.c.b16 %v669, %v668
        %v690 = vpack.c.b16 %v671, %v670
        %v691 = vpack.c.b16 %v673, %v672
        %v692 = vpack.c.b16 %v675, %v674
        %v693 = vpack.c.b16 %v677, %v676
        %710 = vmatpush.bf16.msra.mxu0 %v685
        %711 = vmatpush.bf16.msra.mxu0 %v684
        %712 = vmatpush.bf16.msra.mxu0 %v683
        %713 = vmatpush.bf16.msra.mxu0 %v682
        %714 = vmatpush.bf16.msra.mxu0 %v681
        %715 = vmatpush.bf16.msra.mxu0 %v680
        %716 = vmatpush.bf16.msra.mxu0 %v679
        %717 = vmatpush.bf16.msra.mxu0 %v678
        %718 = vmatmul.bf16.gmra.mxu0 %v550
        %v719 = vpop.f32.mrf.mxu0
        %v720 = vadd.f32 0.0, %v719
        %v721 = vpop.f32.mrf.mxu0
        %v722 = vadd.f32 0.0, %v721
        %723 = vmatmul.bf16.gmra.mxu0 %v552
        %v724 = vpop.f32.mrf.mxu0
        %v725 = vadd.f32 0.0, %v724
        %v726 = vpop.f32.mrf.mxu0
        %v727 = vadd.f32 0.0, %v726
        %728 = vmatmul.bf16.gmra.mxu0 %v554
        %v729 = vpop.f32.mrf.mxu0
        %v730 = vadd.f32 0.0, %v729
        %v731 = vpop.f32.mrf.mxu0
        %v732 = vadd.f32 0.0, %v731
        %733 = vmatmul.bf16.gmra.mxu0 %v556
        %v734 = vpop.f32.mrf.mxu0
        %v735 = vadd.f32 0.0, %v734
        %v736 = vpop.f32.mrf.mxu0
        %v737 = vadd.f32 0.0, %v736
        %738 = vmatmul.bf16.gmra.mxu0 %v558
        %v739 = vpop.f32.mrf.mxu0
        %v740 = vadd.f32 0.0, %v739
        %v741 = vpop.f32.mrf.mxu0
        %v742 = vadd.f32 0.0, %v741
        %743 = vmatmul.bf16.gmra.mxu0 %v560
        %v744 = vpop.f32.mrf.mxu0
        %v745 = vadd.f32 0.0, %v744
        %v746 = vpop.f32.mrf.mxu0
        %v747 = vadd.f32 0.0, %v746
        %748 = vmatmul.bf16.gmra.mxu0 %v562
        %v749 = vpop.f32.mrf.mxu0
        %v750 = vadd.f32 0.0, %v749
        %v751 = vpop.f32.mrf.mxu0
        %v752 = vadd.f32 0.0, %v751
        %753 = vmatmul.bf16.gmra.mxu0 %v564
        %v754 = vpop.f32.mrf.mxu0
        %v755 = vadd.f32 0.0, %v754
        %v756 = vpop.f32.mrf.mxu0
        %v757 = vadd.f32 0.0, %v756
        %758 = vmatmul.bf16.gmra.mxu0 %v566
        %v759 = vpop.f32.mrf.mxu0
        %v760 = vadd.f32 0.0, %v759
        %v761 = vpop.f32.mrf.mxu0
        %v762 = vadd.f32 0.0, %v761
        %763 = vmatmul.bf16.gmra.mxu0 %v568
        %v764 = vpop.f32.mrf.mxu0
        %v765 = vadd.f32 0.0, %v764
        %v766 = vpop.f32.mrf.mxu0
        %v767 = vadd.f32 0.0, %v766
        %768 = vmatmul.bf16.gmra.mxu0 %v570
        %v769 = vpop.f32.mrf.mxu0
        %v770 = vadd.f32 0.0, %v769
        %v771 = vpop.f32.mrf.mxu0
        %v772 = vadd.f32 0.0, %v771
        %773 = vmatmul.bf16.gmra.mxu0 %v572
        %v774 = vpop.f32.mrf.mxu0
        %v775 = vadd.f32 0.0, %v774
        %v776 = vpop.f32.mrf.mxu0
        %v777 = vadd.f32 0.0, %v776
        %778 = vmatmul.bf16.gmra.mxu0 %v574
        %v779 = vpop.f32.mrf.mxu0
        %v780 = vadd.f32 0.0, %v779
        %v781 = vpop.f32.mrf.mxu0
        %v782 = vadd.f32 0.0, %v781
        %783 = vmatmul.bf16.gmra.mxu0 %v576
        %v784 = vpop.f32.mrf.mxu0
        %v785 = vadd.f32 0.0, %v784
        %v786 = vpop.f32.mrf.mxu0
        %v787 = vadd.f32 0.0, %v786
        %788 = vmatmul.bf16.gmra.mxu0 %v578
        %v789 = vpop.f32.mrf.mxu0
        %v790 = vadd.f32 0.0, %v789
        %v791 = vpop.f32.mrf.mxu0
        %v792 = vadd.f32 0.0, %v791
        %793 = vmatmul.bf16.gmra.mxu0 %v580
        %v794 = vpop.f32.mrf.mxu0
        %v795 = vadd.f32 0.0, %v794
        %v796 = vpop.f32.mrf.mxu0
        %v797 = vadd.f32 0.0, %v796
        %798 = vdwg.mxu0
        %799 = vmatpush.bf16.msra.mxu0 %v693
        %800 = vmatpush.bf16.msra.mxu0 %v692
        %801 = vmatpush.bf16.msra.mxu0 %v691
        %802 = vmatpush.bf16.msra.mxu0 %v690
        %803 = vmatpush.bf16.msra.mxu0 %v689
        %804 = vmatpush.bf16.msra.mxu0 %v688
        %805 = vmatpush.bf16.msra.mxu0 %v687
        %806 = vmatpush.bf16.msra.mxu0 %v686
        %807 = vmatmul.bf16.gmra.mxu0 %v551
        %v808 = vpop.f32.mrf.mxu0
        %v809 = vadd.f32 %v720, %v808
        %v810 = vpop.f32.mrf.mxu0
        %v811 = vadd.f32 %v722, %v810
        %812 = vmatmul.bf16.gmra.mxu0 %v553
        %v813 = vpop.f32.mrf.mxu0
        %v814 = vadd.f32 %v725, %v813
        %v815 = vpop.f32.mrf.mxu0
        %v816 = vadd.f32 %v727, %v815
        %817 = vmatmul.bf16.gmra.mxu0 %v555
        %v818 = vpop.f32.mrf.mxu0
        %v819 = vadd.f32 %v730, %v818
        %v820 = vpop.f32.mrf.mxu0
        %v821 = vadd.f32 %v732, %v820
        %822 = vmatmul.bf16.gmra.mxu0 %v557
        %v823 = vpop.f32.mrf.mxu0
        %v824 = vadd.f32 %v735, %v823
        %v825 = vpop.f32.mrf.mxu0
        %v826 = vadd.f32 %v737, %v825
        %827 = vmatmul.bf16.gmra.mxu0 %v559
        %v828 = vpop.f32.mrf.mxu0
        %v829 = vadd.f32 %v740, %v828
        %v830 = vpop.f32.mrf.mxu0
        %v831 = vadd.f32 %v742, %v830
        %832 = vmatmul.bf16.gmra.mxu0 %v561
        %v833 = vpop.f32.mrf.mxu0
        %v834 = vadd.f32 %v745, %v833
        %v835 = vpop.f32.mrf.mxu0
        %v836 = vadd.f32 %v747, %v835
        %837 = vmatmul.bf16.gmra.mxu0 %v563
        %v838 = vpop.f32.mrf.mxu0
        %v839 = vadd.f32 %v750, %v838
        %v840 = vpop.f32.mrf.mxu0
        %v841 = vadd.f32 %v752, %v840
        %842 = vmatmul.bf16.gmra.mxu0 %v565
        %v843 = vpop.f32.mrf.mxu0
        %v844 = vadd.f32 %v755, %v843
        %v845 = vpop.f32.mrf.mxu0
        %v846 = vadd.f32 %v757, %v845
        %847 = vmatmul.bf16.gmra.mxu0 %v567
        %v848 = vpop.f32.mrf.mxu0
        %v849 = vadd.f32 %v760, %v848
        %v850 = vpop.f32.mrf.mxu0
        %v851 = vadd.f32 %v762, %v850
        %852 = vmatmul.bf16.gmra.mxu0 %v569
        %v853 = vpop.f32.mrf.mxu0
        %v854 = vadd.f32 %v765, %v853
        %v855 = vpop.f32.mrf.mxu0
        %v856 = vadd.f32 %v767, %v855
        %857 = vmatmul.bf16.gmra.mxu0 %v571
        %v858 = vpop.f32.mrf.mxu0
        %v859 = vadd.f32 %v770, %v858
        %v860 = vpop.f32.mrf.mxu0
        %v861 = vadd.f32 %v772, %v860
        %862 = vmatmul.bf16.gmra.mxu0 %v573
        %v863 = vpop.f32.mrf.mxu0
        %v864 = vadd.f32 %v775, %v863
        %v865 = vpop.f32.mrf.mxu0
        %v866 = vadd.f32 %v777, %v865
        %867 = vmatmul.bf16.gmra.mxu0 %v575
        %v868 = vpop.f32.mrf.mxu0
        %v869 = vadd.f32 %v780, %v868
        %v870 = vpop.f32.mrf.mxu0
        %v871 = vadd.f32 %v782, %v870
        %872 = vmatmul.bf16.gmra.mxu0 %v577
        %v873 = vpop.f32.mrf.mxu0
        %v874 = vadd.f32 %v785, %v873
        %v875 = vpop.f32.mrf.mxu0
        %v876 = vadd.f32 %v787, %v875
        %877 = vmatmul.bf16.gmra.mxu0 %v579
        %v878 = vpop.f32.mrf.mxu0
        %v879 = vadd.f32 %v790, %v878
        %v880 = vpop.f32.mrf.mxu0
        %v881 = vadd.f32 %v792, %v880
        %882 = vmatmul.bf16.gmra.mxu0 %v581
        %v883 = vpop.f32.mrf.mxu0
        %v884 = vadd.f32 %v795, %v883
        %v885 = vpop.f32.mrf.mxu0
        %v886 = vadd.f32 %v797, %v885
        %887 = vdwg.mxu0
        %v920 = vunpack.c.l.b16 %v422
        %v921 = vunpack.c.h.b16 %v422
        %v922 = vunpack.c.l.b16 %v423
        %v923 = vunpack.c.h.b16 %v423
        %v924 = vunpack.c.l.b16 %v424
        %v925 = vunpack.c.h.b16 %v424
        %v926 = vunpack.c.l.b16 %v425
        %v927 = vunpack.c.h.b16 %v425
        %v928 = vunpack.c.l.b16 %v426
        %v929 = vunpack.c.h.b16 %v426
        %v930 = vunpack.c.l.b16 %v427
        %v931 = vunpack.c.h.b16 %v427
        %v932 = vunpack.c.l.b16 %v428
        %v933 = vunpack.c.h.b16 %v428
        %v934 = vunpack.c.l.b16 %v429
        %v935 = vunpack.c.h.b16 %v429
        %v936 = vunpack.c.l.b16 %v430
        %v937 = vunpack.c.h.b16 %v430
        %v938 = vunpack.c.l.b16 %v431
        %v939 = vunpack.c.h.b16 %v431
        %v940 = vunpack.c.l.b16 %v432
        %v941 = vunpack.c.h.b16 %v432
        %v942 = vunpack.c.l.b16 %v433
        %v943 = vunpack.c.h.b16 %v433
        %v944 = vunpack.c.l.b16 %v434
        %v945 = vunpack.c.h.b16 %v434
        %v946 = vunpack.c.l.b16 %v435
        %v947 = vunpack.c.h.b16 %v435
        %v948 = vunpack.c.l.b16 %v436
        %v949 = vunpack.c.h.b16 %v436
        %v950 = vunpack.c.l.b16 %v437
        %v951 = vunpack.c.h.b16 %v437
        %v952 = vunpack.c.l.b16 %v438
        %v953 = vunpack.c.h.b16 %v438
        %v954 = vunpack.c.l.b16 %v439
        %v955 = vunpack.c.h.b16 %v439
        %v956 = vunpack.c.l.b16 %v440
        %v957 = vunpack.c.h.b16 %v440
        %v958 = vunpack.c.l.b16 %v441
        %v959 = vunpack.c.h.b16 %v441
        %v960 = vunpack.c.l.b16 %v442
        %v961 = vunpack.c.h.b16 %v442
        %v962 = vunpack.c.l.b16 %v443
        %v963 = vunpack.c.h.b16 %v443
        %v964 = vunpack.c.l.b16 %v444
        %v965 = vunpack.c.h.b16 %v444
        %v966 = vunpack.c.l.b16 %v445
        %v967 = vunpack.c.h.b16 %v445
        %v968 = vunpack.c.l.b16 %v446
        %v969 = vunpack.c.h.b16 %v446
        %v970 = vunpack.c.l.b16 %v447
        %v971 = vunpack.c.h.b16 %v447
        %v972 = vunpack.c.l.b16 %v448
        %v973 = vunpack.c.h.b16 %v448
        %v974 = vunpack.c.l.b16 %v449
        %v975 = vunpack.c.h.b16 %v449
        %v976 = vunpack.c.l.b16 %v450
        %v977 = vunpack.c.h.b16 %v450
        %v978 = vunpack.c.l.b16 %v451
        %v979 = vunpack.c.h.b16 %v451
        %v980 = vunpack.c.l.b16 %v452
        %v981 = vunpack.c.h.b16 %v452
        %v982 = vunpack.c.l.b16 %v453
        %v983 = vunpack.c.h.b16 %v453
        %v984 = vpack.c.b16 %v922, %v920
        %v985 = vpack.c.b16 %v923, %v921
        %v986 = vpack.c.b16 %v926, %v924
        %v987 = vpack.c.b16 %v927, %v925
        %v988 = vpack.c.b16 %v930, %v928
        %v989 = vpack.c.b16 %v931, %v929
        %v990 = vpack.c.b16 %v934, %v932
        %v991 = vpack.c.b16 %v935, %v933
        %v992 = vpack.c.b16 %v938, %v936
        %v993 = vpack.c.b16 %v939, %v937
        %v994 = vpack.c.b16 %v942, %v940
        %v995 = vpack.c.b16 %v943, %v941
        %v996 = vpack.c.b16 %v946, %v944
        %v997 = vpack.c.b16 %v947, %v945
        %v998 = vpack.c.b16 %v950, %v948
        %v999 = vpack.c.b16 %v951, %v949
        %v1000 = vpack.c.b16 %v954, %v952
        %v1001 = vpack.c.b16 %v955, %v953
        %v1002 = vpack.c.b16 %v958, %v956
        %v1003 = vpack.c.b16 %v959, %v957
        %v1004 = vpack.c.b16 %v962, %v960
        %v1005 = vpack.c.b16 %v963, %v961
        %v1006 = vpack.c.b16 %v966, %v964
        %v1007 = vpack.c.b16 %v967, %v965
        %v1008 = vpack.c.b16 %v970, %v968
        %v1009 = vpack.c.b16 %v971, %v969
        %v1010 = vpack.c.b16 %v974, %v972
        %v1011 = vpack.c.b16 %v975, %v973
        %v1012 = vpack.c.b16 %v978, %v976
        %v1013 = vpack.c.b16 %v979, %v977
        %v1014 = vpack.c.b16 %v982, %v980
        %v1015 = vpack.c.b16 %v983, %v981
        %1048 = vmatpush.bf16.msra.mxu0 %v685
        %1049 = vmatpush.bf16.msra.mxu0 %v684
        %1050 = vmatpush.bf16.msra.mxu0 %v683
        %1051 = vmatpush.bf16.msra.mxu0 %v682
        %1052 = vmatpush.bf16.msra.mxu0 %v681
        %1053 = vmatpush.bf16.msra.mxu0 %v680
        %1054 = vmatpush.bf16.msra.mxu0 %v679
        %1055 = vmatpush.bf16.msra.mxu0 %v678
        %1056 = vmatmul.bf16.gmra.mxu0 %v984
        %v1057 = vpop.f32.mrf.mxu0
        %v1058 = vadd.f32 0.0, %v1057
        %v1059 = vpop.f32.mrf.mxu0
        %v1060 = vadd.f32 0.0, %v1059
        %1061 = vmatmul.bf16.gmra.mxu0 %v986
        %v1062 = vpop.f32.mrf.mxu0
        %v1063 = vadd.f32 0.0, %v1062
        %v1064 = vpop.f32.mrf.mxu0
        %v1065 = vadd.f32 0.0, %v1064
        %1066 = vmatmul.bf16.gmra.mxu0 %v988
        %v1067 = vpop.f32.mrf.mxu0
        %v1068 = vadd.f32 0.0, %v1067
        %v1069 = vpop.f32.mrf.mxu0
        %v1070 = vadd.f32 0.0, %v1069
        %1071 = vmatmul.bf16.gmra.mxu0 %v990
        %v1072 = vpop.f32.mrf.mxu0
        %v1073 = vadd.f32 0.0, %v1072
        %v1074 = vpop.f32.mrf.mxu0
        %v1075 = vadd.f32 0.0, %v1074
        %1076 = vmatmul.bf16.gmra.mxu0 %v992
        %v1077 = vpop.f32.mrf.mxu0
        %v1078 = vadd.f32 0.0, %v1077
        %v1079 = vpop.f32.mrf.mxu0
        %v1080 = vadd.f32 0.0, %v1079
        %1081 = vmatmul.bf16.gmra.mxu0 %v994
        %v1082 = vpop.f32.mrf.mxu0
        %v1083 = vadd.f32 0.0, %v1082
        %v1084 = vpop.f32.mrf.mxu0
        %v1085 = vadd.f32 0.0, %v1084
        %1086 = vmatmul.bf16.gmra.mxu0 %v996
        %v1087 = vpop.f32.mrf.mxu0
        %v1088 = vadd.f32 0.0, %v1087
        %v1089 = vpop.f32.mrf.mxu0
        %v1090 = vadd.f32 0.0, %v1089
        %1091 = vmatmul.bf16.gmra.mxu0 %v998
        %v1092 = vpop.f32.mrf.mxu0
        %v1093 = vadd.f32 0.0, %v1092
        %v1094 = vpop.f32.mrf.mxu0
        %v1095 = vadd.f32 0.0, %v1094
        %1096 = vmatmul.bf16.gmra.mxu0 %v1000
        %v1097 = vpop.f32.mrf.mxu0
        %v1098 = vadd.f32 0.0, %v1097
        %v1099 = vpop.f32.mrf.mxu0
        %v1100 = vadd.f32 0.0, %v1099
        %1101 = vmatmul.bf16.gmra.mxu0 %v1002
        %v1102 = vpop.f32.mrf.mxu0
        %v1103 = vadd.f32 0.0, %v1102
        %v1104 = vpop.f32.mrf.mxu0
        %v1105 = vadd.f32 0.0, %v1104
        %1106 = vmatmul.bf16.gmra.mxu0 %v1004
        %v1107 = vpop.f32.mrf.mxu0
        %v1108 = vadd.f32 0.0, %v1107
        %v1109 = vpop.f32.mrf.mxu0
        %v1110 = vadd.f32 0.0, %v1109
        %1111 = vmatmul.bf16.gmra.mxu0 %v1006
        %v1112 = vpop.f32.mrf.mxu0
        %v1113 = vadd.f32 0.0, %v1112
        %v1114 = vpop.f32.mrf.mxu0
        %v1115 = vadd.f32 0.0, %v1114
        %1116 = vmatmul.bf16.gmra.mxu0 %v1008
        %v1117 = vpop.f32.mrf.mxu0
        %v1118 = vadd.f32 0.0, %v1117
        %v1119 = vpop.f32.mrf.mxu0
        %v1120 = vadd.f32 0.0, %v1119
        %1121 = vmatmul.bf16.gmra.mxu0 %v1010
        %v1122 = vpop.f32.mrf.mxu0
        %v1123 = vadd.f32 0.0, %v1122
        %v1124 = vpop.f32.mrf.mxu0
        %v1125 = vadd.f32 0.0, %v1124
        %1126 = vmatmul.bf16.gmra.mxu0 %v1012
        %v1127 = vpop.f32.mrf.mxu0
        %v1128 = vadd.f32 0.0, %v1127
        %v1129 = vpop.f32.mrf.mxu0
        %v1130 = vadd.f32 0.0, %v1129
        %1131 = vmatmul.bf16.gmra.mxu0 %v1014
        %v1132 = vpop.f32.mrf.mxu0
        %v1133 = vadd.f32 0.0, %v1132
        %v1134 = vpop.f32.mrf.mxu0
        %v1135 = vadd.f32 0.0, %v1134
        %1136 = vdwg.mxu0
        %1137 = vmatpush.bf16.msra.mxu0 %v693
        %1138 = vmatpush.bf16.msra.mxu0 %v692
        %1139 = vmatpush.bf16.msra.mxu0 %v691
        %1140 = vmatpush.bf16.msra.mxu0 %v690
        %1141 = vmatpush.bf16.msra.mxu0 %v689
        %1142 = vmatpush.bf16.msra.mxu0 %v688
        %1143 = vmatpush.bf16.msra.mxu0 %v687
        %1144 = vmatpush.bf16.msra.mxu0 %v686
        %1145 = vmatmul.bf16.gmra.mxu0 %v985
        %v1146 = vpop.f32.mrf.mxu0
        %v1147 = vadd.f32 %v1058, %v1146
        %v1148 = vpop.f32.mrf.mxu0
        %v1149 = vadd.f32 %v1060, %v1148
        %1150 = vmatmul.bf16.gmra.mxu0 %v987
        %v1151 = vpop.f32.mrf.mxu0
        %v1152 = vadd.f32 %v1063, %v1151
        %v1153 = vpop.f32.mrf.mxu0
        %v1154 = vadd.f32 %v1065, %v1153
        %1155 = vmatmul.bf16.gmra.mxu0 %v989
        %v1156 = vpop.f32.mrf.mxu0
        %v1157 = vadd.f32 %v1068, %v1156
        %v1158 = vpop.f32.mrf.mxu0
        %v1159 = vadd.f32 %v1070, %v1158
        %1160 = vmatmul.bf16.gmra.mxu0 %v991
        %v1161 = vpop.f32.mrf.mxu0
        %v1162 = vadd.f32 %v1073, %v1161
        %v1163 = vpop.f32.mrf.mxu0
        %v1164 = vadd.f32 %v1075, %v1163
        %1165 = vmatmul.bf16.gmra.mxu0 %v993
        %v1166 = vpop.f32.mrf.mxu0
        %v1167 = vadd.f32 %v1078, %v1166
        %v1168 = vpop.f32.mrf.mxu0
        %v1169 = vadd.f32 %v1080, %v1168
        %1170 = vmatmul.bf16.gmra.mxu0 %v995
        %v1171 = vpop.f32.mrf.mxu0
        %v1172 = vadd.f32 %v1083, %v1171
        %v1173 = vpop.f32.mrf.mxu0
        %v1174 = vadd.f32 %v1085, %v1173
        %1175 = vmatmul.bf16.gmra.mxu0 %v997
        %v1176 = vpop.f32.mrf.mxu0
        %v1177 = vadd.f32 %v1088, %v1176
        %v1178 = vpop.f32.mrf.mxu0
        %v1179 = vadd.f32 %v1090, %v1178
        %1180 = vmatmul.bf16.gmra.mxu0 %v999
        %v1181 = vpop.f32.mrf.mxu0
        %v1182 = vadd.f32 %v1093, %v1181
        %v1183 = vpop.f32.mrf.mxu0
        %v1184 = vadd.f32 %v1095, %v1183
        %1185 = vmatmul.bf16.gmra.mxu0 %v1001
        %v1186 = vpop.f32.mrf.mxu0
        %v1187 = vadd.f32 %v1098, %v1186
        %v1188 = vpop.f32.mrf.mxu0
        %v1189 = vadd.f32 %v1100, %v1188
        %1190 = vmatmul.bf16.gmra.mxu0 %v1003
        %v1191 = vpop.f32.mrf.mxu0
        %v1192 = vadd.f32 %v1103, %v1191
        %v1193 = vpop.f32.mrf.mxu0
        %v1194 = vadd.f32 %v1105, %v1193
        %1195 = vmatmul.bf16.gmra.mxu0 %v1005
        %v1196 = vpop.f32.mrf.mxu0
        %v1197 = vadd.f32 %v1108, %v1196
        %v1198 = vpop.f32.mrf.mxu0
        %v1199 = vadd.f32 %v1110, %v1198
        %1200 = vmatmul.bf16.gmra.mxu0 %v1007
        %v1201 = vpop.f32.mrf.mxu0
        %v1202 = vadd.f32 %v1113, %v1201
        %v1203 = vpop.f32.mrf.mxu0
        %v1204 = vadd.f32 %v1115, %v1203
        %1205 = vmatmul.bf16.gmra.mxu0 %v1009
        %v1206 = vpop.f32.mrf.mxu0
        %v1207 = vadd.f32 %v1118, %v1206
        %v1208 = vpop.f32.mrf.mxu0
        %v1209 = vadd.f32 %v1120, %v1208
        %1210 = vmatmul.bf16.gmra.mxu0 %v1011
        %v1211 = vpop.f32.mrf.mxu0
        %v1212 = vadd.f32 %v1123, %v1211
        %v1213 = vpop.f32.mrf.mxu0
        %v1214 = vadd.f32 %v1125, %v1213
        %1215 = vmatmul.bf16.gmra.mxu0 %v1013
        %v1216 = vpop.f32.mrf.mxu0
        %v1217 = vadd.f32 %v1128, %v1216
        %v1218 = vpop.f32.mrf.mxu0
        %v1219 = vadd.f32 %v1130, %v1218
        %1220 = vmatmul.bf16.gmra.mxu0 %v1015
        %v1221 = vpop.f32.mrf.mxu0
        %v1222 = vadd.f32 %v1133, %v1221
        %v1223 = vpop.f32.mrf.mxu0
        %v1224 = vadd.f32 %v1135, %v1223
        %1225 = vdwg.mxu0
        %v1226 = vpack.c.bf16 %v811, %v809
        %v1227 = vpack.c.bf16 %v816, %v814
        %v1228 = vpack.c.bf16 %v821, %v819
        %v1229 = vpack.c.bf16 %v826, %v824
        %v1230 = vpack.c.bf16 %v831, %v829
        %v1231 = vpack.c.bf16 %v836, %v834
        %v1232 = vpack.c.bf16 %v841, %v839
        %v1233 = vpack.c.bf16 %v846, %v844
        %v1234 = vpack.c.bf16 %v851, %v849
        %v1235 = vpack.c.bf16 %v856, %v854
        %v1236 = vpack.c.bf16 %v861, %v859
        %v1237 = vpack.c.bf16 %v866, %v864
        %v1238 = vpack.c.bf16 %v871, %v869
        %v1239 = vpack.c.bf16 %v876, %v874
        %v1240 = vpack.c.bf16 %v881, %v879
        %v1241 = vpack.c.bf16 %v886, %v884
        %v1242 = vld [vmem:[%s3] sm:$0xff]
        %v1243 = vld [vmem:[%s3 + $0x8] sm:$0xff]
        %v1244 = vld [vmem:[%s3 + $0x10] sm:$0xff]
        %v1245 = vld [vmem:[%s3 + $0x18] sm:$0xff]
        %v1246 = vld [vmem:[%s3 + $0x20] sm:$0xff]
        %v1247 = vld [vmem:[%s3 + $0x28] sm:$0xff]
        %v1248 = vld [vmem:[%s3 + $0x30] sm:$0xff]
        %v1249 = vld [vmem:[%s3 + $0x38] sm:$0xff]
        %v1250 = vld [vmem:[%s3 + $0x40] sm:$0xff]
        %v1251 = vld [vmem:[%s3 + $0x48] sm:$0xff]
        %v1252 = vld [vmem:[%s3 + $0x50] sm:$0xff]
        %v1253 = vld [vmem:[%s3 + $0x58] sm:$0xff]
        %v1254 = vld [vmem:[%s3 + $0x60] sm:$0xff]
        %v1255 = vld [vmem:[%s3 + $0x68] sm:$0xff]
        %v1256 = vld [vmem:[%s3 + $0x70] sm:$0xff]
        %v1257 = vld [vmem:[%s3 + $0x78] sm:$0xff]
        %v1258 = vpack.c.bf16 %v1149, %v1147
        %v1259 = vpack.c.bf16 %v1154, %v1152
        %v1260 = vpack.c.bf16 %v1159, %v1157
        %v1261 = vpack.c.bf16 %v1164, %v1162
        %v1262 = vpack.c.bf16 %v1169, %v1167
        %v1263 = vpack.c.bf16 %v1174, %v1172
        %v1264 = vpack.c.bf16 %v1179, %v1177
        %v1265 = vpack.c.bf16 %v1184, %v1182
        %v1266 = vpack.c.bf16 %v1189, %v1187
        %v1267 = vpack.c.bf16 %v1194, %v1192
        %v1268 = vpack.c.bf16 %v1199, %v1197
        %v1269 = vpack.c.bf16 %v1204, %v1202
        %v1270 = vpack.c.bf16 %v1209, %v1207
        %v1271 = vpack.c.bf16 %v1214, %v1212
        %v1272 = vpack.c.bf16 %v1219, %v1217
        %v1273 = vpack.c.bf16 %v1224, %v1222
        %v1274 = vld [vmem:[%s4] sm:$0xff]
        %v1275 = vld [vmem:[%s4 + $0x8] sm:$0xff]
        %v1276 = vld [vmem:[%s4 + $0x10] sm:$0xff]
        %v1277 = vld [vmem:[%s4 + $0x18] sm:$0xff]
        %v1278 = vld [vmem:[%s4 + $0x20] sm:$0xff]
        %v1279 = vld [vmem:[%s4 + $0x28] sm:$0xff]
        %v1280 = vld [vmem:[%s4 + $0x30] sm:$0xff]
        %v1281 = vld [vmem:[%s4 + $0x38] sm:$0xff]
        %v1282 = vld [vmem:[%s4 + $0x40] sm:$0xff]
        %v1283 = vld [vmem:[%s4 + $0x48] sm:$0xff]
        %v1284 = vld [vmem:[%s4 + $0x50] sm:$0xff]
        %v1285 = vld [vmem:[%s4 + $0x58] sm:$0xff]
        %v1286 = vld [vmem:[%s4 + $0x60] sm:$0xff]
        %v1287 = vld [vmem:[%s4 + $0x68] sm:$0xff]
        %v1288 = vld [vmem:[%s4 + $0x70] sm:$0xff]
        %v1289 = vld [vmem:[%s4 + $0x78] sm:$0xff]
        %v1306 = vunpack.c.l.b16 %v1274
        %v1307 = vunpack.c.h.b16 %v1274
        %v1308 = vunpack.c.l.b16 %v1275
        %v1309 = vunpack.c.h.b16 %v1275
        %v1310 = vunpack.c.l.b16 %v1276
        %v1311 = vunpack.c.h.b16 %v1276
        %v1312 = vunpack.c.l.b16 %v1277
        %v1313 = vunpack.c.h.b16 %v1277
        %v1314 = vunpack.c.l.b16 %v1278
        %v1315 = vunpack.c.h.b16 %v1278
        %v1316 = vunpack.c.l.b16 %v1279
        %v1317 = vunpack.c.h.b16 %v1279
        %v1318 = vunpack.c.l.b16 %v1280
        %v1319 = vunpack.c.h.b16 %v1280
        %v1320 = vunpack.c.l.b16 %v1281
        %v1321 = vunpack.c.h.b16 %v1281
        %v1322 = vunpack.c.l.b16 %v1282
        %v1323 = vunpack.c.h.b16 %v1282
        %v1324 = vunpack.c.l.b16 %v1283
        %v1325 = vunpack.c.h.b16 %v1283
        %v1326 = vunpack.c.l.b16 %v1284
        %v1327 = vunpack.c.h.b16 %v1284
        %v1328 = vunpack.c.l.b16 %v1285
        %v1329 = vunpack.c.h.b16 %v1285
        %v1330 = vunpack.c.l.b16 %v1286
        %v1331 = vunpack.c.h.b16 %v1286
        %v1332 = vunpack.c.l.b16 %v1287
        %v1333 = vunpack.c.h.b16 %v1287
        %v1334 = vunpack.c.l.b16 %v1288
        %v1335 = vunpack.c.h.b16 %v1288
        %v1336 = vunpack.c.l.b16 %v1289
        %v1337 = vunpack.c.h.b16 %v1289
        %v1338 = vpack.c.b16 %v1308, %v1306
        %v1339 = vpack.c.b16 %v1309, %v1307
        %v1340 = vpack.c.b16 %v1312, %v1310
        %v1341 = vpack.c.b16 %v1313, %v1311
        %v1342 = vpack.c.b16 %v1316, %v1314
        %v1343 = vpack.c.b16 %v1317, %v1315
        %v1344 = vpack.c.b16 %v1320, %v1318
        %v1345 = vpack.c.b16 %v1321, %v1319
        %v1346 = vpack.c.b16 %v1324, %v1322
        %v1347 = vpack.c.b16 %v1325, %v1323
        %v1348 = vpack.c.b16 %v1328, %v1326
        %v1349 = vpack.c.b16 %v1329, %v1327
        %v1350 = vpack.c.b16 %v1332, %v1330
        %v1351 = vpack.c.b16 %v1333, %v1331
        %v1352 = vpack.c.b16 %v1336, %v1334
        %v1353 = vpack.c.b16 %v1337, %v1335
        %1370 = vmatpush.bf16.msra.mxu0 %v1352
        %1371 = vmatpush.bf16.msra.mxu0 %v1350
        %1372 = vmatpush.bf16.msra.mxu0 %v1348
        %1373 = vmatpush.bf16.msra.mxu0 %v1346
        %1374 = vmatpush.bf16.msra.mxu0 %v1344
        %1375 = vmatpush.bf16.msra.mxu0 %v1342
        %1376 = vmatpush.bf16.msra.mxu0 %v1340
        %1377 = vmatpush.bf16.msra.mxu0 %v1338
        %1378 = vmatmul.bf16.gmra.mxu0 %v1258
        %v1379 = vpop.f32.mrf.mxu0
        %v1380 = vadd.f32 0.0, %v1379
        %v1381 = vpop.f32.mrf.mxu0
        %v1382 = vadd.f32 0.0, %v1381
        %1383 = vmatmul.bf16.gmra.mxu0 %v1259
        %v1384 = vpop.f32.mrf.mxu0
        %v1385 = vadd.f32 0.0, %v1384
        %v1386 = vpop.f32.mrf.mxu0
        %v1387 = vadd.f32 0.0, %v1386
        %1388 = vmatmul.bf16.gmra.mxu0 %v1260
        %v1389 = vpop.f32.mrf.mxu0
        %v1390 = vadd.f32 0.0, %v1389
        %v1391 = vpop.f32.mrf.mxu0
        %v1392 = vadd.f32 0.0, %v1391
        %1393 = vmatmul.bf16.gmra.mxu0 %v1261
        %v1394 = vpop.f32.mrf.mxu0
        %v1395 = vadd.f32 0.0, %v1394
        %v1396 = vpop.f32.mrf.mxu0
        %v1397 = vadd.f32 0.0, %v1396
        %1398 = vmatmul.bf16.gmra.mxu0 %v1262
        %v1399 = vpop.f32.mrf.mxu0
        %v1400 = vadd.f32 0.0, %v1399
        %v1401 = vpop.f32.mrf.mxu0
        %v1402 = vadd.f32 0.0, %v1401
        %1403 = vmatmul.bf16.gmra.mxu0 %v1263
        %v1404 = vpop.f32.mrf.mxu0
        %v1405 = vadd.f32 0.0, %v1404
        %v1406 = vpop.f32.mrf.mxu0
        %v1407 = vadd.f32 0.0, %v1406
        %1408 = vmatmul.bf16.gmra.mxu0 %v1264
        %v1409 = vpop.f32.mrf.mxu0
        %v1410 = vadd.f32 0.0, %v1409
        %v1411 = vpop.f32.mrf.mxu0
        %v1412 = vadd.f32 0.0, %v1411
        %1413 = vmatmul.bf16.gmra.mxu0 %v1265
        %v1414 = vpop.f32.mrf.mxu0
        %v1415 = vadd.f32 0.0, %v1414
        %v1416 = vpop.f32.mrf.mxu0
        %v1417 = vadd.f32 0.0, %v1416
        %1418 = vmatmul.bf16.gmra.mxu0 %v1266
        %v1419 = vpop.f32.mrf.mxu0
        %v1420 = vadd.f32 0.0, %v1419
        %v1421 = vpop.f32.mrf.mxu0
        %v1422 = vadd.f32 0.0, %v1421
        %1423 = vmatmul.bf16.gmra.mxu0 %v1267
        %v1424 = vpop.f32.mrf.mxu0
        %v1425 = vadd.f32 0.0, %v1424
        %v1426 = vpop.f32.mrf.mxu0
        %v1427 = vadd.f32 0.0, %v1426
        %1428 = vmatmul.bf16.gmra.mxu0 %v1268
        %v1429 = vpop.f32.mrf.mxu0
        %v1430 = vadd.f32 0.0, %v1429
        %v1431 = vpop.f32.mrf.mxu0
        %v1432 = vadd.f32 0.0, %v1431
        %1433 = vmatmul.bf16.gmra.mxu0 %v1269
        %v1434 = vpop.f32.mrf.mxu0
        %v1435 = vadd.f32 0.0, %v1434
        %v1436 = vpop.f32.mrf.mxu0
        %v1437 = vadd.f32 0.0, %v1436
        %1438 = vmatmul.bf16.gmra.mxu0 %v1270
        %v1439 = vpop.f32.mrf.mxu0
        %v1440 = vadd.f32 0.0, %v1439
        %v1441 = vpop.f32.mrf.mxu0
        %v1442 = vadd.f32 0.0, %v1441
        %1443 = vmatmul.bf16.gmra.mxu0 %v1271
        %v1444 = vpop.f32.mrf.mxu0
        %v1445 = vadd.f32 0.0, %v1444
        %v1446 = vpop.f32.mrf.mxu0
        %v1447 = vadd.f32 0.0, %v1446
        %1448 = vmatmul.bf16.gmra.mxu0 %v1272
        %v1449 = vpop.f32.mrf.mxu0
        %v1450 = vadd.f32 0.0, %v1449
        %v1451 = vpop.f32.mrf.mxu0
        %v1452 = vadd.f32 0.0, %v1451
        %1453 = vmatmul.bf16.gmra.mxu0 %v1273
        %v1454 = vpop.f32.mrf.mxu0
        %v1455 = vadd.f32 0.0, %v1454
        %v1456 = vpop.f32.mrf.mxu0
        %v1457 = vadd.f32 0.0, %v1456
        %1458 = vdwg.mxu0
        %1459 = vmatpush.bf16.msra.mxu0 %v1353
        %1460 = vmatpush.bf16.msra.mxu0 %v1351
        %1461 = vmatpush.bf16.msra.mxu0 %v1349
        %1462 = vmatpush.bf16.msra.mxu0 %v1347
        %1463 = vmatpush.bf16.msra.mxu0 %v1345
        %1464 = vmatpush.bf16.msra.mxu0 %v1343
        %1465 = vmatpush.bf16.msra.mxu0 %v1341
        %1466 = vmatpush.bf16.msra.mxu0 %v1339
        %1467 = vmatmul.bf16.gmra.mxu0 %v1258
        %v1468 = vpop.f32.mrf.mxu0
        %v1469 = vadd.f32 0.0, %v1468
        %v1470 = vpop.f32.mrf.mxu0
        %v1471 = vadd.f32 0.0, %v1470
        %1472 = vmatmul.bf16.gmra.mxu0 %v1259
        %v1473 = vpop.f32.mrf.mxu0
        %v1474 = vadd.f32 0.0, %v1473
        %v1475 = vpop.f32.mrf.mxu0
        %v1476 = vadd.f32 0.0, %v1475
        %1477 = vmatmul.bf16.gmra.mxu0 %v1260
        %v1478 = vpop.f32.mrf.mxu0
        %v1479 = vadd.f32 0.0, %v1478
        %v1480 = vpop.f32.mrf.mxu0
        %v1481 = vadd.f32 0.0, %v1480
        %1482 = vmatmul.bf16.gmra.mxu0 %v1261
        %v1483 = vpop.f32.mrf.mxu0
        %v1484 = vadd.f32 0.0, %v1483
        %v1485 = vpop.f32.mrf.mxu0
        %v1486 = vadd.f32 0.0, %v1485
        %1487 = vmatmul.bf16.gmra.mxu0 %v1262
        %v1488 = vpop.f32.mrf.mxu0
        %v1489 = vadd.f32 0.0, %v1488
        %v1490 = vpop.f32.mrf.mxu0
        %v1491 = vadd.f32 0.0, %v1490
        %1492 = vmatmul.bf16.gmra.mxu0 %v1263
        %v1493 = vpop.f32.mrf.mxu0
        %v1494 = vadd.f32 0.0, %v1493
        %v1495 = vpop.f32.mrf.mxu0
        %v1496 = vadd.f32 0.0, %v1495
        %1497 = vmatmul.bf16.gmra.mxu0 %v1264
        %v1498 = vpop.f32.mrf.mxu0
        %v1499 = vadd.f32 0.0, %v1498
        %v1500 = vpop.f32.mrf.mxu0
        %v1501 = vadd.f32 0.0, %v1500
        %1502 = vmatmul.bf16.gmra.mxu0 %v1265
        %v1503 = vpop.f32.mrf.mxu0
        %v1504 = vadd.f32 0.0, %v1503
        %v1505 = vpop.f32.mrf.mxu0
        %v1506 = vadd.f32 0.0, %v1505
        %1507 = vmatmul.bf16.gmra.mxu0 %v1266
        %v1508 = vpop.f32.mrf.mxu0
        %v1509 = vadd.f32 0.0, %v1508
        %v1510 = vpop.f32.mrf.mxu0
        %v1511 = vadd.f32 0.0, %v1510
        %1512 = vmatmul.bf16.gmra.mxu0 %v1267
        %v1513 = vpop.f32.mrf.mxu0
        %v1514 = vadd.f32 0.0, %v1513
        %v1515 = vpop.f32.mrf.mxu0
        %v1516 = vadd.f32 0.0, %v1515
        %1517 = vmatmul.bf16.gmra.mxu0 %v1268
        %v1518 = vpop.f32.mrf.mxu0
        %v1519 = vadd.f32 0.0, %v1518
        %v1520 = vpop.f32.mrf.mxu0
        %v1521 = vadd.f32 0.0, %v1520
        %1522 = vmatmul.bf16.gmra.mxu0 %v1269
        %v1523 = vpop.f32.mrf.mxu0
        %v1524 = vadd.f32 0.0, %v1523
        %v1525 = vpop.f32.mrf.mxu0
        %v1526 = vadd.f32 0.0, %v1525
        %1527 = vmatmul.bf16.gmra.mxu0 %v1270
        %v1528 = vpop.f32.mrf.mxu0
        %v1529 = vadd.f32 0.0, %v1528
        %v1530 = vpop.f32.mrf.mxu0
        %v1531 = vadd.f32 0.0, %v1530
        %1532 = vmatmul.bf16.gmra.mxu0 %v1271
        %v1533 = vpop.f32.mrf.mxu0
        %v1534 = vadd.f32 0.0, %v1533
        %v1535 = vpop.f32.mrf.mxu0
        %v1536 = vadd.f32 0.0, %v1535
        %1537 = vmatmul.bf16.gmra.mxu0 %v1272
        %v1538 = vpop.f32.mrf.mxu0
        %v1539 = vadd.f32 0.0, %v1538
        %v1540 = vpop.f32.mrf.mxu0
        %v1541 = vadd.f32 0.0, %v1540
        %1542 = vmatmul.bf16.gmra.mxu0 %v1273
        %v1543 = vpop.f32.mrf.mxu0
        %v1544 = vadd.f32 0.0, %v1543
        %v1545 = vpop.f32.mrf.mxu0
        %v1546 = vadd.f32 0.0, %v1545
        %1547 = vdwg.mxu0
        %v1564 = vunpack.c.l.b16 %v1242
        %v1565 = vunpack.c.h.b16 %v1242
        %v1566 = vunpack.c.l.b16 %v1243
        %v1567 = vunpack.c.h.b16 %v1243
        %v1568 = vunpack.c.l.b16 %v1244
        %v1569 = vunpack.c.h.b16 %v1244
        %v1570 = vunpack.c.l.b16 %v1245
        %v1571 = vunpack.c.h.b16 %v1245
        %v1572 = vunpack.c.l.b16 %v1246
        %v1573 = vunpack.c.h.b16 %v1246
        %v1574 = vunpack.c.l.b16 %v1247
        %v1575 = vunpack.c.h.b16 %v1247
        %v1576 = vunpack.c.l.b16 %v1248
        %v1577 = vunpack.c.h.b16 %v1248
        %v1578 = vunpack.c.l.b16 %v1249
        %v1579 = vunpack.c.h.b16 %v1249
        %v1580 = vunpack.c.l.b16 %v1250
        %v1581 = vunpack.c.h.b16 %v1250
        %v1582 = vunpack.c.l.b16 %v1251
        %v1583 = vunpack.c.h.b16 %v1251
        %v1584 = vunpack.c.l.b16 %v1252
        %v1585 = vunpack.c.h.b16 %v1252
        %v1586 = vunpack.c.l.b16 %v1253
        %v1587 = vunpack.c.h.b16 %v1253
        %v1588 = vunpack.c.l.b16 %v1254
        %v1589 = vunpack.c.h.b16 %v1254
        %v1590 = vunpack.c.l.b16 %v1255
        %v1591 = vunpack.c.h.b16 %v1255
        %v1592 = vunpack.c.l.b16 %v1256
        %v1593 = vunpack.c.h.b16 %v1256
        %v1594 = vunpack.c.l.b16 %v1257
        %v1595 = vunpack.c.h.b16 %v1257
        %v1596 = vpack.c.b16 %v1566, %v1564
        %v1597 = vpack.c.b16 %v1567, %v1565
        %v1598 = vpack.c.b16 %v1570, %v1568
        %v1599 = vpack.c.b16 %v1571, %v1569
        %v1600 = vpack.c.b16 %v1574, %v1572
        %v1601 = vpack.c.b16 %v1575, %v1573
        %v1602 = vpack.c.b16 %v1578, %v1576
        %v1603 = vpack.c.b16 %v1579, %v1577
        %v1604 = vpack.c.b16 %v1582, %v1580
        %v1605 = vpack.c.b16 %v1583, %v1581
        %v1606 = vpack.c.b16 %v1586, %v1584
        %v1607 = vpack.c.b16 %v1587, %v1585
        %v1608 = vpack.c.b16 %v1590, %v1588
        %v1609 = vpack.c.b16 %v1591, %v1589
        %v1610 = vpack.c.b16 %v1594, %v1592
        %v1611 = vpack.c.b16 %v1595, %v1593
        %1628 = vmatpush.bf16.msra.mxu0 %v1610
        %1629 = vmatpush.bf16.msra.mxu0 %v1608
        %1630 = vmatpush.bf16.msra.mxu0 %v1606
        %1631 = vmatpush.bf16.msra.mxu0 %v1604
        %1632 = vmatpush.bf16.msra.mxu0 %v1602
        %1633 = vmatpush.bf16.msra.mxu0 %v1600
        %1634 = vmatpush.bf16.msra.mxu0 %v1598
        %1635 = vmatpush.bf16.msra.mxu0 %v1596
        %1636 = vmatmul.bf16.gmra.mxu0 %v1226
        %v1637 = vpop.f32.mrf.mxu0
        %v1638 = vadd.f32 %v1380, %v1637
        %v1639 = vpop.f32.mrf.mxu0
        %v1640 = vadd.f32 %v1382, %v1639
        %1641 = vmatmul.bf16.gmra.mxu0 %v1227
        %v1642 = vpop.f32.mrf.mxu0
        %v1643 = vadd.f32 %v1385, %v1642
        %v1644 = vpop.f32.mrf.mxu0
        %v1645 = vadd.f32 %v1387, %v1644
        %1646 = vmatmul.bf16.gmra.mxu0 %v1228
        %v1647 = vpop.f32.mrf.mxu0
        %v1648 = vadd.f32 %v1390, %v1647
        %v1649 = vpop.f32.mrf.mxu0
        %v1650 = vadd.f32 %v1392, %v1649
        %1651 = vmatmul.bf16.gmra.mxu0 %v1229
        %v1652 = vpop.f32.mrf.mxu0
        %v1653 = vadd.f32 %v1395, %v1652
        %v1654 = vpop.f32.mrf.mxu0
        %v1655 = vadd.f32 %v1397, %v1654
        %1656 = vmatmul.bf16.gmra.mxu0 %v1230
        %v1657 = vpop.f32.mrf.mxu0
        %v1658 = vadd.f32 %v1400, %v1657
        %v1659 = vpop.f32.mrf.mxu0
        %v1660 = vadd.f32 %v1402, %v1659
        %1661 = vmatmul.bf16.gmra.mxu0 %v1231
        %v1662 = vpop.f32.mrf.mxu0
        %v1663 = vadd.f32 %v1405, %v1662
        %v1664 = vpop.f32.mrf.mxu0
        %v1665 = vadd.f32 %v1407, %v1664
        %1666 = vmatmul.bf16.gmra.mxu0 %v1232
        %v1667 = vpop.f32.mrf.mxu0
        %v1668 = vadd.f32 %v1410, %v1667
        %v1669 = vpop.f32.mrf.mxu0
        %v1670 = vadd.f32 %v1412, %v1669
        %1671 = vmatmul.bf16.gmra.mxu0 %v1233
        %v1672 = vpop.f32.mrf.mxu0
        %v1673 = vadd.f32 %v1415, %v1672
        %v1674 = vpop.f32.mrf.mxu0
        %v1675 = vadd.f32 %v1417, %v1674
        %1676 = vmatmul.bf16.gmra.mxu0 %v1234
        %v1677 = vpop.f32.mrf.mxu0
        %v1678 = vadd.f32 %v1420, %v1677
        %v1679 = vpop.f32.mrf.mxu0
        %v1680 = vadd.f32 %v1422, %v1679
        %1681 = vmatmul.bf16.gmra.mxu0 %v1235
        %v1682 = vpop.f32.mrf.mxu0
        %v1683 = vadd.f32 %v1425, %v1682
        %v1684 = vpop.f32.mrf.mxu0
        %v1685 = vadd.f32 %v1427, %v1684
        %1686 = vmatmul.bf16.gmra.mxu0 %v1236
        %v1687 = vpop.f32.mrf.mxu0
        %v1688 = vadd.f32 %v1430, %v1687
        %v1689 = vpop.f32.mrf.mxu0
        %v1690 = vadd.f32 %v1432, %v1689
        %1691 = vmatmul.bf16.gmra.mxu0 %v1237
        %v1692 = vpop.f32.mrf.mxu0
        %v1693 = vadd.f32 %v1435, %v1692
        %v1694 = vpop.f32.mrf.mxu0
        %v1695 = vadd.f32 %v1437, %v1694
        %1696 = vmatmul.bf16.gmra.mxu0 %v1238
        %v1697 = vpop.f32.mrf.mxu0
        %v1698 = vadd.f32 %v1440, %v1697
        %v1699 = vpop.f32.mrf.mxu0
        %v1700 = vadd.f32 %v1442, %v1699
        %1701 = vmatmul.bf16.gmra.mxu0 %v1239
        %v1702 = vpop.f32.mrf.mxu0
        %v1703 = vadd.f32 %v1445, %v1702
        %v1704 = vpop.f32.mrf.mxu0
        %v1705 = vadd.f32 %v1447, %v1704
        %1706 = vmatmul.bf16.gmra.mxu0 %v1240
        %v1707 = vpop.f32.mrf.mxu0
        %v1708 = vadd.f32 %v1450, %v1707
        %v1709 = vpop.f32.mrf.mxu0
        %v1710 = vadd.f32 %v1452, %v1709
        %1711 = vmatmul.bf16.gmra.mxu0 %v1241
        %v1712 = vpop.f32.mrf.mxu0
        %v1713 = vadd.f32 %v1455, %v1712
        %v1714 = vpop.f32.mrf.mxu0
        %v1715 = vadd.f32 %v1457, %v1714
        %1716 = vdwg.mxu0
        %1717 = vmatpush.bf16.msra.mxu0 %v1611
        %1718 = vmatpush.bf16.msra.mxu0 %v1609
        %1719 = vmatpush.bf16.msra.mxu0 %v1607
        %1720 = vmatpush.bf16.msra.mxu0 %v1605
        %1721 = vmatpush.bf16.msra.mxu0 %v1603
        %1722 = vmatpush.bf16.msra.mxu0 %v1601
        %1723 = vmatpush.bf16.msra.mxu0 %v1599
        %1724 = vmatpush.bf16.msra.mxu0 %v1597
        %1725 = vmatmul.bf16.gmra.mxu0 %v1226
        %v1726 = vpop.f32.mrf.mxu0
        %v1727 = vadd.f32 %v1469, %v1726
        %v1728 = vpop.f32.mrf.mxu0
        %v1729 = vadd.f32 %v1471, %v1728
        %1730 = vmatmul.bf16.gmra.mxu0 %v1227
        %v1731 = vpop.f32.mrf.mxu0
        %v1732 = vadd.f32 %v1474, %v1731
        %v1733 = vpop.f32.mrf.mxu0
        %v1734 = vadd.f32 %v1476, %v1733
        %1735 = vmatmul.bf16.gmra.mxu0 %v1228
        %v1736 = vpop.f32.mrf.mxu0
        %v1737 = vadd.f32 %v1479, %v1736
        %v1738 = vpop.f32.mrf.mxu0
        %v1739 = vadd.f32 %v1481, %v1738
        %1740 = vmatmul.bf16.gmra.mxu0 %v1229
        %v1741 = vpop.f32.mrf.mxu0
        %v1742 = vadd.f32 %v1484, %v1741
        %v1743 = vpop.f32.mrf.mxu0
        %v1744 = vadd.f32 %v1486, %v1743
        %1745 = vmatmul.bf16.gmra.mxu0 %v1230
        %v1746 = vpop.f32.mrf.mxu0
        %v1747 = vadd.f32 %v1489, %v1746
        %v1748 = vpop.f32.mrf.mxu0
        %v1749 = vadd.f32 %v1491, %v1748
        %1750 = vmatmul.bf16.gmra.mxu0 %v1231
        %v1751 = vpop.f32.mrf.mxu0
        %v1752 = vadd.f32 %v1494, %v1751
        %v1753 = vpop.f32.mrf.mxu0
        %v1754 = vadd.f32 %v1496, %v1753
        %1755 = vmatmul.bf16.gmra.mxu0 %v1232
        %v1756 = vpop.f32.mrf.mxu0
        %v1757 = vadd.f32 %v1499, %v1756
        %v1758 = vpop.f32.mrf.mxu0
        %v1759 = vadd.f32 %v1501, %v1758
        %1760 = vmatmul.bf16.gmra.mxu0 %v1233
        %v1761 = vpop.f32.mrf.mxu0
        %v1762 = vadd.f32 %v1504, %v1761
        %v1763 = vpop.f32.mrf.mxu0
        %v1764 = vadd.f32 %v1506, %v1763
        %1765 = vmatmul.bf16.gmra.mxu0 %v1234
        %v1766 = vpop.f32.mrf.mxu0
        %v1767 = vadd.f32 %v1509, %v1766
        %v1768 = vpop.f32.mrf.mxu0
        %v1769 = vadd.f32 %v1511, %v1768
        %1770 = vmatmul.bf16.gmra.mxu0 %v1235
        %v1771 = vpop.f32.mrf.mxu0
        %v1772 = vadd.f32 %v1514, %v1771
        %v1773 = vpop.f32.mrf.mxu0
        %v1774 = vadd.f32 %v1516, %v1773
        %1775 = vmatmul.bf16.gmra.mxu0 %v1236
        %v1776 = vpop.f32.mrf.mxu0
        %v1777 = vadd.f32 %v1519, %v1776
        %v1778 = vpop.f32.mrf.mxu0
        %v1779 = vadd.f32 %v1521, %v1778
        %1780 = vmatmul.bf16.gmra.mxu0 %v1237
        %v1781 = vpop.f32.mrf.mxu0
        %v1782 = vadd.f32 %v1524, %v1781
        %v1783 = vpop.f32.mrf.mxu0
        %v1784 = vadd.f32 %v1526, %v1783
        %1785 = vmatmul.bf16.gmra.mxu0 %v1238
        %v1786 = vpop.f32.mrf.mxu0
        %v1787 = vadd.f32 %v1529, %v1786
        %v1788 = vpop.f32.mrf.mxu0
        %v1789 = vadd.f32 %v1531, %v1788
        %1790 = vmatmul.bf16.gmra.mxu0 %v1239
        %v1791 = vpop.f32.mrf.mxu0
        %v1792 = vadd.f32 %v1534, %v1791
        %v1793 = vpop.f32.mrf.mxu0
        %v1794 = vadd.f32 %v1536, %v1793
        %1795 = vmatmul.bf16.gmra.mxu0 %v1240
        %v1796 = vpop.f32.mrf.mxu0
        %v1797 = vadd.f32 %v1539, %v1796
        %v1798 = vpop.f32.mrf.mxu0
        %v1799 = vadd.f32 %v1541, %v1798
        %1800 = vmatmul.bf16.gmra.mxu0 %v1241
        %v1801 = vpop.f32.mrf.mxu0
        %v1802 = vadd.f32 %v1544, %v1801
        %v1803 = vpop.f32.mrf.mxu0
        %v1804 = vadd.f32 %v1546, %v1803
        %1805 = vdwg.mxu0
        %v1806 = vld [vmem:[%s8] sm:$0x3]
        %v1808 = vperm.slane %v1806, 0
        %v1809 = vperm.slane %v1806, 1
        %v1812 = vadd.f32 %v1638, %v1808
        %v1813 = vadd.f32 %v1727, %v1809
        %v1814 = vadd.f32 %v1640, %v1808
        %v1815 = vadd.f32 %v1729, %v1809
        %v1816 = vadd.f32 %v1643, %v1808
        %v1817 = vadd.f32 %v1732, %v1809
        %v1818 = vadd.f32 %v1645, %v1808
        %v1819 = vadd.f32 %v1734, %v1809
        %v1820 = vadd.f32 %v1648, %v1808
        %v1821 = vadd.f32 %v1737, %v1809
        %v1822 = vadd.f32 %v1650, %v1808
        %v1823 = vadd.f32 %v1739, %v1809
        %v1824 = vadd.f32 %v1653, %v1808
        %v1825 = vadd.f32 %v1742, %v1809
        %v1826 = vadd.f32 %v1655, %v1808
        %v1827 = vadd.f32 %v1744, %v1809
        %v1828 = vadd.f32 %v1658, %v1808
        %v1829 = vadd.f32 %v1747, %v1809
        %v1830 = vadd.f32 %v1660, %v1808
        %v1831 = vadd.f32 %v1749, %v1809
        %v1832 = vadd.f32 %v1663, %v1808
        %v1833 = vadd.f32 %v1752, %v1809
        %v1834 = vadd.f32 %v1665, %v1808
        %v1835 = vadd.f32 %v1754, %v1809
        %v1836 = vadd.f32 %v1668, %v1808
        %v1837 = vadd.f32 %v1757, %v1809
        %v1838 = vadd.f32 %v1670, %v1808
        %v1839 = vadd.f32 %v1759, %v1809
        %v1840 = vadd.f32 %v1673, %v1808
        %v1841 = vadd.f32 %v1762, %v1809
        %v1842 = vadd.f32 %v1675, %v1808
        %v1843 = vadd.f32 %v1764, %v1809
        %v1844 = vadd.f32 %v1678, %v1808
        %v1845 = vadd.f32 %v1767, %v1809
        %v1846 = vadd.f32 %v1680, %v1808
        %v1847 = vadd.f32 %v1769, %v1809
        %v1848 = vadd.f32 %v1683, %v1808
        %v1849 = vadd.f32 %v1772, %v1809
        %v1850 = vadd.f32 %v1685, %v1808
        %v1851 = vadd.f32 %v1774, %v1809
        %v1852 = vadd.f32 %v1688, %v1808
        %v1853 = vadd.f32 %v1777, %v1809
        %v1854 = vadd.f32 %v1690, %v1808
        %v1855 = vadd.f32 %v1779, %v1809
        %v1856 = vadd.f32 %v1693, %v1808
        %v1857 = vadd.f32 %v1782, %v1809
        %v1858 = vadd.f32 %v1695, %v1808
        %v1859 = vadd.f32 %v1784, %v1809
        %v1860 = vadd.f32 %v1698, %v1808
        %v1861 = vadd.f32 %v1787, %v1809
        %v1862 = vadd.f32 %v1700, %v1808
        %v1863 = vadd.f32 %v1789, %v1809
        %v1864 = vadd.f32 %v1703, %v1808
        %v1865 = vadd.f32 %v1792, %v1809
        %v1866 = vadd.f32 %v1705, %v1808
        %v1867 = vadd.f32 %v1794, %v1809
        %v1868 = vadd.f32 %v1708, %v1808
        %v1869 = vadd.f32 %v1797, %v1809
        %v1870 = vadd.f32 %v1710, %v1808
        %v1871 = vadd.f32 %v1799, %v1809
        %v1872 = vadd.f32 %v1713, %v1808
        %v1873 = vadd.f32 %v1802, %v1809
        %v1874 = vadd.f32 %v1715, %v1808
        %v1875 = vadd.f32 %v1804, %v1809
        %v1876 = vmax.f32 %v1812, 0.0
        %v1877 = vmax.f32 %v1813, 0.0
        %v1878 = vmax.f32 %v1814, 0.0
        %v1879 = vmax.f32 %v1815, 0.0
        %v1880 = vmax.f32 %v1816, 0.0
        %v1881 = vmax.f32 %v1817, 0.0
        %v1882 = vmax.f32 %v1818, 0.0
        %v1883 = vmax.f32 %v1819, 0.0
        %v1884 = vmax.f32 %v1820, 0.0
        %v1885 = vmax.f32 %v1821, 0.0
        %v1886 = vmax.f32 %v1822, 0.0
        %v1887 = vmax.f32 %v1823, 0.0
        %v1888 = vmax.f32 %v1824, 0.0
        %v1889 = vmax.f32 %v1825, 0.0
        %v1890 = vmax.f32 %v1826, 0.0
        %v1891 = vmax.f32 %v1827, 0.0
        %v1892 = vmax.f32 %v1828, 0.0
        %v1893 = vmax.f32 %v1829, 0.0
        %v1894 = vmax.f32 %v1830, 0.0
        %v1895 = vmax.f32 %v1831, 0.0
        %v1896 = vmax.f32 %v1832, 0.0
        %v1897 = vmax.f32 %v1833, 0.0
        %v1898 = vmax.f32 %v1834, 0.0
        %v1899 = vmax.f32 %v1835, 0.0
        %v1900 = vmax.f32 %v1836, 0.0
        %v1901 = vmax.f32 %v1837, 0.0
        %v1902 = vmax.f32 %v1838, 0.0
        %v1903 = vmax.f32 %v1839, 0.0
        %v1904 = vmax.f32 %v1840, 0.0
        %v1905 = vmax.f32 %v1841, 0.0
        %v1906 = vmax.f32 %v1842, 0.0
        %v1907 = vmax.f32 %v1843, 0.0
        %v1908 = vmax.f32 %v1844, 0.0
        %v1909 = vmax.f32 %v1845, 0.0
        %v1910 = vmax.f32 %v1846, 0.0
        %v1911 = vmax.f32 %v1847, 0.0
        %v1912 = vmax.f32 %v1848, 0.0
        %v1913 = vmax.f32 %v1849, 0.0
        %v1914 = vmax.f32 %v1850, 0.0
        %v1915 = vmax.f32 %v1851, 0.0
        %v1916 = vmax.f32 %v1852, 0.0
        %v1917 = vmax.f32 %v1853, 0.0
        %v1918 = vmax.f32 %v1854, 0.0
        %v1919 = vmax.f32 %v1855, 0.0
        %v1920 = vmax.f32 %v1856, 0.0
        %v1921 = vmax.f32 %v1857, 0.0
        %v1922 = vmax.f32 %v1858, 0.0
        %v1923 = vmax.f32 %v1859, 0.0
        %v1924 = vmax.f32 %v1860, 0.0
        %v1925 = vmax.f32 %v1861, 0.0
        %v1926 = vmax.f32 %v1862, 0.0
        %v1927 = vmax.f32 %v1863, 0.0
        %v1928 = vmax.f32 %v1864, 0.0
        %v1929 = vmax.f32 %v1865, 0.0
        %v1930 = vmax.f32 %v1866, 0.0
        %v1931 = vmax.f32 %v1867, 0.0
        %v1932 = vmax.f32 %v1868, 0.0
        %v1933 = vmax.f32 %v1869, 0.0
        %v1934 = vmax.f32 %v1870, 0.0
        %v1935 = vmax.f32 %v1871, 0.0
        %v1936 = vmax.f32 %v1872, 0.0
        %v1937 = vmax.f32 %v1873, 0.0
        %v1938 = vmax.f32 %v1874, 0.0
        %v1939 = vmax.f32 %v1875, 0.0
        %v1940 = vpack.c.bf16 %v1878, %v1876
        %v1941 = vpack.c.bf16 %v1879, %v1877
        %v1942 = vpack.c.bf16 %v1882, %v1880
        %v1943 = vpack.c.bf16 %v1883, %v1881
        %v1944 = vpack.c.bf16 %v1886, %v1884
        %v1945 = vpack.c.bf16 %v1887, %v1885
        %v1946 = vpack.c.bf16 %v1890, %v1888
        %v1947 = vpack.c.bf16 %v1891, %v1889
        %v1948 = vpack.c.bf16 %v1894, %v1892
        %v1949 = vpack.c.bf16 %v1895, %v1893
        %v1950 = vpack.c.bf16 %v1898, %v1896
        %v1951 = vpack.c.bf16 %v1899, %v1897
        %v1952 = vpack.c.bf16 %v1902, %v1900
        %v1953 = vpack.c.bf16 %v1903, %v1901
        %v1954 = vpack.c.bf16 %v1906, %v1904
        %v1955 = vpack.c.bf16 %v1907, %v1905
        %v1956 = vpack.c.bf16 %v1910, %v1908
        %v1957 = vpack.c.bf16 %v1911, %v1909
        %v1958 = vpack.c.bf16 %v1914, %v1912
        %v1959 = vpack.c.bf16 %v1915, %v1913
        %v1960 = vpack.c.bf16 %v1918, %v1916
        %v1961 = vpack.c.bf16 %v1919, %v1917
        %v1962 = vpack.c.bf16 %v1922, %v1920
        %v1963 = vpack.c.bf16 %v1923, %v1921
        %v1964 = vpack.c.bf16 %v1926, %v1924
        %v1965 = vpack.c.bf16 %v1927, %v1925
        %v1966 = vpack.c.bf16 %v1930, %v1928
        %v1967 = vpack.c.bf16 %v1931, %v1929
        %v1968 = vpack.c.bf16 %v1934, %v1932
        %v1969 = vpack.c.bf16 %v1935, %v1933
        %v1970 = vpack.c.bf16 %v1938, %v1936
        %v1971 = vpack.c.bf16 %v1939, %v1937
        %v1972 = vld [vmem:[%s5] sm:$0xff]
        %v1973 = vld [vmem:[%s5 + $0x8] sm:$0xff]
        %v1974 = vld [vmem:[%s5 + $0x10] sm:$0xff]
        %v1975 = vld [vmem:[%s5 + $0x18] sm:$0xff]
        %v1976 = vld [vmem:[%s5 + $0x20] sm:$0xff]
        %v1977 = vld [vmem:[%s5 + $0x28] sm:$0xff]
        %v1978 = vld [vmem:[%s5 + $0x30] sm:$0xff]
        %v1979 = vld [vmem:[%s5 + $0x38] sm:$0xff]
        %v1980 = vld [vmem:[%s5 + $0x40] sm:$0xff]
        %v1981 = vld [vmem:[%s5 + $0x48] sm:$0xff]
        %v1982 = vld [vmem:[%s5 + $0x50] sm:$0xff]
        %v1983 = vld [vmem:[%s5 + $0x58] sm:$0xff]
        %v1984 = vld [vmem:[%s5 + $0x60] sm:$0xff]
        %v1985 = vld [vmem:[%s5 + $0x68] sm:$0xff]
        %v1986 = vld [vmem:[%s5 + $0x70] sm:$0xff]
        %v1987 = vld [vmem:[%s5 + $0x78] sm:$0xff]
        %v1988 = vld [vmem:[%s5 + $0x80] sm:$0xff]
        %v1989 = vld [vmem:[%s5 + $0x88] sm:$0xff]
        %v1990 = vld [vmem:[%s5 + $0x90] sm:$0xff]
        %v1991 = vld [vmem:[%s5 + $0x98] sm:$0xff]
        %v1992 = vld [vmem:[%s5 + $0xa0] sm:$0xff]
        %v1993 = vld [vmem:[%s5 + $0xa8] sm:$0xff]
        %v1994 = vld [vmem:[%s5 + $0xb0] sm:$0xff]
        %v1995 = vld [vmem:[%s5 + $0xb8] sm:$0xff]
        %v1996 = vld [vmem:[%s5 + $0xc0] sm:$0xff]
        %v1997 = vld [vmem:[%s5 + $0xc8] sm:$0xff]
        %v1998 = vld [vmem:[%s5 + $0xd0] sm:$0xff]
        %v1999 = vld [vmem:[%s5 + $0xd8] sm:$0xff]
        %v2000 = vld [vmem:[%s5 + $0xe0] sm:$0xff]
        %v2001 = vld [vmem:[%s5 + $0xe8] sm:$0xff]
        %v2002 = vld [vmem:[%s5 + $0xf0] sm:$0xff]
        %v2003 = vld [vmem:[%s5 + $0xf8] sm:$0xff]
        %v2004 = vld [vmem:[%s9] sm:$0x3]
        %v2006 = vperm.slane %v2004, 0
        %v2007 = vperm.slane %v2004, 1
        %v2042 = vunpack.c.l.b16 %v1972
        %v2043 = vunpack.c.h.b16 %v1972
        %v2044 = vunpack.c.l.b16 %v1973
        %v2045 = vunpack.c.h.b16 %v1973
        %v2046 = vunpack.c.l.b16 %v1974
        %v2047 = vunpack.c.h.b16 %v1974
        %v2048 = vunpack.c.l.b16 %v1975
        %v2049 = vunpack.c.h.b16 %v1975
        %v2050 = vunpack.c.l.b16 %v1976
        %v2051 = vunpack.c.h.b16 %v1976
        %v2052 = vunpack.c.l.b16 %v1977
        %v2053 = vunpack.c.h.b16 %v1977
        %v2054 = vunpack.c.l.b16 %v1978
        %v2055 = vunpack.c.h.b16 %v1978
        %v2056 = vunpack.c.l.b16 %v1979
        %v2057 = vunpack.c.h.b16 %v1979
        %v2058 = vunpack.c.l.b16 %v1980
        %v2059 = vunpack.c.h.b16 %v1980
        %v2060 = vunpack.c.l.b16 %v1981
        %v2061 = vunpack.c.h.b16 %v1981
        %v2062 = vunpack.c.l.b16 %v1982
        %v2063 = vunpack.c.h.b16 %v1982
        %v2064 = vunpack.c.l.b16 %v1983
        %v2065 = vunpack.c.h.b16 %v1983
        %v2066 = vunpack.c.l.b16 %v1984
        %v2067 = vunpack.c.h.b16 %v1984
        %v2068 = vunpack.c.l.b16 %v1985
        %v2069 = vunpack.c.h.b16 %v1985
        %v2070 = vunpack.c.l.b16 %v1986
        %v2071 = vunpack.c.h.b16 %v1986
        %v2072 = vunpack.c.l.b16 %v1987
        %v2073 = vunpack.c.h.b16 %v1987
        %v2074 = vunpack.c.l.b16 %v1988
        %v2075 = vunpack.c.h.b16 %v1988
        %v2076 = vunpack.c.l.b16 %v1989
        %v2077 = vunpack.c.h.b16 %v1989
        %v2078 = vunpack.c.l.b16 %v1990
        %v2079 = vunpack.c.h.b16 %v1990
        %v2080 = vunpack.c.l.b16 %v1991
        %v2081 = vunpack.c.h.b16 %v1991
        %v2082 = vunpack.c.l.b16 %v1992
        %v2083 = vunpack.c.h.b16 %v1992
        %v2084 = vunpack.c.l.b16 %v1993
        %v2085 = vunpack.c.h.b16 %v1993
        %v2086 = vunpack.c.l.b16 %v1994
        %v2087 = vunpack.c.h.b16 %v1994
        %v2088 = vunpack.c.l.b16 %v1995
        %v2089 = vunpack.c.h.b16 %v1995
        %v2090 = vunpack.c.l.b16 %v1996
        %v2091 = vunpack.c.h.b16 %v1996
        %v2092 = vunpack.c.l.b16 %v1997
        %v2093 = vunpack.c.h.b16 %v1997
        %v2094 = vunpack.c.l.b16 %v1998
        %v2095 = vunpack.c.h.b16 %v1998
        %v2096 = vunpack.c.l.b16 %v1999
        %v2097 = vunpack.c.h.b16 %v1999
        %v2098 = vunpack.c.l.b16 %v2000
        %v2099 = vunpack.c.h.b16 %v2000
        %v2100 = vunpack.c.l.b16 %v2001
        %v2101 = vunpack.c.h.b16 %v2001
        %v2102 = vunpack.c.l.b16 %v2002
        %v2103 = vunpack.c.h.b16 %v2002
        %v2104 = vunpack.c.l.b16 %v2003
        %v2105 = vunpack.c.h.b16 %v2003
        %v2106 = vpack.c.b16 %v2044, %v2042
        %v2107 = vpack.c.b16 %v2045, %v2043
        %v2108 = vpack.c.b16 %v2048, %v2046
        %v2109 = vpack.c.b16 %v2049, %v2047
        %v2110 = vpack.c.b16 %v2052, %v2050
        %v2111 = vpack.c.b16 %v2053, %v2051
        %v2112 = vpack.c.b16 %v2056, %v2054
        %v2113 = vpack.c.b16 %v2057, %v2055
        %v2114 = vpack.c.b16 %v2060, %v2058
        %v2115 = vpack.c.b16 %v2061, %v2059
        %v2116 = vpack.c.b16 %v2064, %v2062
        %v2117 = vpack.c.b16 %v2065, %v2063
        %v2118 = vpack.c.b16 %v2068, %v2066
        %v2119 = vpack.c.b16 %v2069, %v2067
        %v2120 = vpack.c.b16 %v2072, %v2070
        %v2121 = vpack.c.b16 %v2073, %v2071
        %v2122 = vpack.c.b16 %v2076, %v2074
        %v2123 = vpack.c.b16 %v2077, %v2075
        %v2124 = vpack.c.b16 %v2080, %v2078
        %v2125 = vpack.c.b16 %v2081, %v2079
        %v2126 = vpack.c.b16 %v2084, %v2082
        %v2127 = vpack.c.b16 %v2085, %v2083
        %v2128 = vpack.c.b16 %v2088, %v2086
        %v2129 = vpack.c.b16 %v2089, %v2087
        %v2130 = vpack.c.b16 %v2092, %v2090
        %v2131 = vpack.c.b16 %v2093, %v2091
        %v2132 = vpack.c.b16 %v2096, %v2094
        %v2133 = vpack.c.b16 %v2097, %v2095
        %v2134 = vpack.c.b16 %v2100, %v2098
        %v2135 = vpack.c.b16 %v2101, %v2099
        %v2136 = vpack.c.b16 %v2104, %v2102
        %v2137 = vpack.c.b16 %v2105, %v2103
        %2170 = vmatpush.bf16.msra.mxu0 %v2120
        %2171 = vmatpush.bf16.msra.mxu0 %v2118
        %2172 = vmatpush.bf16.msra.mxu0 %v2116
        %2173 = vmatpush.bf16.msra.mxu0 %v2114
        %2174 = vmatpush.bf16.msra.mxu0 %v2112
        %2175 = vmatpush.bf16.msra.mxu0 %v2110
        %2176 = vmatpush.bf16.msra.mxu0 %v2108
        %2177 = vmatpush.bf16.msra.mxu0 %v2106
        %2178 = vmatmul.bf16.gmra.mxu0 %v1940
        %v2179 = vpop.f32.mrf.mxu0
        %v2180 = vadd.f32 %v2006, %v2179
        %v2181 = vpop.f32.mrf.mxu0
        %v2182 = vadd.f32 %v2006, %v2181
        %2183 = vmatmul.bf16.gmra.mxu0 %v1942
        %v2184 = vpop.f32.mrf.mxu0
        %v2185 = vadd.f32 %v2006, %v2184
        %v2186 = vpop.f32.mrf.mxu0
        %v2187 = vadd.f32 %v2006, %v2186
        %2188 = vmatmul.bf16.gmra.mxu0 %v1944
        %v2189 = vpop.f32.mrf.mxu0
        %v2190 = vadd.f32 %v2006, %v2189
        %v2191 = vpop.f32.mrf.mxu0
        %v2192 = vadd.f32 %v2006, %v2191
        %2193 = vmatmul.bf16.gmra.mxu0 %v1946
        %v2194 = vpop.f32.mrf.mxu0
        %v2195 = vadd.f32 %v2006, %v2194
        %v2196 = vpop.f32.mrf.mxu0
        %v2197 = vadd.f32 %v2006, %v2196
        %2198 = vmatmul.bf16.gmra.mxu0 %v1948
        %v2199 = vpop.f32.mrf.mxu0
        %v2200 = vadd.f32 %v2006, %v2199
        %v2201 = vpop.f32.mrf.mxu0
        %v2202 = vadd.f32 %v2006, %v2201
        %2203 = vmatmul.bf16.gmra.mxu0 %v1950
        %v2204 = vpop.f32.mrf.mxu0
        %v2205 = vadd.f32 %v2006, %v2204
        %v2206 = vpop.f32.mrf.mxu0
        %v2207 = vadd.f32 %v2006, %v2206
        %2208 = vmatmul.bf16.gmra.mxu0 %v1952
        %v2209 = vpop.f32.mrf.mxu0
        %v2210 = vadd.f32 %v2006, %v2209
        %v2211 = vpop.f32.mrf.mxu0
        %v2212 = vadd.f32 %v2006, %v2211
        %2213 = vmatmul.bf16.gmra.mxu0 %v1954
        %v2214 = vpop.f32.mrf.mxu0
        %v2215 = vadd.f32 %v2006, %v2214
        %v2216 = vpop.f32.mrf.mxu0
        %v2217 = vadd.f32 %v2006, %v2216
        %2218 = vmatmul.bf16.gmra.mxu0 %v1956
        %v2219 = vpop.f32.mrf.mxu0
        %v2220 = vadd.f32 %v2006, %v2219
        %v2221 = vpop.f32.mrf.mxu0
        %v2222 = vadd.f32 %v2006, %v2221
        %2223 = vmatmul.bf16.gmra.mxu0 %v1958
        %v2224 = vpop.f32.mrf.mxu0
        %v2225 = vadd.f32 %v2006, %v2224
        %v2226 = vpop.f32.mrf.mxu0
        %v2227 = vadd.f32 %v2006, %v2226
        %2228 = vmatmul.bf16.gmra.mxu0 %v1960
        %v2229 = vpop.f32.mrf.mxu0
        %v2230 = vadd.f32 %v2006, %v2229
        %v2231 = vpop.f32.mrf.mxu0
        %v2232 = vadd.f32 %v2006, %v2231
        %2233 = vmatmul.bf16.gmra.mxu0 %v1962
        %v2234 = vpop.f32.mrf.mxu0
        %v2235 = vadd.f32 %v2006, %v2234
        %v2236 = vpop.f32.mrf.mxu0
        %v2237 = vadd.f32 %v2006, %v2236
        %2238 = vmatmul.bf16.gmra.mxu0 %v1964
        %v2239 = vpop.f32.mrf.mxu0
        %v2240 = vadd.f32 %v2006, %v2239
        %v2241 = vpop.f32.mrf.mxu0
        %v2242 = vadd.f32 %v2006, %v2241
        %2243 = vmatmul.bf16.gmra.mxu0 %v1966
        %v2244 = vpop.f32.mrf.mxu0
        %v2245 = vadd.f32 %v2006, %v2244
        %v2246 = vpop.f32.mrf.mxu0
        %v2247 = vadd.f32 %v2006, %v2246
        %2248 = vmatmul.bf16.gmra.mxu0 %v1968
        %v2249 = vpop.f32.mrf.mxu0
        %v2250 = vadd.f32 %v2006, %v2249
        %v2251 = vpop.f32.mrf.mxu0
        %v2252 = vadd.f32 %v2006, %v2251
        %2253 = vmatmul.bf16.gmra.mxu0 %v1970
        %v2254 = vpop.f32.mrf.mxu0
        %v2255 = vadd.f32 %v2006, %v2254
        %v2256 = vpop.f32.mrf.mxu0
        %v2257 = vadd.f32 %v2006, %v2256
        %2258 = vdwg.mxu0
        %2259 = vmatpush.bf16.msra.mxu0 %v2136
        %2260 = vmatpush.bf16.msra.mxu0 %v2134
        %2261 = vmatpush.bf16.msra.mxu0 %v2132
        %2262 = vmatpush.bf16.msra.mxu0 %v2130
        %2263 = vmatpush.bf16.msra.mxu0 %v2128
        %2264 = vmatpush.bf16.msra.mxu0 %v2126
        %2265 = vmatpush.bf16.msra.mxu0 %v2124
        %2266 = vmatpush.bf16.msra.mxu0 %v2122
        %2267 = vmatmul.bf16.gmra.mxu0 %v1941
        %v2268 = vpop.f32.mrf.mxu0
        %v2269 = vadd.f32 %v2180, %v2268
        %v2270 = vpop.f32.mrf.mxu0
        %v2271 = vadd.f32 %v2182, %v2270
        %2272 = vmatmul.bf16.gmra.mxu0 %v1943
        %v2273 = vpop.f32.mrf.mxu0
        %v2274 = vadd.f32 %v2185, %v2273
        %v2275 = vpop.f32.mrf.mxu0
        %v2276 = vadd.f32 %v2187, %v2275
        %2277 = vmatmul.bf16.gmra.mxu0 %v1945
        %v2278 = vpop.f32.mrf.mxu0
        %v2279 = vadd.f32 %v2190, %v2278
        %v2280 = vpop.f32.mrf.mxu0
        %v2281 = vadd.f32 %v2192, %v2280
        %2282 = vmatmul.bf16.gmra.mxu0 %v1947
        %v2283 = vpop.f32.mrf.mxu0
        %v2284 = vadd.f32 %v2195, %v2283
        %v2285 = vpop.f32.mrf.mxu0
        %v2286 = vadd.f32 %v2197, %v2285
        %2287 = vmatmul.bf16.gmra.mxu0 %v1949
        %v2288 = vpop.f32.mrf.mxu0
        %v2289 = vadd.f32 %v2200, %v2288
        %v2290 = vpop.f32.mrf.mxu0
        %v2291 = vadd.f32 %v2202, %v2290
        %2292 = vmatmul.bf16.gmra.mxu0 %v1951
        %v2293 = vpop.f32.mrf.mxu0
        %v2294 = vadd.f32 %v2205, %v2293
        %v2295 = vpop.f32.mrf.mxu0
        %v2296 = vadd.f32 %v2207, %v2295
        %2297 = vmatmul.bf16.gmra.mxu0 %v1953
        %v2298 = vpop.f32.mrf.mxu0
        %v2299 = vadd.f32 %v2210, %v2298
        %v2300 = vpop.f32.mrf.mxu0
        %v2301 = vadd.f32 %v2212, %v2300
        %2302 = vmatmul.bf16.gmra.mxu0 %v1955
        %v2303 = vpop.f32.mrf.mxu0
        %v2304 = vadd.f32 %v2215, %v2303
        %v2305 = vpop.f32.mrf.mxu0
        %v2306 = vadd.f32 %v2217, %v2305
        %2307 = vmatmul.bf16.gmra.mxu0 %v1957
        %v2308 = vpop.f32.mrf.mxu0
        %v2309 = vadd.f32 %v2220, %v2308
        %v2310 = vpop.f32.mrf.mxu0
        %v2311 = vadd.f32 %v2222, %v2310
        %2312 = vmatmul.bf16.gmra.mxu0 %v1959
        %v2313 = vpop.f32.mrf.mxu0
        %v2314 = vadd.f32 %v2225, %v2313
        %v2315 = vpop.f32.mrf.mxu0
        %v2316 = vadd.f32 %v2227, %v2315
        %2317 = vmatmul.bf16.gmra.mxu0 %v1961
        %v2318 = vpop.f32.mrf.mxu0
        %v2319 = vadd.f32 %v2230, %v2318
        %v2320 = vpop.f32.mrf.mxu0
        %v2321 = vadd.f32 %v2232, %v2320
        %2322 = vmatmul.bf16.gmra.mxu0 %v1963
        %v2323 = vpop.f32.mrf.mxu0
        %v2324 = vadd.f32 %v2235, %v2323
        %v2325 = vpop.f32.mrf.mxu0
        %v2326 = vadd.f32 %v2237, %v2325
        %2327 = vmatmul.bf16.gmra.mxu0 %v1965
        %v2328 = vpop.f32.mrf.mxu0
        %v2329 = vadd.f32 %v2240, %v2328
        %v2330 = vpop.f32.mrf.mxu0
        %v2331 = vadd.f32 %v2242, %v2330
        %2332 = vmatmul.bf16.gmra.mxu0 %v1967
        %v2333 = vpop.f32.mrf.mxu0
        %v2334 = vadd.f32 %v2245, %v2333
        %v2335 = vpop.f32.mrf.mxu0
        %v2336 = vadd.f32 %v2247, %v2335
        %2337 = vmatmul.bf16.gmra.mxu0 %v1969
        %v2338 = vpop.f32.mrf.mxu0
        %v2339 = vadd.f32 %v2250, %v2338
        %v2340 = vpop.f32.mrf.mxu0
        %v2341 = vadd.f32 %v2252, %v2340
        %2342 = vmatmul.bf16.gmra.mxu0 %v1971
        %v2343 = vpop.f32.mrf.mxu0
        %v2344 = vadd.f32 %v2255, %v2343
        %v2345 = vpop.f32.mrf.mxu0
        %v2346 = vadd.f32 %v2257, %v2345
        %2347 = vdwg.mxu0
        %2348 = vmatpush.bf16.msra.mxu0 %v2121
        %2349 = vmatpush.bf16.msra.mxu0 %v2119
        %2350 = vmatpush.bf16.msra.mxu0 %v2117
        %2351 = vmatpush.bf16.msra.mxu0 %v2115
        %2352 = vmatpush.bf16.msra.mxu0 %v2113
        %2353 = vmatpush.bf16.msra.mxu0 %v2111
        %2354 = vmatpush.bf16.msra.mxu0 %v2109
        %2355 = vmatpush.bf16.msra.mxu0 %v2107
        %2356 = vmatmul.bf16.gmra.mxu0 %v1940
        %v2357 = vpop.f32.mrf.mxu0
        %v2358 = vadd.f32 %v2007, %v2357
        %v2359 = vpop.f32.mrf.mxu0
        %v2360 = vadd.f32 %v2007, %v2359
        %2361 = vmatmul.bf16.gmra.mxu0 %v1942
        %v2362 = vpop.f32.mrf.mxu0
        %v2363 = vadd.f32 %v2007, %v2362
        %v2364 = vpop.f32.mrf.mxu0
        %v2365 = vadd.f32 %v2007, %v2364
        %2366 = vmatmul.bf16.gmra.mxu0 %v1944
        %v2367 = vpop.f32.mrf.mxu0
        %v2368 = vadd.f32 %v2007, %v2367
        %v2369 = vpop.f32.mrf.mxu0
        %v2370 = vadd.f32 %v2007, %v2369
        %2371 = vmatmul.bf16.gmra.mxu0 %v1946
        %v2372 = vpop.f32.mrf.mxu0
        %v2373 = vadd.f32 %v2007, %v2372
        %v2374 = vpop.f32.mrf.mxu0
        %v2375 = vadd.f32 %v2007, %v2374
        %2376 = vmatmul.bf16.gmra.mxu0 %v1948
        %v2377 = vpop.f32.mrf.mxu0
        %v2378 = vadd.f32 %v2007, %v2377
        %v2379 = vpop.f32.mrf.mxu0
        %v2380 = vadd.f32 %v2007, %v2379
        %2381 = vmatmul.bf16.gmra.mxu0 %v1950
        %v2382 = vpop.f32.mrf.mxu0
        %v2383 = vadd.f32 %v2007, %v2382
        %v2384 = vpop.f32.mrf.mxu0
        %v2385 = vadd.f32 %v2007, %v2384
        %2386 = vmatmul.bf16.gmra.mxu0 %v1952
        %v2387 = vpop.f32.mrf.mxu0
        %v2388 = vadd.f32 %v2007, %v2387
        %v2389 = vpop.f32.mrf.mxu0
        %v2390 = vadd.f32 %v2007, %v2389
        %2391 = vmatmul.bf16.gmra.mxu0 %v1954
        %v2392 = vpop.f32.mrf.mxu0
        %v2393 = vadd.f32 %v2007, %v2392
        %v2394 = vpop.f32.mrf.mxu0
        %v2395 = vadd.f32 %v2007, %v2394
        %2396 = vmatmul.bf16.gmra.mxu0 %v1956
        %v2397 = vpop.f32.mrf.mxu0
        %v2398 = vadd.f32 %v2007, %v2397
        %v2399 = vpop.f32.mrf.mxu0
        %v2400 = vadd.f32 %v2007, %v2399
        %2401 = vmatmul.bf16.gmra.mxu0 %v1958
        %v2402 = vpop.f32.mrf.mxu0
        %v2403 = vadd.f32 %v2007, %v2402
        %v2404 = vpop.f32.mrf.mxu0
        %v2405 = vadd.f32 %v2007, %v2404
        %2406 = vmatmul.bf16.gmra.mxu0 %v1960
        %v2407 = vpop.f32.mrf.mxu0
        %v2408 = vadd.f32 %v2007, %v2407
        %v2409 = vpop.f32.mrf.mxu0
        %v2410 = vadd.f32 %v2007, %v2409
        %2411 = vmatmul.bf16.gmra.mxu0 %v1962
        %v2412 = vpop.f32.mrf.mxu0
        %v2413 = vadd.f32 %v2007, %v2412
        %v2414 = vpop.f32.mrf.mxu0
        %v2415 = vadd.f32 %v2007, %v2414
        %2416 = vmatmul.bf16.gmra.mxu0 %v1964
        %v2417 = vpop.f32.mrf.mxu0
        %v2418 = vadd.f32 %v2007, %v2417
        %v2419 = vpop.f32.mrf.mxu0
        %v2420 = vadd.f32 %v2007, %v2419
        %2421 = vmatmul.bf16.gmra.mxu0 %v1966
        %v2422 = vpop.f32.mrf.mxu0
        %v2423 = vadd.f32 %v2007, %v2422
        %v2424 = vpop.f32.mrf.mxu0
        %v2425 = vadd.f32 %v2007, %v2424
        %2426 = vmatmul.bf16.gmra.mxu0 %v1968
        %v2427 = vpop.f32.mrf.mxu0
        %v2428 = vadd.f32 %v2007, %v2427
        %v2429 = vpop.f32.mrf.mxu0
        %v2430 = vadd.f32 %v2007, %v2429
        %2431 = vmatmul.bf16.gmra.mxu0 %v1970
        %v2432 = vpop.f32.mrf.mxu0
        %v2433 = vadd.f32 %v2007, %v2432
        %v2434 = vpop.f32.mrf.mxu0
        %v2435 = vadd.f32 %v2007, %v2434
        %2436 = vdwg.mxu0
        %2437 = vmatpush.bf16.msra.mxu0 %v2137
        %2438 = vmatpush.bf16.msra.mxu0 %v2135
        %2439 = vmatpush.bf16.msra.mxu0 %v2133
        %2440 = vmatpush.bf16.msra.mxu0 %v2131
        %2441 = vmatpush.bf16.msra.mxu0 %v2129
        %2442 = vmatpush.bf16.msra.mxu0 %v2127
        %2443 = vmatpush.bf16.msra.mxu0 %v2125
        %2444 = vmatpush.bf16.msra.mxu0 %v2123
        %2445 = vmatmul.bf16.gmra.mxu0 %v1941
        %v2446 = vpop.f32.mrf.mxu0
        %v2447 = vadd.f32 %v2358, %v2446
        %v2448 = vpop.f32.mrf.mxu0
        %v2449 = vadd.f32 %v2360, %v2448
        %2450 = vmatmul.bf16.gmra.mxu0 %v1943
        %v2451 = vpop.f32.mrf.mxu0
        %v2452 = vadd.f32 %v2363, %v2451
        %v2453 = vpop.f32.mrf.mxu0
        %v2454 = vadd.f32 %v2365, %v2453
        %2455 = vmatmul.bf16.gmra.mxu0 %v1945
        %v2456 = vpop.f32.mrf.mxu0
        %v2457 = vadd.f32 %v2368, %v2456
        %v2458 = vpop.f32.mrf.mxu0
        %v2459 = vadd.f32 %v2370, %v2458
        %2460 = vmatmul.bf16.gmra.mxu0 %v1947
        %v2461 = vpop.f32.mrf.mxu0
        %v2462 = vadd.f32 %v2373, %v2461
        %v2463 = vpop.f32.mrf.mxu0
        %v2464 = vadd.f32 %v2375, %v2463
        %2465 = vmatmul.bf16.gmra.mxu0 %v1949
        %v2466 = vpop.f32.mrf.mxu0
        %v2467 = vadd.f32 %v2378, %v2466
        %v2468 = vpop.f32.mrf.mxu0
        %v2469 = vadd.f32 %v2380, %v2468
        %2470 = vmatmul.bf16.gmra.mxu0 %v1951
        %v2471 = vpop.f32.mrf.mxu0
        %v2472 = vadd.f32 %v2383, %v2471
        %v2473 = vpop.f32.mrf.mxu0
        %v2474 = vadd.f32 %v2385, %v2473
        %2475 = vmatmul.bf16.gmra.mxu0 %v1953
        %v2476 = vpop.f32.mrf.mxu0
        %v2477 = vadd.f32 %v2388, %v2476
        %v2478 = vpop.f32.mrf.mxu0
        %v2479 = vadd.f32 %v2390, %v2478
        %2480 = vmatmul.bf16.gmra.mxu0 %v1955
        %v2481 = vpop.f32.mrf.mxu0
        %v2482 = vadd.f32 %v2393, %v2481
        %v2483 = vpop.f32.mrf.mxu0
        %v2484 = vadd.f32 %v2395, %v2483
        %2485 = vmatmul.bf16.gmra.mxu0 %v1957
        %v2486 = vpop.f32.mrf.mxu0
        %v2487 = vadd.f32 %v2398, %v2486
        %v2488 = vpop.f32.mrf.mxu0
        %v2489 = vadd.f32 %v2400, %v2488
        %2490 = vmatmul.bf16.gmra.mxu0 %v1959
        %v2491 = vpop.f32.mrf.mxu0
        %v2492 = vadd.f32 %v2403, %v2491
        %v2493 = vpop.f32.mrf.mxu0
        %v2494 = vadd.f32 %v2405, %v2493
        %2495 = vmatmul.bf16.gmra.mxu0 %v1961
        %v2496 = vpop.f32.mrf.mxu0
        %v2497 = vadd.f32 %v2408, %v2496
        %v2498 = vpop.f32.mrf.mxu0
        %v2499 = vadd.f32 %v2410, %v2498
        %2500 = vmatmul.bf16.gmra.mxu0 %v1963
        %v2501 = vpop.f32.mrf.mxu0
        %v2502 = vadd.f32 %v2413, %v2501
        %v2503 = vpop.f32.mrf.mxu0
        %v2504 = vadd.f32 %v2415, %v2503
        %2505 = vmatmul.bf16.gmra.mxu0 %v1965
        %v2506 = vpop.f32.mrf.mxu0
        %v2507 = vadd.f32 %v2418, %v2506
        %v2508 = vpop.f32.mrf.mxu0
        %v2509 = vadd.f32 %v2420, %v2508
        %2510 = vmatmul.bf16.gmra.mxu0 %v1967
        %v2511 = vpop.f32.mrf.mxu0
        %v2512 = vadd.f32 %v2423, %v2511
        %v2513 = vpop.f32.mrf.mxu0
        %v2514 = vadd.f32 %v2425, %v2513
        %2515 = vmatmul.bf16.gmra.mxu0 %v1969
        %v2516 = vpop.f32.mrf.mxu0
        %v2517 = vadd.f32 %v2428, %v2516
        %v2518 = vpop.f32.mrf.mxu0
        %v2519 = vadd.f32 %v2430, %v2518
        %2520 = vmatmul.bf16.gmra.mxu0 %v1971
        %v2521 = vpop.f32.mrf.mxu0
        %v2522 = vadd.f32 %v2433, %v2521
        %v2523 = vpop.f32.mrf.mxu0
        %v2524 = vadd.f32 %v2435, %v2523
        %2525 = vdwg.mxu0
        %vm2526 = vcmp.gt.f32.partialorder %v2269, 0.01
        %vm2527 = vcmp.gt.f32.partialorder %v2447, 0.01
        %vm2528 = vcmp.gt.f32.partialorder %v2271, 0.01
        %vm2529 = vcmp.gt.f32.partialorder %v2449, 0.01
        %vm2530 = vcmp.gt.f32.partialorder %v2274, 0.01
        %vm2531 = vcmp.gt.f32.partialorder %v2452, 0.01
        %vm2532 = vcmp.gt.f32.partialorder %v2276, 0.01
        %vm2533 = vcmp.gt.f32.partialorder %v2454, 0.01
        %vm2534 = vcmp.gt.f32.partialorder %v2279, 0.01
        %vm2535 = vcmp.gt.f32.partialorder %v2457, 0.01
        %vm2536 = vcmp.gt.f32.partialorder %v2281, 0.01
        %vm2537 = vcmp.gt.f32.partialorder %v2459, 0.01
        %vm2538 = vcmp.gt.f32.partialorder %v2284, 0.01
        %vm2539 = vcmp.gt.f32.partialorder %v2462, 0.01
        %vm2540 = vcmp.gt.f32.partialorder %v2286, 0.01
        %vm2541 = vcmp.gt.f32.partialorder %v2464, 0.01
        %vm2542 = vcmp.gt.f32.partialorder %v2289, 0.01
        %vm2543 = vcmp.gt.f32.partialorder %v2467, 0.01
        %vm2544 = vcmp.gt.f32.partialorder %v2291, 0.01
        %vm2545 = vcmp.gt.f32.partialorder %v2469, 0.01
        %vm2546 = vcmp.gt.f32.partialorder %v2294, 0.01
        %vm2547 = vcmp.gt.f32.partialorder %v2472, 0.01
        %vm2548 = vcmp.gt.f32.partialorder %v2296, 0.01
        %vm2549 = vcmp.gt.f32.partialorder %v2474, 0.01
        %vm2550 = vcmp.gt.f32.partialorder %v2299, 0.01
        %vm2551 = vcmp.gt.f32.partialorder %v2477, 0.01
        %vm2552 = vcmp.gt.f32.partialorder %v2301, 0.01
        %vm2553 = vcmp.gt.f32.partialorder %v2479, 0.01
        %vm2554 = vcmp.gt.f32.partialorder %v2304, 0.01
        %vm2555 = vcmp.gt.f32.partialorder %v2482, 0.01
        %vm2556 = vcmp.gt.f32.partialorder %v2306, 0.01
        %vm2557 = vcmp.gt.f32.partialorder %v2484, 0.01
        %vm2558 = vcmp.gt.f32.partialorder %v2309, 0.01
        %vm2559 = vcmp.gt.f32.partialorder %v2487, 0.01
        %vm2560 = vcmp.gt.f32.partialorder %v2311, 0.01
        %vm2561 = vcmp.gt.f32.partialorder %v2489, 0.01
        %vm2562 = vcmp.gt.f32.partialorder %v2314, 0.01
        %vm2563 = vcmp.gt.f32.partialorder %v2492, 0.01
        %vm2564 = vcmp.gt.f32.partialorder %v2316, 0.01
        %vm2565 = vcmp.gt.f32.partialorder %v2494, 0.01
        %vm2566 = vcmp.gt.f32.partialorder %v2319, 0.01
        %vm2567 = vcmp.gt.f32.partialorder %v2497, 0.01
        %vm2568 = vcmp.gt.f32.partialorder %v2321, 0.01
        %vm2569 = vcmp.gt.f32.partialorder %v2499, 0.01
        %vm2570 = vcmp.gt.f32.partialorder %v2324, 0.01
        %vm2571 = vcmp.gt.f32.partialorder %v2502, 0.01
        %vm2572 = vcmp.gt.f32.partialorder %v2326, 0.01
        %vm2573 = vcmp.gt.f32.partialorder %v2504, 0.01
        %vm2574 = vcmp.gt.f32.partialorder %v2329, 0.01
        %vm2575 = vcmp.gt.f32.partialorder %v2507, 0.01
        %vm2576 = vcmp.gt.f32.partialorder %v2331, 0.01
        %vm2577 = vcmp.gt.f32.partialorder %v2509, 0.01
        %vm2578 = vcmp.gt.f32.partialorder %v2334, 0.01
        %vm2579 = vcmp.gt.f32.partialorder %v2512, 0.01
        %vm2580 = vcmp.gt.f32.partialorder %v2336, 0.01
        %vm2581 = vcmp.gt.f32.partialorder %v2514, 0.01
        %vm2582 = vcmp.gt.f32.partialorder %v2339, 0.01
        %vm2583 = vcmp.gt.f32.partialorder %v2517, 0.01
        %vm2584 = vcmp.gt.f32.partialorder %v2341, 0.01
        %vm2585 = vcmp.gt.f32.partialorder %v2519, 0.01
        %vm2586 = vcmp.gt.f32.partialorder %v2344, 0.01
        %vm2587 = vcmp.gt.f32.partialorder %v2522, 0.01
        %vm2588 = vcmp.gt.f32.partialorder %v2346, 0.01
        %vm2589 = vcmp.gt.f32.partialorder %v2524, 0.01
        %v2590 = vsub.f32 %v2269, 0.01
        %v2591 = vsub.f32 %v2447, 0.01
        %v2592 = vsub.f32 %v2271, 0.01
        %v2593 = vsub.f32 %v2449, 0.01
        %v2594 = vsub.f32 %v2274, 0.01
        %v2595 = vsub.f32 %v2452, 0.01
        %v2596 = vsub.f32 %v2276, 0.01
        %v2597 = vsub.f32 %v2454, 0.01
        %v2598 = vsub.f32 %v2279, 0.01
        %v2599 = vsub.f32 %v2457, 0.01
        %v2600 = vsub.f32 %v2281, 0.01
        %v2601 = vsub.f32 %v2459, 0.01
        %v2602 = vsub.f32 %v2284, 0.01
        %v2603 = vsub.f32 %v2462, 0.01
        %v2604 = vsub.f32 %v2286, 0.01
        %v2605 = vsub.f32 %v2464, 0.01
        %v2606 = vsub.f32 %v2289, 0.01
        %v2607 = vsub.f32 %v2467, 0.01
        %v2608 = vsub.f32 %v2291, 0.01
        %v2609 = vsub.f32 %v2469, 0.01
        %v2610 = vsub.f32 %v2294, 0.01
        %v2611 = vsub.f32 %v2472, 0.01
        %v2612 = vsub.f32 %v2296, 0.01
        %v2613 = vsub.f32 %v2474, 0.01
        %v2614 = vsub.f32 %v2299, 0.01
        %v2615 = vsub.f32 %v2477, 0.01
        %v2616 = vsub.f32 %v2301, 0.01
        %v2617 = vsub.f32 %v2479, 0.01
        %v2618 = vsub.f32 %v2304, 0.01
        %v2619 = vsub.f32 %v2482, 0.01
        %v2620 = vsub.f32 %v2306, 0.01
        %v2621 = vsub.f32 %v2484, 0.01
        %v2622 = vsub.f32 %v2309, 0.01
        %v2623 = vsub.f32 %v2487, 0.01
        %v2624 = vsub.f32 %v2311, 0.01
        %v2625 = vsub.f32 %v2489, 0.01
        %v2626 = vsub.f32 %v2314, 0.01
        %v2627 = vsub.f32 %v2492, 0.01
        %v2628 = vsub.f32 %v2316, 0.01
        %v2629 = vsub.f32 %v2494, 0.01
        %v2630 = vsub.f32 %v2319, 0.01
        %v2631 = vsub.f32 %v2497, 0.01
        %v2632 = vsub.f32 %v2321, 0.01
        %v2633 = vsub.f32 %v2499, 0.01
        %v2634 = vsub.f32 %v2324, 0.01
        %v2635 = vsub.f32 %v2502, 0.01
        %v2636 = vsub.f32 %v2326, 0.01
        %v2637 = vsub.f32 %v2504, 0.01
        %v2638 = vsub.f32 %v2329, 0.01
        %v2639 = vsub.f32 %v2507, 0.01
        %v2640 = vsub.f32 %v2331, 0.01
        %v2641 = vsub.f32 %v2509, 0.01
        %v2642 = vsub.f32 %v2334, 0.01
        %v2643 = vsub.f32 %v2512, 0.01
        %v2644 = vsub.f32 %v2336, 0.01
        %v2645 = vsub.f32 %v2514, 0.01
        %v2646 = vsub.f32 %v2339, 0.01
        %v2647 = vsub.f32 %v2517, 0.01
        %v2648 = vsub.f32 %v2341, 0.01
        %v2649 = vsub.f32 %v2519, 0.01
        %v2650 = vsub.f32 %v2344, 0.01
        %v2651 = vsub.f32 %v2522, 0.01
        %v2652 = vsub.f32 %v2346, 0.01
        %v2653 = vsub.f32 %v2524, 0.01
        %vm2654 = vcmp.lt.f32.partialorder %v2269, -0.01
        %vm2655 = vcmp.lt.f32.partialorder %v2447, -0.01
        %vm2656 = vcmp.lt.f32.partialorder %v2271, -0.01
        %vm2657 = vcmp.lt.f32.partialorder %v2449, -0.01
        %vm2658 = vcmp.lt.f32.partialorder %v2274, -0.01
        %vm2659 = vcmp.lt.f32.partialorder %v2452, -0.01
        %vm2660 = vcmp.lt.f32.partialorder %v2276, -0.01
        %vm2661 = vcmp.lt.f32.partialorder %v2454, -0.01
        %vm2662 = vcmp.lt.f32.partialorder %v2279, -0.01
        %vm2663 = vcmp.lt.f32.partialorder %v2457, -0.01
        %vm2664 = vcmp.lt.f32.partialorder %v2281, -0.01
        %vm2665 = vcmp.lt.f32.partialorder %v2459, -0.01
        %vm2666 = vcmp.lt.f32.partialorder %v2284, -0.01
        %vm2667 = vcmp.lt.f32.partialorder %v2462, -0.01
        %vm2668 = vcmp.lt.f32.partialorder %v2286, -0.01
        %vm2669 = vcmp.lt.f32.partialorder %v2464, -0.01
        %vm2670 = vcmp.lt.f32.partialorder %v2289, -0.01
        %vm2671 = vcmp.lt.f32.partialorder %v2467, -0.01
        %vm2672 = vcmp.lt.f32.partialorder %v2291, -0.01
        %vm2673 = vcmp.lt.f32.partialorder %v2469, -0.01
        %vm2674 = vcmp.lt.f32.partialorder %v2294, -0.01
        %vm2675 = vcmp.lt.f32.partialorder %v2472, -0.01
        %vm2676 = vcmp.lt.f32.partialorder %v2296, -0.01
        %vm2677 = vcmp.lt.f32.partialorder %v2474, -0.01
        %vm2678 = vcmp.lt.f32.partialorder %v2299, -0.01
        %vm2679 = vcmp.lt.f32.partialorder %v2477, -0.01
        %vm2680 = vcmp.lt.f32.partialorder %v2301, -0.01
        %vm2681 = vcmp.lt.f32.partialorder %v2479, -0.01
        %vm2682 = vcmp.lt.f32.partialorder %v2304, -0.01
        %vm2683 = vcmp.lt.f32.partialorder %v2482, -0.01
        %vm2684 = vcmp.lt.f32.partialorder %v2306, -0.01
        %vm2685 = vcmp.lt.f32.partialorder %v2484, -0.01
        %vm2686 = vcmp.lt.f32.partialorder %v2309, -0.01
        %vm2687 = vcmp.lt.f32.partialorder %v2487, -0.01
        %vm2688 = vcmp.lt.f32.partialorder %v2311, -0.01
        %vm2689 = vcmp.lt.f32.partialorder %v2489, -0.01
        %vm2690 = vcmp.lt.f32.partialorder %v2314, -0.01
        %vm2691 = vcmp.lt.f32.partialorder %v2492, -0.01
        %vm2692 = vcmp.lt.f32.partialorder %v2316, -0.01
        %vm2693 = vcmp.lt.f32.partialorder %v2494, -0.01
        %vm2694 = vcmp.lt.f32.partialorder %v2319, -0.01
        %vm2695 = vcmp.lt.f32.partialorder %v2497, -0.01
        %vm2696 = vcmp.lt.f32.partialorder %v2321, -0.01
        %vm2697 = vcmp.lt.f32.partialorder %v2499, -0.01
        %vm2698 = vcmp.lt.f32.partialorder %v2324, -0.01
        %vm2699 = vcmp.lt.f32.partialorder %v2502, -0.01
        %vm2700 = vcmp.lt.f32.partialorder %v2326, -0.01
        %vm2701 = vcmp.lt.f32.partialorder %v2504, -0.01
        %vm2702 = vcmp.lt.f32.partialorder %v2329, -0.01
        %vm2703 = vcmp.lt.f32.partialorder %v2507, -0.01
        %vm2704 = vcmp.lt.f32.partialorder %v2331, -0.01
        %vm2705 = vcmp.lt.f32.partialorder %v2509, -0.01
        %vm2706 = vcmp.lt.f32.partialorder %v2334, -0.01
        %vm2707 = vcmp.lt.f32.partialorder %v2512, -0.01
        %vm2708 = vcmp.lt.f32.partialorder %v2336, -0.01
        %vm2709 = vcmp.lt.f32.partialorder %v2514, -0.01
        %vm2710 = vcmp.lt.f32.partialorder %v2339, -0.01
        %vm2711 = vcmp.lt.f32.partialorder %v2517, -0.01
        %vm2712 = vcmp.lt.f32.partialorder %v2341, -0.01
        %vm2713 = vcmp.lt.f32.partialorder %v2519, -0.01
        %vm2714 = vcmp.lt.f32.partialorder %v2344, -0.01
        %vm2715 = vcmp.lt.f32.partialorder %v2522, -0.01
        %vm2716 = vcmp.lt.f32.partialorder %v2346, -0.01
        %vm2717 = vcmp.lt.f32.partialorder %v2524, -0.01
        %v2718 = vadd.f32 %v2269, 0.01
        %v2719 = vadd.f32 %v2447, 0.01
        %v2720 = vadd.f32 %v2271, 0.01
        %v2721 = vadd.f32 %v2449, 0.01
        %v2722 = vadd.f32 %v2274, 0.01
        %v2723 = vadd.f32 %v2452, 0.01
        %v2724 = vadd.f32 %v2276, 0.01
        %v2725 = vadd.f32 %v2454, 0.01
        %v2726 = vadd.f32 %v2279, 0.01
        %v2727 = vadd.f32 %v2457, 0.01
        %v2728 = vadd.f32 %v2281, 0.01
        %v2729 = vadd.f32 %v2459, 0.01
        %v2730 = vadd.f32 %v2284, 0.01
        %v2731 = vadd.f32 %v2462, 0.01
        %v2732 = vadd.f32 %v2286, 0.01
        %v2733 = vadd.f32 %v2464, 0.01
        %v2734 = vadd.f32 %v2289, 0.01
        %v2735 = vadd.f32 %v2467, 0.01
        %v2736 = vadd.f32 %v2291, 0.01
        %v2737 = vadd.f32 %v2469, 0.01
        %v2738 = vadd.f32 %v2294, 0.01
        %v2739 = vadd.f32 %v2472, 0.01
        %v2740 = vadd.f32 %v2296, 0.01
        %v2741 = vadd.f32 %v2474, 0.01
        %v2742 = vadd.f32 %v2299, 0.01
        %v2743 = vadd.f32 %v2477, 0.01
        %v2744 = vadd.f32 %v2301, 0.01
        %v2745 = vadd.f32 %v2479, 0.01
        %v2746 = vadd.f32 %v2304, 0.01
        %v2747 = vadd.f32 %v2482, 0.01
        %v2748 = vadd.f32 %v2306, 0.01
        %v2749 = vadd.f32 %v2484, 0.01
        %v2750 = vadd.f32 %v2309, 0.01
        %v2751 = vadd.f32 %v2487, 0.01
        %v2752 = vadd.f32 %v2311, 0.01
        %v2753 = vadd.f32 %v2489, 0.01
        %v2754 = vadd.f32 %v2314, 0.01
        %v2755 = vadd.f32 %v2492, 0.01
        %v2756 = vadd.f32 %v2316, 0.01
        %v2757 = vadd.f32 %v2494, 0.01
        %v2758 = vadd.f32 %v2319, 0.01
        %v2759 = vadd.f32 %v2497, 0.01
        %v2760 = vadd.f32 %v2321, 0.01
        %v2761 = vadd.f32 %v2499, 0.01
        %v2762 = vadd.f32 %v2324, 0.01
        %v2763 = vadd.f32 %v2502, 0.01
        %v2764 = vadd.f32 %v2326, 0.01
        %v2765 = vadd.f32 %v2504, 0.01
        %v2766 = vadd.f32 %v2329, 0.01
        %v2767 = vadd.f32 %v2507, 0.01
        %v2768 = vadd.f32 %v2331, 0.01
        %v2769 = vadd.f32 %v2509, 0.01
        %v2770 = vadd.f32 %v2334, 0.01
        %v2771 = vadd.f32 %v2512, 0.01
        %v2772 = vadd.f32 %v2336, 0.01
        %v2773 = vadd.f32 %v2514, 0.01
        %v2774 = vadd.f32 %v2339, 0.01
        %v2775 = vadd.f32 %v2517, 0.01
        %v2776 = vadd.f32 %v2341, 0.01
        %v2777 = vadd.f32 %v2519, 0.01
        %v2778 = vadd.f32 %v2344, 0.01
        %v2779 = vadd.f32 %v2522, 0.01
        %v2780 = vadd.f32 %v2346, 0.01
        %v2781 = vadd.f32 %v2524, 0.01
        %v2782 = vsel %vm2654, %v2718, 0.0
        %v2783 = vsel %vm2655, %v2719, 0.0
        %v2784 = vsel %vm2656, %v2720, 0.0
        %v2785 = vsel %vm2657, %v2721, 0.0
        %v2786 = vsel %vm2658, %v2722, 0.0
        %v2787 = vsel %vm2659, %v2723, 0.0
        %v2788 = vsel %vm2660, %v2724, 0.0
        %v2789 = vsel %vm2661, %v2725, 0.0
        %v2790 = vsel %vm2662, %v2726, 0.0
        %v2791 = vsel %vm2663, %v2727, 0.0
        %v2792 = vsel %vm2664, %v2728, 0.0
        %v2793 = vsel %vm2665, %v2729, 0.0
        %v2794 = vsel %vm2666, %v2730, 0.0
        %v2795 = vsel %vm2667, %v2731, 0.0
        %v2796 = vsel %vm2668, %v2732, 0.0
        %v2797 = vsel %vm2669, %v2733, 0.0
        %v2798 = vsel %vm2670, %v2734, 0.0
        %v2799 = vsel %vm2671, %v2735, 0.0
        %v2800 = vsel %vm2672, %v2736, 0.0
        %v2801 = vsel %vm2673, %v2737, 0.0
        %v2802 = vsel %vm2674, %v2738, 0.0
        %v2803 = vsel %vm2675, %v2739, 0.0
        %v2804 = vsel %vm2676, %v2740, 0.0
        %v2805 = vsel %vm2677, %v2741, 0.0
        %v2806 = vsel %vm2678, %v2742, 0.0
        %v2807 = vsel %vm2679, %v2743, 0.0
        %v2808 = vsel %vm2680, %v2744, 0.0
        %v2809 = vsel %vm2681, %v2745, 0.0
        %v2810 = vsel %vm2682, %v2746, 0.0
        %v2811 = vsel %vm2683, %v2747, 0.0
        %v2812 = vsel %vm2684, %v2748, 0.0
        %v2813 = vsel %vm2685, %v2749, 0.0
        %v2814 = vsel %vm2686, %v2750, 0.0
        %v2815 = vsel %vm2687, %v2751, 0.0
        %v2816 = vsel %vm2688, %v2752, 0.0
        %v2817 = vsel %vm2689, %v2753, 0.0
        %v2818 = vsel %vm2690, %v2754, 0.0
        %v2819 = vsel %vm2691, %v2755, 0.0
        %v2820 = vsel %vm2692, %v2756, 0.0
        %v2821 = vsel %vm2693, %v2757, 0.0
        %v2822 = vsel %vm2694, %v2758, 0.0
        %v2823 = vsel %vm2695, %v2759, 0.0
        %v2824 = vsel %vm2696, %v2760, 0.0
        %v2825 = vsel %vm2697, %v2761, 0.0
        %v2826 = vsel %vm2698, %v2762, 0.0
        %v2827 = vsel %vm2699, %v2763, 0.0
        %v2828 = vsel %vm2700, %v2764, 0.0
        %v2829 = vsel %vm2701, %v2765, 0.0
        %v2830 = vsel %vm2702, %v2766, 0.0
        %v2831 = vsel %vm2703, %v2767, 0.0
        %v2832 = vsel %vm2704, %v2768, 0.0
        %v2833 = vsel %vm2705, %v2769, 0.0
        %v2834 = vsel %vm2706, %v2770, 0.0
        %v2835 = vsel %vm2707, %v2771, 0.0
        %v2836 = vsel %vm2708, %v2772, 0.0
        %v2837 = vsel %vm2709, %v2773, 0.0
        %v2838 = vsel %vm2710, %v2774, 0.0
        %v2839 = vsel %vm2711, %v2775, 0.0
        %v2840 = vsel %vm2712, %v2776, 0.0
        %v2841 = vsel %vm2713, %v2777, 0.0
        %v2842 = vsel %vm2714, %v2778, 0.0
        %v2843 = vsel %vm2715, %v2779, 0.0
        %v2844 = vsel %vm2716, %v2780, 0.0
        %v2845 = vsel %vm2717, %v2781, 0.0
        %v2846 = vsel %vm2526, %v2590, %v2782
        %v2847 = vsel %vm2527, %v2591, %v2783
        %v2848 = vsel %vm2528, %v2592, %v2784
        %v2849 = vsel %vm2529, %v2593, %v2785
        %v2850 = vsel %vm2530, %v2594, %v2786
        %v2851 = vsel %vm2531, %v2595, %v2787
        %v2852 = vsel %vm2532, %v2596, %v2788
        %v2853 = vsel %vm2533, %v2597, %v2789
        %v2854 = vsel %vm2534, %v2598, %v2790
        %v2855 = vsel %vm2535, %v2599, %v2791
        %v2856 = vsel %vm2536, %v2600, %v2792
        %v2857 = vsel %vm2537, %v2601, %v2793
        %v2858 = vsel %vm2538, %v2602, %v2794
        %v2859 = vsel %vm2539, %v2603, %v2795
        %v2860 = vsel %vm2540, %v2604, %v2796
        %v2861 = vsel %vm2541, %v2605, %v2797
        %v2862 = vsel %vm2542, %v2606, %v2798
        %v2863 = vsel %vm2543, %v2607, %v2799
        %v2864 = vsel %vm2544, %v2608, %v2800
        %v2865 = vsel %vm2545, %v2609, %v2801
        %v2866 = vsel %vm2546, %v2610, %v2802
        %v2867 = vsel %vm2547, %v2611, %v2803
        %v2868 = vsel %vm2548, %v2612, %v2804
        %v2869 = vsel %vm2549, %v2613, %v2805
        %v2870 = vsel %vm2550, %v2614, %v2806
        %v2871 = vsel %vm2551, %v2615, %v2807
        %v2872 = vsel %vm2552, %v2616, %v2808
        %v2873 = vsel %vm2553, %v2617, %v2809
        %v2874 = vsel %vm2554, %v2618, %v2810
        %v2875 = vsel %vm2555, %v2619, %v2811
        %v2876 = vsel %vm2556, %v2620, %v2812
        %v2877 = vsel %vm2557, %v2621, %v2813
        %v2878 = vsel %vm2558, %v2622, %v2814
        %v2879 = vsel %vm2559, %v2623, %v2815
        %v2880 = vsel %vm2560, %v2624, %v2816
        %v2881 = vsel %vm2561, %v2625, %v2817
        %v2882 = vsel %vm2562, %v2626, %v2818
        %v2883 = vsel %vm2563, %v2627, %v2819
        %v2884 = vsel %vm2564, %v2628, %v2820
        %v2885 = vsel %vm2565, %v2629, %v2821
        %v2886 = vsel %vm2566, %v2630, %v2822
        %v2887 = vsel %vm2567, %v2631, %v2823
        %v2888 = vsel %vm2568, %v2632, %v2824
        %v2889 = vsel %vm2569, %v2633, %v2825
        %v2890 = vsel %vm2570, %v2634, %v2826
        %v2891 = vsel %vm2571, %v2635, %v2827
        %v2892 = vsel %vm2572, %v2636, %v2828
        %v2893 = vsel %vm2573, %v2637, %v2829
        %v2894 = vsel %vm2574, %v2638, %v2830
        %v2895 = vsel %vm2575, %v2639, %v2831
        %v2896 = vsel %vm2576, %v2640, %v2832
        %v2897 = vsel %vm2577, %v2641, %v2833
        %v2898 = vsel %vm2578, %v2642, %v2834
        %v2899 = vsel %vm2579, %v2643, %v2835
        %v2900 = vsel %vm2580, %v2644, %v2836
        %v2901 = vsel %vm2581, %v2645, %v2837
        %v2902 = vsel %vm2582, %v2646, %v2838
        %v2903 = vsel %vm2583, %v2647, %v2839
        %v2904 = vsel %vm2584, %v2648, %v2840
        %v2905 = vsel %vm2585, %v2649, %v2841
        %v2906 = vsel %vm2586, %v2650, %v2842
        %v2907 = vsel %vm2587, %v2651, %v2843
        %v2908 = vsel %vm2588, %v2652, %v2844
        %v2909 = vsel %vm2589, %v2653, %v2845
        %v2910 = vpack.c.bf16 %v2848, %v2846
        %v2911 = vpack.c.bf16 %v2849, %v2847
        %v2912 = vpack.c.bf16 %v2852, %v2850
        %v2913 = vpack.c.bf16 %v2853, %v2851
        %v2914 = vpack.c.bf16 %v2856, %v2854
        %v2915 = vpack.c.bf16 %v2857, %v2855
        %v2916 = vpack.c.bf16 %v2860, %v2858
        %v2917 = vpack.c.bf16 %v2861, %v2859
        %v2918 = vpack.c.bf16 %v2864, %v2862
        %v2919 = vpack.c.bf16 %v2865, %v2863
        %v2920 = vpack.c.bf16 %v2868, %v2866
        %v2921 = vpack.c.bf16 %v2869, %v2867
        %v2922 = vpack.c.bf16 %v2872, %v2870
        %v2923 = vpack.c.bf16 %v2873, %v2871
        %v2924 = vpack.c.bf16 %v2876, %v2874
        %v2925 = vpack.c.bf16 %v2877, %v2875
        %v2926 = vpack.c.bf16 %v2880, %v2878
        %v2927 = vpack.c.bf16 %v2881, %v2879
        %v2928 = vpack.c.bf16 %v2884, %v2882
        %v2929 = vpack.c.bf16 %v2885, %v2883
        %v2930 = vpack.c.bf16 %v2888, %v2886
        %v2931 = vpack.c.bf16 %v2889, %v2887
        %v2932 = vpack.c.bf16 %v2892, %v2890
        %v2933 = vpack.c.bf16 %v2893, %v2891
        %v2934 = vpack.c.bf16 %v2896, %v2894
        %v2935 = vpack.c.bf16 %v2897, %v2895
        %v2936 = vpack.c.bf16 %v2900, %v2898
        %v2937 = vpack.c.bf16 %v2901, %v2899
        %v2938 = vpack.c.bf16 %v2904, %v2902
        %v2939 = vpack.c.bf16 %v2905, %v2903
        %v2940 = vpack.c.bf16 %v2908, %v2906
        %v2941 = vpack.c.bf16 %v2909, %v2907
        %v2942 = vld [vmem:[%s6] sm:$0xf]
        %v2943 = vld [vmem:[%s6 + $0x4] sm:$0xf]
        %v2944 = vld [vmem:[%s6 + $0x8] sm:$0xf]
        %v2945 = vld [vmem:[%s6 + $0xc] sm:$0xf]
        %v2946 = vld [vmem:[%s6 + $0x10] sm:$0xf]
        %v2947 = vld [vmem:[%s6 + $0x14] sm:$0xf]
        %v2948 = vld [vmem:[%s6 + $0x18] sm:$0xf]
        %v2949 = vld [vmem:[%s6 + $0x1c] sm:$0xf]
        %v2950 = vld [vmem:[%s6 + $0x20] sm:$0xf]
        %v2951 = vld [vmem:[%s6 + $0x24] sm:$0xf]
        %v2952 = vld [vmem:[%s6 + $0x28] sm:$0xf]
        %v2953 = vld [vmem:[%s6 + $0x2c] sm:$0xf]
        %v2954 = vld [vmem:[%s6 + $0x30] sm:$0xf]
        %v2955 = vld [vmem:[%s6 + $0x34] sm:$0xf]
        %v2956 = vld [vmem:[%s6 + $0x38] sm:$0xf]
        %v2957 = vld [vmem:[%s6 + $0x3c] sm:$0xf]
        %v2958 = vld [vmem:[%s6 + $0x40] sm:$0xf]
        %v2959 = vld [vmem:[%s6 + $0x44] sm:$0xf]
        %v2960 = vld [vmem:[%s6 + $0x48] sm:$0xf]
        %v2961 = vld [vmem:[%s6 + $0x4c] sm:$0xf]
        %v2962 = vld [vmem:[%s6 + $0x50] sm:$0xf]
        %v2963 = vld [vmem:[%s6 + $0x54] sm:$0xf]
        %v2964 = vld [vmem:[%s6 + $0x58] sm:$0xf]
        %v2965 = vld [vmem:[%s6 + $0x5c] sm:$0xf]
        %v2966 = vld [vmem:[%s6 + $0x60] sm:$0xf]
        %v2967 = vld [vmem:[%s6 + $0x64] sm:$0xf]
        %v2968 = vld [vmem:[%s6 + $0x68] sm:$0xf]
        %v2969 = vld [vmem:[%s6 + $0x6c] sm:$0xf]
        %v2970 = vld [vmem:[%s6 + $0x70] sm:$0xf]
        %v2971 = vld [vmem:[%s6 + $0x74] sm:$0xf]
        %v2972 = vld [vmem:[%s6 + $0x78] sm:$0xf]
        %v2973 = vld [vmem:[%s6 + $0x7c] sm:$0xf]
        %v3006 = vunpack.c.l.b16 %v2942
        %v3007 = vunpack.c.l.b16 %v2943
        %v3008 = vunpack.c.l.b16 %v2944
        %v3009 = vunpack.c.l.b16 %v2945
        %v3010 = vunpack.c.l.b16 %v2946
        %v3011 = vunpack.c.l.b16 %v2947
        %v3012 = vunpack.c.l.b16 %v2948
        %v3013 = vunpack.c.l.b16 %v2949
        %v3014 = vunpack.c.l.b16 %v2950
        %v3015 = vunpack.c.l.b16 %v2951
        %v3016 = vunpack.c.l.b16 %v2952
        %v3017 = vunpack.c.l.b16 %v2953
        %v3018 = vunpack.c.l.b16 %v2954
        %v3019 = vunpack.c.l.b16 %v2955
        %v3020 = vunpack.c.l.b16 %v2956
        %v3021 = vunpack.c.l.b16 %v2957
        %v3022 = vunpack.c.l.b16 %v2958
        %v3023 = vunpack.c.l.b16 %v2959
        %v3024 = vunpack.c.l.b16 %v2960
        %v3025 = vunpack.c.l.b16 %v2961
        %v3026 = vunpack.c.l.b16 %v2962
        %v3027 = vunpack.c.l.b16 %v2963
        %v3028 = vunpack.c.l.b16 %v2964
        %v3029 = vunpack.c.l.b16 %v2965
        %v3030 = vunpack.c.l.b16 %v2966
        %v3031 = vunpack.c.l.b16 %v2967
        %v3032 = vunpack.c.l.b16 %v2968
        %v3033 = vunpack.c.l.b16 %v2969
        %v3034 = vunpack.c.l.b16 %v2970
        %v3035 = vunpack.c.l.b16 %v2971
        %v3036 = vunpack.c.l.b16 %v2972
        %v3037 = vunpack.c.l.b16 %v2973
        %v3038 = vpack.c.b16 %v3007, %v3006
        %v3039 = vpack.c.b16 %v3009, %v3008
        %v3040 = vpack.c.b16 %v3011, %v3010
        %v3041 = vpack.c.b16 %v3013, %v3012
        %v3042 = vpack.c.b16 %v3015, %v3014
        %v3043 = vpack.c.b16 %v3017, %v3016
        %v3044 = vpack.c.b16 %v3019, %v3018
        %v3045 = vpack.c.b16 %v3021, %v3020
        %v3046 = vpack.c.b16 %v3023, %v3022
        %v3047 = vpack.c.b16 %v3025, %v3024
        %v3048 = vpack.c.b16 %v3027, %v3026
        %v3049 = vpack.c.b16 %v3029, %v3028
        %v3050 = vpack.c.b16 %v3031, %v3030
        %v3051 = vpack.c.b16 %v3033, %v3032
        %v3052 = vpack.c.b16 %v3035, %v3034
        %v3053 = vpack.c.b16 %v3037, %v3036
        %3070 = vmatpush.bf16.msra.mxu0 %v3045
        %3071 = vmatpush.bf16.msra.mxu0 %v3044
        %3072 = vmatpush.bf16.msra.mxu0 %v3043
        %3073 = vmatpush.bf16.msra.mxu0 %v3042
        %3074 = vmatpush.bf16.msra.mxu0 %v3041
        %3075 = vmatpush.bf16.msra.mxu0 %v3040
        %3076 = vmatpush.bf16.msra.mxu0 %v3039
        %3077 = vmatpush.bf16.msra.mxu0 %v3038
        %3078 = vmatmul.bf16.gmra.mxu0 %v2910
        %v3079 = vpop.f32.mrf.mxu0
        %v3080 = vadd.f32 0.0, %v3079
        %v3081 = vpop.f32.mrf.mxu0
        %v3082 = vadd.f32 0.0, %v3081
        %3083 = vmatmul.bf16.gmra.mxu0 %v2912
        %v3084 = vpop.f32.mrf.mxu0
        %v3085 = vadd.f32 0.0, %v3084
        %v3086 = vpop.f32.mrf.mxu0
        %v3087 = vadd.f32 0.0, %v3086
        %3088 = vmatmul.bf16.gmra.mxu0 %v2914
        %v3089 = vpop.f32.mrf.mxu0
        %v3090 = vadd.f32 0.0, %v3089
        %v3091 = vpop.f32.mrf.mxu0
        %v3092 = vadd.f32 0.0, %v3091
        %3093 = vmatmul.bf16.gmra.mxu0 %v2916
        %v3094 = vpop.f32.mrf.mxu0
        %v3095 = vadd.f32 0.0, %v3094
        %v3096 = vpop.f32.mrf.mxu0
        %v3097 = vadd.f32 0.0, %v3096
        %3098 = vmatmul.bf16.gmra.mxu0 %v2918
        %v3099 = vpop.f32.mrf.mxu0
        %v3100 = vadd.f32 0.0, %v3099
        %v3101 = vpop.f32.mrf.mxu0
        %v3102 = vadd.f32 0.0, %v3101
        %3103 = vmatmul.bf16.gmra.mxu0 %v2920
        %v3104 = vpop.f32.mrf.mxu0
        %v3105 = vadd.f32 0.0, %v3104
        %v3106 = vpop.f32.mrf.mxu0
        %v3107 = vadd.f32 0.0, %v3106
        %3108 = vmatmul.bf16.gmra.mxu0 %v2922
        %v3109 = vpop.f32.mrf.mxu0
        %v3110 = vadd.f32 0.0, %v3109
        %v3111 = vpop.f32.mrf.mxu0
        %v3112 = vadd.f32 0.0, %v3111
        %3113 = vmatmul.bf16.gmra.mxu0 %v2924
        %v3114 = vpop.f32.mrf.mxu0
        %v3115 = vadd.f32 0.0, %v3114
        %v3116 = vpop.f32.mrf.mxu0
        %v3117 = vadd.f32 0.0, %v3116
        %3118 = vmatmul.bf16.gmra.mxu0 %v2926
        %v3119 = vpop.f32.mrf.mxu0
        %v3120 = vadd.f32 0.0, %v3119
        %v3121 = vpop.f32.mrf.mxu0
        %v3122 = vadd.f32 0.0, %v3121
        %3123 = vmatmul.bf16.gmra.mxu0 %v2928
        %v3124 = vpop.f32.mrf.mxu0
        %v3125 = vadd.f32 0.0, %v3124
        %v3126 = vpop.f32.mrf.mxu0
        %v3127 = vadd.f32 0.0, %v3126
        %3128 = vmatmul.bf16.gmra.mxu0 %v2930
        %v3129 = vpop.f32.mrf.mxu0
        %v3130 = vadd.f32 0.0, %v3129
        %v3131 = vpop.f32.mrf.mxu0
        %v3132 = vadd.f32 0.0, %v3131
        %3133 = vmatmul.bf16.gmra.mxu0 %v2932
        %v3134 = vpop.f32.mrf.mxu0
        %v3135 = vadd.f32 0.0, %v3134
        %v3136 = vpop.f32.mrf.mxu0
        %v3137 = vadd.f32 0.0, %v3136
        %3138 = vmatmul.bf16.gmra.mxu0 %v2934
        %v3139 = vpop.f32.mrf.mxu0
        %v3140 = vadd.f32 0.0, %v3139
        %v3141 = vpop.f32.mrf.mxu0
        %v3142 = vadd.f32 0.0, %v3141
        %3143 = vmatmul.bf16.gmra.mxu0 %v2936
        %v3144 = vpop.f32.mrf.mxu0
        %v3145 = vadd.f32 0.0, %v3144
        %v3146 = vpop.f32.mrf.mxu0
        %v3147 = vadd.f32 0.0, %v3146
        %3148 = vmatmul.bf16.gmra.mxu0 %v2938
        %v3149 = vpop.f32.mrf.mxu0
        %v3150 = vadd.f32 0.0, %v3149
        %v3151 = vpop.f32.mrf.mxu0
        %v3152 = vadd.f32 0.0, %v3151
        %3153 = vmatmul.bf16.gmra.mxu0 %v2940
        %v3154 = vpop.f32.mrf.mxu0
        %v3155 = vadd.f32 0.0, %v3154
        %v3156 = vpop.f32.mrf.mxu0
        %v3157 = vadd.f32 0.0, %v3156
        %3158 = vdwg.mxu0
        %3159 = vmatpush.bf16.msra.mxu0 %v3053
        %3160 = vmatpush.bf16.msra.mxu0 %v3052
        %3161 = vmatpush.bf16.msra.mxu0 %v3051
        %3162 = vmatpush.bf16.msra.mxu0 %v3050
        %3163 = vmatpush.bf16.msra.mxu0 %v3049
        %3164 = vmatpush.bf16.msra.mxu0 %v3048
        %3165 = vmatpush.bf16.msra.mxu0 %v3047
        %3166 = vmatpush.bf16.msra.mxu0 %v3046
        %3167 = vmatmul.bf16.gmra.mxu0 %v2911
        %v3168 = vpop.f32.mrf.mxu0
        %v3169 = vadd.f32 %v3080, %v3168
        %v3170 = vpop.f32.mrf.mxu0
        %v3171 = vadd.f32 %v3082, %v3170
        %3172 = vmatmul.bf16.gmra.mxu0 %v2913
        %v3173 = vpop.f32.mrf.mxu0
        %v3174 = vadd.f32 %v3085, %v3173
        %v3175 = vpop.f32.mrf.mxu0
        %v3176 = vadd.f32 %v3087, %v3175
        %3177 = vmatmul.bf16.gmra.mxu0 %v2915
        %v3178 = vpop.f32.mrf.mxu0
        %v3179 = vadd.f32 %v3090, %v3178
        %v3180 = vpop.f32.mrf.mxu0
        %v3181 = vadd.f32 %v3092, %v3180
        %3182 = vmatmul.bf16.gmra.mxu0 %v2917
        %v3183 = vpop.f32.mrf.mxu0
        %v3184 = vadd.f32 %v3095, %v3183
        %v3185 = vpop.f32.mrf.mxu0
        %v3186 = vadd.f32 %v3097, %v3185
        %3187 = vmatmul.bf16.gmra.mxu0 %v2919
        %v3188 = vpop.f32.mrf.mxu0
        %v3189 = vadd.f32 %v3100, %v3188
        %v3190 = vpop.f32.mrf.mxu0
        %v3191 = vadd.f32 %v3102, %v3190
        %3192 = vmatmul.bf16.gmra.mxu0 %v2921
        %v3193 = vpop.f32.mrf.mxu0
        %v3194 = vadd.f32 %v3105, %v3193
        %v3195 = vpop.f32.mrf.mxu0
        %v3196 = vadd.f32 %v3107, %v3195
        %3197 = vmatmul.bf16.gmra.mxu0 %v2923
        %v3198 = vpop.f32.mrf.mxu0
        %v3199 = vadd.f32 %v3110, %v3198
        %v3200 = vpop.f32.mrf.mxu0
        %v3201 = vadd.f32 %v3112, %v3200
        %3202 = vmatmul.bf16.gmra.mxu0 %v2925
        %v3203 = vpop.f32.mrf.mxu0
        %v3204 = vadd.f32 %v3115, %v3203
        %v3205 = vpop.f32.mrf.mxu0
        %v3206 = vadd.f32 %v3117, %v3205
        %3207 = vmatmul.bf16.gmra.mxu0 %v2927
        %v3208 = vpop.f32.mrf.mxu0
        %v3209 = vadd.f32 %v3120, %v3208
        %v3210 = vpop.f32.mrf.mxu0
        %v3211 = vadd.f32 %v3122, %v3210
        %3212 = vmatmul.bf16.gmra.mxu0 %v2929
        %v3213 = vpop.f32.mrf.mxu0
        %v3214 = vadd.f32 %v3125, %v3213
        %v3215 = vpop.f32.mrf.mxu0
        %v3216 = vadd.f32 %v3127, %v3215
        %3217 = vmatmul.bf16.gmra.mxu0 %v2931
        %v3218 = vpop.f32.mrf.mxu0
        %v3219 = vadd.f32 %v3130, %v3218
        %v3220 = vpop.f32.mrf.mxu0
        %v3221 = vadd.f32 %v3132, %v3220
        %3222 = vmatmul.bf16.gmra.mxu0 %v2933
        %v3223 = vpop.f32.mrf.mxu0
        %v3224 = vadd.f32 %v3135, %v3223
        %v3225 = vpop.f32.mrf.mxu0
        %v3226 = vadd.f32 %v3137, %v3225
        %3227 = vmatmul.bf16.gmra.mxu0 %v2935
        %v3228 = vpop.f32.mrf.mxu0
        %v3229 = vadd.f32 %v3140, %v3228
        %v3230 = vpop.f32.mrf.mxu0
        %v3231 = vadd.f32 %v3142, %v3230
        %3232 = vmatmul.bf16.gmra.mxu0 %v2937
        %v3233 = vpop.f32.mrf.mxu0
        %v3234 = vadd.f32 %v3145, %v3233
        %v3235 = vpop.f32.mrf.mxu0
        %v3236 = vadd.f32 %v3147, %v3235
        %3237 = vmatmul.bf16.gmra.mxu0 %v2939
        %v3238 = vpop.f32.mrf.mxu0
        %v3239 = vadd.f32 %v3150, %v3238
        %v3240 = vpop.f32.mrf.mxu0
        %v3241 = vadd.f32 %v3152, %v3240
        %3242 = vmatmul.bf16.gmra.mxu0 %v2941
        %v3243 = vpop.f32.mrf.mxu0
        %v3244 = vadd.f32 %v3155, %v3243
        %v3245 = vpop.f32.mrf.mxu0
        %v3246 = vadd.f32 %v3157, %v3245
        %3247 = vdwg.mxu0
        %v3248 = vpack.c.bf16 %v3171, %v3169
        %v3249 = vpack.c.bf16 %v3176, %v3174
        %v3250 = vpack.c.bf16 %v3181, %v3179
        %v3251 = vpack.c.bf16 %v3186, %v3184
        %v3252 = vpack.c.bf16 %v3191, %v3189
        %v3253 = vpack.c.bf16 %v3196, %v3194
        %v3254 = vpack.c.bf16 %v3201, %v3199
        %v3255 = vpack.c.bf16 %v3206, %v3204
        %v3256 = vpack.c.bf16 %v3211, %v3209
        %v3257 = vpack.c.bf16 %v3216, %v3214
        %v3258 = vpack.c.bf16 %v3221, %v3219
        %v3259 = vpack.c.bf16 %v3226, %v3224
        %v3260 = vpack.c.bf16 %v3231, %v3229
        %v3261 = vpack.c.bf16 %v3236, %v3234
        %v3262 = vpack.c.bf16 %v3241, %v3239
        %v3263 = vpack.c.bf16 %v3246, %v3244
        %v3264 = vld [vmem:[%s7] sm:$0xf]
        %v3265 = vld [vmem:[%s7 + $0x4] sm:$0xf]
        %v3266 = vld [vmem:[%s7 + $0x8] sm:$0xf]
        %v3267 = vld [vmem:[%s7 + $0xc] sm:$0xf]
        %v3268 = vld [vmem:[%s7 + $0x10] sm:$0xf]
        %v3269 = vld [vmem:[%s7 + $0x14] sm:$0xf]
        %v3270 = vld [vmem:[%s7 + $0x18] sm:$0xf]
        %v3271 = vld [vmem:[%s7 + $0x1c] sm:$0xf]
        %v3272 = vld [vmem:[%s7 + $0x20] sm:$0xf]
        %v3273 = vld [vmem:[%s7 + $0x24] sm:$0xf]
        %v3274 = vld [vmem:[%s7 + $0x28] sm:$0xf]
        %v3275 = vld [vmem:[%s7 + $0x2c] sm:$0xf]
        %v3276 = vld [vmem:[%s7 + $0x30] sm:$0xf]
        %v3277 = vld [vmem:[%s7 + $0x34] sm:$0xf]
        %v3278 = vld [vmem:[%s7 + $0x38] sm:$0xf]
        %v3279 = vld [vmem:[%s7 + $0x3c] sm:$0xf]
        %v3280 = vld [vmem:[%s7 + $0x40] sm:$0xf]
        %v3281 = vld [vmem:[%s7 + $0x44] sm:$0xf]
        %v3282 = vld [vmem:[%s7 + $0x48] sm:$0xf]
        %v3283 = vld [vmem:[%s7 + $0x4c] sm:$0xf]
        %v3284 = vld [vmem:[%s7 + $0x50] sm:$0xf]
        %v3285 = vld [vmem:[%s7 + $0x54] sm:$0xf]
        %v3286 = vld [vmem:[%s7 + $0x58] sm:$0xf]
        %v3287 = vld [vmem:[%s7 + $0x5c] sm:$0xf]
        %v3288 = vld [vmem:[%s7 + $0x60] sm:$0xf]
        %v3289 = vld [vmem:[%s7 + $0x64] sm:$0xf]
        %v3290 = vld [vmem:[%s7 + $0x68] sm:$0xf]
        %v3291 = vld [vmem:[%s7 + $0x6c] sm:$0xf]
        %v3292 = vld [vmem:[%s7 + $0x70] sm:$0xf]
        %v3293 = vld [vmem:[%s7 + $0x74] sm:$0xf]
        %v3294 = vld [vmem:[%s7 + $0x78] sm:$0xf]
        %v3295 = vld [vmem:[%s7 + $0x7c] sm:$0xf]
        %v3328 = vunpack.c.l.b16 %v3264
        %v3329 = vunpack.c.l.b16 %v3265
        %v3330 = vunpack.c.l.b16 %v3266
        %v3331 = vunpack.c.l.b16 %v3267
        %v3332 = vunpack.c.l.b16 %v3268
        %v3333 = vunpack.c.l.b16 %v3269
        %v3334 = vunpack.c.l.b16 %v3270
        %v3335 = vunpack.c.l.b16 %v3271
        %v3336 = vunpack.c.l.b16 %v3272
        %v3337 = vunpack.c.l.b16 %v3273
        %v3338 = vunpack.c.l.b16 %v3274
        %v3339 = vunpack.c.l.b16 %v3275
        %v3340 = vunpack.c.l.b16 %v3276
        %v3341 = vunpack.c.l.b16 %v3277
        %v3342 = vunpack.c.l.b16 %v3278
        %v3343 = vunpack.c.l.b16 %v3279
        %v3344 = vunpack.c.l.b16 %v3280
        %v3345 = vunpack.c.l.b16 %v3281
        %v3346 = vunpack.c.l.b16 %v3282
        %v3347 = vunpack.c.l.b16 %v3283
        %v3348 = vunpack.c.l.b16 %v3284
        %v3349 = vunpack.c.l.b16 %v3285
        %v3350 = vunpack.c.l.b16 %v3286
        %v3351 = vunpack.c.l.b16 %v3287
        %v3352 = vunpack.c.l.b16 %v3288
        %v3353 = vunpack.c.l.b16 %v3289
        %v3354 = vunpack.c.l.b16 %v3290
        %v3355 = vunpack.c.l.b16 %v3291
        %v3356 = vunpack.c.l.b16 %v3292
        %v3357 = vunpack.c.l.b16 %v3293
        %v3358 = vunpack.c.l.b16 %v3294
        %v3359 = vunpack.c.l.b16 %v3295
        %v3360 = vpack.c.b16 %v3329, %v3328
        %v3361 = vpack.c.b16 %v3331, %v3330
        %v3362 = vpack.c.b16 %v3333, %v3332
        %v3363 = vpack.c.b16 %v3335, %v3334
        %v3364 = vpack.c.b16 %v3337, %v3336
        %v3365 = vpack.c.b16 %v3339, %v3338
        %v3366 = vpack.c.b16 %v3341, %v3340
        %v3367 = vpack.c.b16 %v3343, %v3342
        %v3368 = vpack.c.b16 %v3345, %v3344
        %v3369 = vpack.c.b16 %v3347, %v3346
        %v3370 = vpack.c.b16 %v3349, %v3348
        %v3371 = vpack.c.b16 %v3351, %v3350
        %v3372 = vpack.c.b16 %v3353, %v3352
        %v3373 = vpack.c.b16 %v3355, %v3354
        %v3374 = vpack.c.b16 %v3357, %v3356
        %v3375 = vpack.c.b16 %v3359, %v3358
        %3392 = vmatpush.bf16.msra.mxu0 %v3367
        %3393 = vmatpush.bf16.msra.mxu0 %v3366
        %3394 = vmatpush.bf16.msra.mxu0 %v3365
        %3395 = vmatpush.bf16.msra.mxu0 %v3364
        %3396 = vmatpush.bf16.msra.mxu0 %v3363
        %3397 = vmatpush.bf16.msra.mxu0 %v3362
        %3398 = vmatpush.bf16.msra.mxu0 %v3361
        %3399 = vmatpush.bf16.msra.mxu0 %v3360
        %3400 = vmatmul.bf16.gmra.mxu0 %v2910
        %v3401 = vpop.f32.mrf.mxu0
        %v3402 = vadd.f32 0.0, %v3401
        %v3403 = vpop.f32.mrf.mxu0
        %v3404 = vadd.f32 0.0, %v3403
        %3405 = vmatmul.bf16.gmra.mxu0 %v2912
        %v3406 = vpop.f32.mrf.mxu0
        %v3407 = vadd.f32 0.0, %v3406
        %v3408 = vpop.f32.mrf.mxu0
        %v3409 = vadd.f32 0.0, %v3408
        %3410 = vmatmul.bf16.gmra.mxu0 %v2914
        %v3411 = vpop.f32.mrf.mxu0
        %v3412 = vadd.f32 0.0, %v3411
        %v3413 = vpop.f32.mrf.mxu0
        %v3414 = vadd.f32 0.0, %v3413
        %3415 = vmatmul.bf16.gmra.mxu0 %v2916
        %v3416 = vpop.f32.mrf.mxu0
        %v3417 = vadd.f32 0.0, %v3416
        %v3418 = vpop.f32.mrf.mxu0
        %v3419 = vadd.f32 0.0, %v3418
        %3420 = vmatmul.bf16.gmra.mxu0 %v2918
        %v3421 = vpop.f32.mrf.mxu0
        %v3422 = vadd.f32 0.0, %v3421
        %v3423 = vpop.f32.mrf.mxu0
        %v3424 = vadd.f32 0.0, %v3423
        %3425 = vmatmul.bf16.gmra.mxu0 %v2920
        %v3426 = vpop.f32.mrf.mxu0
        %v3427 = vadd.f32 0.0, %v3426
        %v3428 = vpop.f32.mrf.mxu0
        %v3429 = vadd.f32 0.0, %v3428
        %3430 = vmatmul.bf16.gmra.mxu0 %v2922
        %v3431 = vpop.f32.mrf.mxu0
        %v3432 = vadd.f32 0.0, %v3431
        %v3433 = vpop.f32.mrf.mxu0
        %v3434 = vadd.f32 0.0, %v3433
        %3435 = vmatmul.bf16.gmra.mxu0 %v2924
        %v3436 = vpop.f32.mrf.mxu0
        %v3437 = vadd.f32 0.0, %v3436
        %v3438 = vpop.f32.mrf.mxu0
        %v3439 = vadd.f32 0.0, %v3438
        %3440 = vmatmul.bf16.gmra.mxu0 %v2926
        %v3441 = vpop.f32.mrf.mxu0
        %v3442 = vadd.f32 0.0, %v3441
        %v3443 = vpop.f32.mrf.mxu0
        %v3444 = vadd.f32 0.0, %v3443
        %3445 = vmatmul.bf16.gmra.mxu0 %v2928
        %v3446 = vpop.f32.mrf.mxu0
        %v3447 = vadd.f32 0.0, %v3446
        %v3448 = vpop.f32.mrf.mxu0
        %v3449 = vadd.f32 0.0, %v3448
        %3450 = vmatmul.bf16.gmra.mxu0 %v2930
        %v3451 = vpop.f32.mrf.mxu0
        %v3452 = vadd.f32 0.0, %v3451
        %v3453 = vpop.f32.mrf.mxu0
        %v3454 = vadd.f32 0.0, %v3453
        %3455 = vmatmul.bf16.gmra.mxu0 %v2932
        %v3456 = vpop.f32.mrf.mxu0
        %v3457 = vadd.f32 0.0, %v3456
        %v3458 = vpop.f32.mrf.mxu0
        %v3459 = vadd.f32 0.0, %v3458
        %3460 = vmatmul.bf16.gmra.mxu0 %v2934
        %v3461 = vpop.f32.mrf.mxu0
        %v3462 = vadd.f32 0.0, %v3461
        %v3463 = vpop.f32.mrf.mxu0
        %v3464 = vadd.f32 0.0, %v3463
        %3465 = vmatmul.bf16.gmra.mxu0 %v2936
        %v3466 = vpop.f32.mrf.mxu0
        %v3467 = vadd.f32 0.0, %v3466
        %v3468 = vpop.f32.mrf.mxu0
        %v3469 = vadd.f32 0.0, %v3468
        %3470 = vmatmul.bf16.gmra.mxu0 %v2938
        %v3471 = vpop.f32.mrf.mxu0
        %v3472 = vadd.f32 0.0, %v3471
        %v3473 = vpop.f32.mrf.mxu0
        %v3474 = vadd.f32 0.0, %v3473
        %3475 = vmatmul.bf16.gmra.mxu0 %v2940
        %v3476 = vpop.f32.mrf.mxu0
        %v3477 = vadd.f32 0.0, %v3476
        %v3478 = vpop.f32.mrf.mxu0
        %v3479 = vadd.f32 0.0, %v3478
        %3480 = vdwg.mxu0
        %3481 = vmatpush.bf16.msra.mxu0 %v3375
        %3482 = vmatpush.bf16.msra.mxu0 %v3374
        %3483 = vmatpush.bf16.msra.mxu0 %v3373
        %3484 = vmatpush.bf16.msra.mxu0 %v3372
        %3485 = vmatpush.bf16.msra.mxu0 %v3371
        %3486 = vmatpush.bf16.msra.mxu0 %v3370
        %3487 = vmatpush.bf16.msra.mxu0 %v3369
        %3488 = vmatpush.bf16.msra.mxu0 %v3368
        %3489 = vmatmul.bf16.gmra.mxu0 %v2911
        %v3490 = vpop.f32.mrf.mxu0
        %v3491 = vadd.f32 %v3402, %v3490
        %v3492 = vpop.f32.mrf.mxu0
        %v3493 = vadd.f32 %v3404, %v3492
        %3494 = vmatmul.bf16.gmra.mxu0 %v2913
        %v3495 = vpop.f32.mrf.mxu0
        %v3496 = vadd.f32 %v3407, %v3495
        %v3497 = vpop.f32.mrf.mxu0
        %v3498 = vadd.f32 %v3409, %v3497
        %3499 = vmatmul.bf16.gmra.mxu0 %v2915
        %v3500 = vpop.f32.mrf.mxu0
        %v3501 = vadd.f32 %v3412, %v3500
        %v3502 = vpop.f32.mrf.mxu0
        %v3503 = vadd.f32 %v3414, %v3502
        %3504 = vmatmul.bf16.gmra.mxu0 %v2917
        %v3505 = vpop.f32.mrf.mxu0
        %v3506 = vadd.f32 %v3417, %v3505
        %v3507 = vpop.f32.mrf.mxu0
        %v3508 = vadd.f32 %v3419, %v3507
        %3509 = vmatmul.bf16.gmra.mxu0 %v2919
        %v3510 = vpop.f32.mrf.mxu0
        %v3511 = vadd.f32 %v3422, %v3510
        %v3512 = vpop.f32.mrf.mxu0
        %v3513 = vadd.f32 %v3424, %v3512
        %3514 = vmatmul.bf16.gmra.mxu0 %v2921
        %v3515 = vpop.f32.mrf.mxu0
        %v3516 = vadd.f32 %v3427, %v3515
        %v3517 = vpop.f32.mrf.mxu0
        %v3518 = vadd.f32 %v3429, %v3517
        %3519 = vmatmul.bf16.gmra.mxu0 %v2923
        %v3520 = vpop.f32.mrf.mxu0
        %v3521 = vadd.f32 %v3432, %v3520
        %v3522 = vpop.f32.mrf.mxu0
        %v3523 = vadd.f32 %v3434, %v3522
        %3524 = vmatmul.bf16.gmra.mxu0 %v2925
        %v3525 = vpop.f32.mrf.mxu0
        %v3526 = vadd.f32 %v3437, %v3525
        %v3527 = vpop.f32.mrf.mxu0
        %v3528 = vadd.f32 %v3439, %v3527
        %3529 = vmatmul.bf16.gmra.mxu0 %v2927
        %v3530 = vpop.f32.mrf.mxu0
        %v3531 = vadd.f32 %v3442, %v3530
        %v3532 = vpop.f32.mrf.mxu0
        %v3533 = vadd.f32 %v3444, %v3532
        %3534 = vmatmul.bf16.gmra.mxu0 %v2929
        %v3535 = vpop.f32.mrf.mxu0
        %v3536 = vadd.f32 %v3447, %v3535
        %v3537 = vpop.f32.mrf.mxu0
        %v3538 = vadd.f32 %v3449, %v3537
        %3539 = vmatmul.bf16.gmra.mxu0 %v2931
        %v3540 = vpop.f32.mrf.mxu0
        %v3541 = vadd.f32 %v3452, %v3540
        %v3542 = vpop.f32.mrf.mxu0
        %v3543 = vadd.f32 %v3454, %v3542
        %3544 = vmatmul.bf16.gmra.mxu0 %v2933
        %v3545 = vpop.f32.mrf.mxu0
        %v3546 = vadd.f32 %v3457, %v3545
        %v3547 = vpop.f32.mrf.mxu0
        %v3548 = vadd.f32 %v3459, %v3547
        %3549 = vmatmul.bf16.gmra.mxu0 %v2935
        %v3550 = vpop.f32.mrf.mxu0
        %v3551 = vadd.f32 %v3462, %v3550
        %v3552 = vpop.f32.mrf.mxu0
        %v3553 = vadd.f32 %v3464, %v3552
        %3554 = vmatmul.bf16.gmra.mxu0 %v2937
        %v3555 = vpop.f32.mrf.mxu0
        %v3556 = vadd.f32 %v3467, %v3555
        %v3557 = vpop.f32.mrf.mxu0
        %v3558 = vadd.f32 %v3469, %v3557
        %3559 = vmatmul.bf16.gmra.mxu0 %v2939
        %v3560 = vpop.f32.mrf.mxu0
        %v3561 = vadd.f32 %v3472, %v3560
        %v3562 = vpop.f32.mrf.mxu0
        %v3563 = vadd.f32 %v3474, %v3562
        %3564 = vmatmul.bf16.gmra.mxu0 %v2941
        %v3565 = vpop.f32.mrf.mxu0
        %v3566 = vadd.f32 %v3477, %v3565
        %v3567 = vpop.f32.mrf.mxu0
        %v3568 = vadd.f32 %v3479, %v3567
        %3569 = vdwg.mxu0
        %v3570 = vpack.c.bf16 %v3493, %v3491
        %v3571 = vpack.c.bf16 %v3498, %v3496
        %v3572 = vpack.c.bf16 %v3503, %v3501
        %v3573 = vpack.c.bf16 %v3508, %v3506
        %v3574 = vpack.c.bf16 %v3513, %v3511
        %v3575 = vpack.c.bf16 %v3518, %v3516
        %v3576 = vpack.c.bf16 %v3523, %v3521
        %v3577 = vpack.c.bf16 %v3528, %v3526
        %v3578 = vpack.c.bf16 %v3533, %v3531
        %v3579 = vpack.c.bf16 %v3538, %v3536
        %v3580 = vpack.c.bf16 %v3543, %v3541
        %v3581 = vpack.c.bf16 %v3548, %v3546
        %v3582 = vpack.c.bf16 %v3553, %v3551
        %v3583 = vpack.c.bf16 %v3558, %v3556
        %v3584 = vpack.c.bf16 %v3563, %v3561
        %v3585 = vpack.c.bf16 %v3568, %v3566
        %3586 = vmatpush.bf16.msra.mxu0 %v3577
        %3587 = vmatpush.bf16.msra.mxu0 %v3576
        %3588 = vmatpush.bf16.msra.mxu0 %v3575
        %3589 = vmatpush.bf16.msra.mxu0 %v3574
        %3590 = vmatpush.bf16.msra.mxu0 %v3573
        %3591 = vmatpush.bf16.msra.mxu0 %v3572
        %3592 = vmatpush.bf16.msra.mxu0 %v3571
        %3593 = vmatpush.bf16.msra.mxu0 %v3570
        %3594 = vmatmul.bf16.gmra.mxu0 %v984
        %v3595 = vpop.f32.mrf.mxu0
        %v3596 = vadd.f32 0.0, %v3595
        %v3597 = vpop.f32.mrf.mxu0
        %v3598 = vadd.f32 0.0, %v3597
        %3599 = vmatmul.bf16.gmra.mxu0 %v986
        %v3600 = vpop.f32.mrf.mxu0
        %v3601 = vadd.f32 0.0, %v3600
        %v3602 = vpop.f32.mrf.mxu0
        %v3603 = vadd.f32 0.0, %v3602
        %3604 = vmatmul.bf16.gmra.mxu0 %v988
        %v3605 = vpop.f32.mrf.mxu0
        %v3606 = vadd.f32 0.0, %v3605
        %v3607 = vpop.f32.mrf.mxu0
        %v3608 = vadd.f32 0.0, %v3607
        %3609 = vmatmul.bf16.gmra.mxu0 %v990
        %v3610 = vpop.f32.mrf.mxu0
        %v3611 = vadd.f32 0.0, %v3610
        %v3612 = vpop.f32.mrf.mxu0
        %v3613 = vadd.f32 0.0, %v3612
        %3614 = vmatmul.bf16.gmra.mxu0 %v992
        %v3615 = vpop.f32.mrf.mxu0
        %v3616 = vadd.f32 0.0, %v3615
        %v3617 = vpop.f32.mrf.mxu0
        %v3618 = vadd.f32 0.0, %v3617
        %3619 = vmatmul.bf16.gmra.mxu0 %v994
        %v3620 = vpop.f32.mrf.mxu0
        %v3621 = vadd.f32 0.0, %v3620
        %v3622 = vpop.f32.mrf.mxu0
        %v3623 = vadd.f32 0.0, %v3622
        %3624 = vmatmul.bf16.gmra.mxu0 %v996
        %v3625 = vpop.f32.mrf.mxu0
        %v3626 = vadd.f32 0.0, %v3625
        %v3627 = vpop.f32.mrf.mxu0
        %v3628 = vadd.f32 0.0, %v3627
        %3629 = vmatmul.bf16.gmra.mxu0 %v998
        %v3630 = vpop.f32.mrf.mxu0
        %v3631 = vadd.f32 0.0, %v3630
        %v3632 = vpop.f32.mrf.mxu0
        %v3633 = vadd.f32 0.0, %v3632
        %3634 = vmatmul.bf16.gmra.mxu0 %v1000
        %v3635 = vpop.f32.mrf.mxu0
        %v3636 = vadd.f32 0.0, %v3635
        %v3637 = vpop.f32.mrf.mxu0
        %v3638 = vadd.f32 0.0, %v3637
        %3639 = vmatmul.bf16.gmra.mxu0 %v1002
        %v3640 = vpop.f32.mrf.mxu0
        %v3641 = vadd.f32 0.0, %v3640
        %v3642 = vpop.f32.mrf.mxu0
        %v3643 = vadd.f32 0.0, %v3642
        %3644 = vmatmul.bf16.gmra.mxu0 %v1004
        %v3645 = vpop.f32.mrf.mxu0
        %v3646 = vadd.f32 0.0, %v3645
        %v3647 = vpop.f32.mrf.mxu0
        %v3648 = vadd.f32 0.0, %v3647
        %3649 = vmatmul.bf16.gmra.mxu0 %v1006
        %v3650 = vpop.f32.mrf.mxu0
        %v3651 = vadd.f32 0.0, %v3650
        %v3652 = vpop.f32.mrf.mxu0
        %v3653 = vadd.f32 0.0, %v3652
        %3654 = vmatmul.bf16.gmra.mxu0 %v1008
        %v3655 = vpop.f32.mrf.mxu0
        %v3656 = vadd.f32 0.0, %v3655
        %v3657 = vpop.f32.mrf.mxu0
        %v3658 = vadd.f32 0.0, %v3657
        %3659 = vmatmul.bf16.gmra.mxu0 %v1010
        %v3660 = vpop.f32.mrf.mxu0
        %v3661 = vadd.f32 0.0, %v3660
        %v3662 = vpop.f32.mrf.mxu0
        %v3663 = vadd.f32 0.0, %v3662
        %3664 = vmatmul.bf16.gmra.mxu0 %v1012
        %v3665 = vpop.f32.mrf.mxu0
        %v3666 = vadd.f32 0.0, %v3665
        %v3667 = vpop.f32.mrf.mxu0
        %v3668 = vadd.f32 0.0, %v3667
        %3669 = vmatmul.bf16.gmra.mxu0 %v1014
        %v3670 = vpop.f32.mrf.mxu0
        %v3671 = vadd.f32 0.0, %v3670
        %v3672 = vpop.f32.mrf.mxu0
        %v3673 = vadd.f32 0.0, %v3672
        %3674 = vdwg.mxu0
        %3675 = vmatpush.bf16.msra.mxu0 %v3585
        %3676 = vmatpush.bf16.msra.mxu0 %v3584
        %3677 = vmatpush.bf16.msra.mxu0 %v3583
        %3678 = vmatpush.bf16.msra.mxu0 %v3582
        %3679 = vmatpush.bf16.msra.mxu0 %v3581
        %3680 = vmatpush.bf16.msra.mxu0 %v3580
        %3681 = vmatpush.bf16.msra.mxu0 %v3579
        %3682 = vmatpush.bf16.msra.mxu0 %v3578
        %3683 = vmatmul.bf16.gmra.mxu0 %v985
        %v3684 = vpop.f32.mrf.mxu0
        %v3685 = vadd.f32 %v3596, %v3684
        %v3686 = vpop.f32.mrf.mxu0
        %v3687 = vadd.f32 %v3598, %v3686
        %3688 = vmatmul.bf16.gmra.mxu0 %v987
        %v3689 = vpop.f32.mrf.mxu0
        %v3690 = vadd.f32 %v3601, %v3689
        %v3691 = vpop.f32.mrf.mxu0
        %v3692 = vadd.f32 %v3603, %v3691
        %3693 = vmatmul.bf16.gmra.mxu0 %v989
        %v3694 = vpop.f32.mrf.mxu0
        %v3695 = vadd.f32 %v3606, %v3694
        %v3696 = vpop.f32.mrf.mxu0
        %v3697 = vadd.f32 %v3608, %v3696
        %3698 = vmatmul.bf16.gmra.mxu0 %v991
        %v3699 = vpop.f32.mrf.mxu0
        %v3700 = vadd.f32 %v3611, %v3699
        %v3701 = vpop.f32.mrf.mxu0
        %v3702 = vadd.f32 %v3613, %v3701
        %3703 = vmatmul.bf16.gmra.mxu0 %v993
        %v3704 = vpop.f32.mrf.mxu0
        %v3705 = vadd.f32 %v3616, %v3704
        %v3706 = vpop.f32.mrf.mxu0
        %v3707 = vadd.f32 %v3618, %v3706
        %3708 = vmatmul.bf16.gmra.mxu0 %v995
        %v3709 = vpop.f32.mrf.mxu0
        %v3710 = vadd.f32 %v3621, %v3709
        %v3711 = vpop.f32.mrf.mxu0
        %v3712 = vadd.f32 %v3623, %v3711
        %3713 = vmatmul.bf16.gmra.mxu0 %v997
        %v3714 = vpop.f32.mrf.mxu0
        %v3715 = vadd.f32 %v3626, %v3714
        %v3716 = vpop.f32.mrf.mxu0
        %v3717 = vadd.f32 %v3628, %v3716
        %3718 = vmatmul.bf16.gmra.mxu0 %v999
        %v3719 = vpop.f32.mrf.mxu0
        %v3720 = vadd.f32 %v3631, %v3719
        %v3721 = vpop.f32.mrf.mxu0
        %v3722 = vadd.f32 %v3633, %v3721
        %3723 = vmatmul.bf16.gmra.mxu0 %v1001
        %v3724 = vpop.f32.mrf.mxu0
        %v3725 = vadd.f32 %v3636, %v3724
        %v3726 = vpop.f32.mrf.mxu0
        %v3727 = vadd.f32 %v3638, %v3726
        %3728 = vmatmul.bf16.gmra.mxu0 %v1003
        %v3729 = vpop.f32.mrf.mxu0
        %v3730 = vadd.f32 %v3641, %v3729
        %v3731 = vpop.f32.mrf.mxu0
        %v3732 = vadd.f32 %v3643, %v3731
        %3733 = vmatmul.bf16.gmra.mxu0 %v1005
        %v3734 = vpop.f32.mrf.mxu0
        %v3735 = vadd.f32 %v3646, %v3734
        %v3736 = vpop.f32.mrf.mxu0
        %v3737 = vadd.f32 %v3648, %v3736
        %3738 = vmatmul.bf16.gmra.mxu0 %v1007
        %v3739 = vpop.f32.mrf.mxu0
        %v3740 = vadd.f32 %v3651, %v3739
        %v3741 = vpop.f32.mrf.mxu0
        %v3742 = vadd.f32 %v3653, %v3741
        %3743 = vmatmul.bf16.gmra.mxu0 %v1009
        %v3744 = vpop.f32.mrf.mxu0
        %v3745 = vadd.f32 %v3656, %v3744
        %v3746 = vpop.f32.mrf.mxu0
        %v3747 = vadd.f32 %v3658, %v3746
        %3748 = vmatmul.bf16.gmra.mxu0 %v1011
        %v3749 = vpop.f32.mrf.mxu0
        %v3750 = vadd.f32 %v3661, %v3749
        %v3751 = vpop.f32.mrf.mxu0
        %v3752 = vadd.f32 %v3663, %v3751
        %3753 = vmatmul.bf16.gmra.mxu0 %v1013
        %v3754 = vpop.f32.mrf.mxu0
        %v3755 = vadd.f32 %v3666, %v3754
        %v3756 = vpop.f32.mrf.mxu0
        %v3757 = vadd.f32 %v3668, %v3756
        %3758 = vmatmul.bf16.gmra.mxu0 %v1015
        %v3759 = vpop.f32.mrf.mxu0
        %v3760 = vadd.f32 %v3671, %v3759
        %v3761 = vpop.f32.mrf.mxu0
        %v3762 = vadd.f32 %v3673, %v3761
        %3763 = vdwg.mxu0
        %3764 = vmatpush.bf16.msra.mxu0 %v3255
        %3765 = vmatpush.bf16.msra.mxu0 %v3254
        %3766 = vmatpush.bf16.msra.mxu0 %v3253
        %3767 = vmatpush.bf16.msra.mxu0 %v3252
        %3768 = vmatpush.bf16.msra.mxu0 %v3251
        %3769 = vmatpush.bf16.msra.mxu0 %v3250
        %3770 = vmatpush.bf16.msra.mxu0 %v3249
        %3771 = vmatpush.bf16.msra.mxu0 %v3248
        %3772 = vmatmul.bf16.gmra.mxu0 %v550
        %v3773 = vpop.f32.mrf.mxu0
        %v3774 = vadd.f32 %v3685, %v3773
        %v3775 = vpop.f32.mrf.mxu0
        %v3776 = vadd.f32 %v3687, %v3775
        %3777 = vmatmul.bf16.gmra.mxu0 %v552
        %v3778 = vpop.f32.mrf.mxu0
        %v3779 = vadd.f32 %v3690, %v3778
        %v3780 = vpop.f32.mrf.mxu0
        %v3781 = vadd.f32 %v3692, %v3780
        %3782 = vmatmul.bf16.gmra.mxu0 %v554
        %v3783 = vpop.f32.mrf.mxu0
        %v3784 = vadd.f32 %v3695, %v3783
        %v3785 = vpop.f32.mrf.mxu0
        %v3786 = vadd.f32 %v3697, %v3785
        %3787 = vmatmul.bf16.gmra.mxu0 %v556
        %v3788 = vpop.f32.mrf.mxu0
        %v3789 = vadd.f32 %v3700, %v3788
        %v3790 = vpop.f32.mrf.mxu0
        %v3791 = vadd.f32 %v3702, %v3790
        %3792 = vmatmul.bf16.gmra.mxu0 %v558
        %v3793 = vpop.f32.mrf.mxu0
        %v3794 = vadd.f32 %v3705, %v3793
        %v3795 = vpop.f32.mrf.mxu0
        %v3796 = vadd.f32 %v3707, %v3795
        %3797 = vmatmul.bf16.gmra.mxu0 %v560
        %v3798 = vpop.f32.mrf.mxu0
        %v3799 = vadd.f32 %v3710, %v3798
        %v3800 = vpop.f32.mrf.mxu0
        %v3801 = vadd.f32 %v3712, %v3800
        %3802 = vmatmul.bf16.gmra.mxu0 %v562
        %v3803 = vpop.f32.mrf.mxu0
        %v3804 = vadd.f32 %v3715, %v3803
        %v3805 = vpop.f32.mrf.mxu0
        %v3806 = vadd.f32 %v3717, %v3805
        %3807 = vmatmul.bf16.gmra.mxu0 %v564
        %v3808 = vpop.f32.mrf.mxu0
        %v3809 = vadd.f32 %v3720, %v3808
        %v3810 = vpop.f32.mrf.mxu0
        %v3811 = vadd.f32 %v3722, %v3810
        %3812 = vmatmul.bf16.gmra.mxu0 %v566
        %v3813 = vpop.f32.mrf.mxu0
        %v3814 = vadd.f32 %v3725, %v3813
        %v3815 = vpop.f32.mrf.mxu0
        %v3816 = vadd.f32 %v3727, %v3815
        %3817 = vmatmul.bf16.gmra.mxu0 %v568
        %v3818 = vpop.f32.mrf.mxu0
        %v3819 = vadd.f32 %v3730, %v3818
        %v3820 = vpop.f32.mrf.mxu0
        %v3821 = vadd.f32 %v3732, %v3820
        %3822 = vmatmul.bf16.gmra.mxu0 %v570
        %v3823 = vpop.f32.mrf.mxu0
        %v3824 = vadd.f32 %v3735, %v3823
        %v3825 = vpop.f32.mrf.mxu0
        %v3826 = vadd.f32 %v3737, %v3825
        %3827 = vmatmul.bf16.gmra.mxu0 %v572
        %v3828 = vpop.f32.mrf.mxu0
        %v3829 = vadd.f32 %v3740, %v3828
        %v3830 = vpop.f32.mrf.mxu0
        %v3831 = vadd.f32 %v3742, %v3830
        %3832 = vmatmul.bf16.gmra.mxu0 %v574
        %v3833 = vpop.f32.mrf.mxu0
        %v3834 = vadd.f32 %v3745, %v3833
        %v3835 = vpop.f32.mrf.mxu0
        %v3836 = vadd.f32 %v3747, %v3835
        %3837 = vmatmul.bf16.gmra.mxu0 %v576
        %v3838 = vpop.f32.mrf.mxu0
        %v3839 = vadd.f32 %v3750, %v3838
        %v3840 = vpop.f32.mrf.mxu0
        %v3841 = vadd.f32 %v3752, %v3840
        %3842 = vmatmul.bf16.gmra.mxu0 %v578
        %v3843 = vpop.f32.mrf.mxu0
        %v3844 = vadd.f32 %v3755, %v3843
        %v3845 = vpop.f32.mrf.mxu0
        %v3846 = vadd.f32 %v3757, %v3845
        %3847 = vmatmul.bf16.gmra.mxu0 %v580
        %v3848 = vpop.f32.mrf.mxu0
        %v3849 = vadd.f32 %v3760, %v3848
        %v3850 = vpop.f32.mrf.mxu0
        %v3851 = vadd.f32 %v3762, %v3850
        %3852 = vdwg.mxu0
        %3853 = vmatpush.bf16.msra.mxu0 %v3263
        %3854 = vmatpush.bf16.msra.mxu0 %v3262
        %3855 = vmatpush.bf16.msra.mxu0 %v3261
        %3856 = vmatpush.bf16.msra.mxu0 %v3260
        %3857 = vmatpush.bf16.msra.mxu0 %v3259
        %3858 = vmatpush.bf16.msra.mxu0 %v3258
        %3859 = vmatpush.bf16.msra.mxu0 %v3257
        %3860 = vmatpush.bf16.msra.mxu0 %v3256
        %3861 = vmatmul.bf16.gmra.mxu0 %v551
        %v3862 = vpop.f32.mrf.mxu0
        %v3863 = vadd.f32 %v3774, %v3862
        %v3864 = vpop.f32.mrf.mxu0
        %v3865 = vadd.f32 %v3776, %v3864
        %3866 = vmatmul.bf16.gmra.mxu0 %v553
        %v3867 = vpop.f32.mrf.mxu0
        %v3868 = vadd.f32 %v3779, %v3867
        %v3869 = vpop.f32.mrf.mxu0
        %v3870 = vadd.f32 %v3781, %v3869
        %3871 = vmatmul.bf16.gmra.mxu0 %v555
        %v3872 = vpop.f32.mrf.mxu0
        %v3873 = vadd.f32 %v3784, %v3872
        %v3874 = vpop.f32.mrf.mxu0
        %v3875 = vadd.f32 %v3786, %v3874
        %3876 = vmatmul.bf16.gmra.mxu0 %v557
        %v3877 = vpop.f32.mrf.mxu0
        %v3878 = vadd.f32 %v3789, %v3877
        %v3879 = vpop.f32.mrf.mxu0
        %v3880 = vadd.f32 %v3791, %v3879
        %3881 = vmatmul.bf16.gmra.mxu0 %v559
        %v3882 = vpop.f32.mrf.mxu0
        %v3883 = vadd.f32 %v3794, %v3882
        %v3884 = vpop.f32.mrf.mxu0
        %v3885 = vadd.f32 %v3796, %v3884
        %3886 = vmatmul.bf16.gmra.mxu0 %v561
        %v3887 = vpop.f32.mrf.mxu0
        %v3888 = vadd.f32 %v3799, %v3887
        %v3889 = vpop.f32.mrf.mxu0
        %v3890 = vadd.f32 %v3801, %v3889
        %3891 = vmatmul.bf16.gmra.mxu0 %v563
        %v3892 = vpop.f32.mrf.mxu0
        %v3893 = vadd.f32 %v3804, %v3892
        %v3894 = vpop.f32.mrf.mxu0
        %v3895 = vadd.f32 %v3806, %v3894
        %3896 = vmatmul.bf16.gmra.mxu0 %v565
        %v3897 = vpop.f32.mrf.mxu0
        %v3898 = vadd.f32 %v3809, %v3897
        %v3899 = vpop.f32.mrf.mxu0
        %v3900 = vadd.f32 %v3811, %v3899
        %3901 = vmatmul.bf16.gmra.mxu0 %v567
        %v3902 = vpop.f32.mrf.mxu0
        %v3903 = vadd.f32 %v3814, %v3902
        %v3904 = vpop.f32.mrf.mxu0
        %v3905 = vadd.f32 %v3816, %v3904
        %3906 = vmatmul.bf16.gmra.mxu0 %v569
        %v3907 = vpop.f32.mrf.mxu0
        %v3908 = vadd.f32 %v3819, %v3907
        %v3909 = vpop.f32.mrf.mxu0
        %v3910 = vadd.f32 %v3821, %v3909
        %3911 = vmatmul.bf16.gmra.mxu0 %v571
        %v3912 = vpop.f32.mrf.mxu0
        %v3913 = vadd.f32 %v3824, %v3912
        %v3914 = vpop.f32.mrf.mxu0
        %v3915 = vadd.f32 %v3826, %v3914
        %3916 = vmatmul.bf16.gmra.mxu0 %v573
        %v3917 = vpop.f32.mrf.mxu0
        %v3918 = vadd.f32 %v3829, %v3917
        %v3919 = vpop.f32.mrf.mxu0
        %v3920 = vadd.f32 %v3831, %v3919
        %3921 = vmatmul.bf16.gmra.mxu0 %v575
        %v3922 = vpop.f32.mrf.mxu0
        %v3923 = vadd.f32 %v3834, %v3922
        %v3924 = vpop.f32.mrf.mxu0
        %v3925 = vadd.f32 %v3836, %v3924
        %3926 = vmatmul.bf16.gmra.mxu0 %v577
        %v3927 = vpop.f32.mrf.mxu0
        %v3928 = vadd.f32 %v3839, %v3927
        %v3929 = vpop.f32.mrf.mxu0
        %v3930 = vadd.f32 %v3841, %v3929
        %3931 = vmatmul.bf16.gmra.mxu0 %v579
        %v3932 = vpop.f32.mrf.mxu0
        %v3933 = vadd.f32 %v3844, %v3932
        %v3934 = vpop.f32.mrf.mxu0
        %v3935 = vadd.f32 %v3846, %v3934
        %3936 = vmatmul.bf16.gmra.mxu0 %v581
        %v3937 = vpop.f32.mrf.mxu0
        %v3938 = vadd.f32 %v3849, %v3937
        %v3939 = vpop.f32.mrf.mxu0
        %v3940 = vadd.f32 %v3851, %v3939
        %3941 = vdwg.mxu0
        %3942 = vst [vmem:[%s352] sm:$0xff] %v3863
        %3943 = vst [vmem:[%s352 + $0x8] sm:$0xff] %v3865
        %3944 = vst [vmem:[%s352 + $0x10] sm:$0xff] %v3868
        %3945 = vst [vmem:[%s352 + $0x18] sm:$0xff] %v3870
        %3946 = vst [vmem:[%s352 + $0x20] sm:$0xff] %v3873
        %3947 = vst [vmem:[%s352 + $0x28] sm:$0xff] %v3875
        %3948 = vst [vmem:[%s352 + $0x30] sm:$0xff] %v3878
        %3949 = vst [vmem:[%s352 + $0x38] sm:$0xff] %v3880
        %3950 = vst [vmem:[%s352 + $0x40] sm:$0xff] %v3883
        %3951 = vst [vmem:[%s352 + $0x48] sm:$0xff] %v3885
        %3952 = vst [vmem:[%s352 + $0x50] sm:$0xff] %v3888
        %3953 = vst [vmem:[%s352 + $0x58] sm:$0xff] %v3890
        %3954 = vst [vmem:[%s352 + $0x60] sm:$0xff] %v3893
        %3955 = vst [vmem:[%s352 + $0x68] sm:$0xff] %v3895
        %3956 = vst [vmem:[%s352 + $0x70] sm:$0xff] %v3898
        %3957 = vst [vmem:[%s352 + $0x78] sm:$0xff] %v3900
        %3958 = vst [vmem:[%s352 + $0x80] sm:$0xff] %v3903
        %3959 = vst [vmem:[%s352 + $0x88] sm:$0xff] %v3905
        %3960 = vst [vmem:[%s352 + $0x90] sm:$0xff] %v3908
        %3961 = vst [vmem:[%s352 + $0x98] sm:$0xff] %v3910
        %3962 = vst [vmem:[%s352 + $0xa0] sm:$0xff] %v3913
        %3963 = vst [vmem:[%s352 + $0xa8] sm:$0xff] %v3915
        %3964 = vst [vmem:[%s352 + $0xb0] sm:$0xff] %v3918
        %3965 = vst [vmem:[%s352 + $0xb8] sm:$0xff] %v3920
        %3966 = vst [vmem:[%s352 + $0xc0] sm:$0xff] %v3923
        %3967 = vst [vmem:[%s352 + $0xc8] sm:$0xff] %v3925
        %3968 = vst [vmem:[%s352 + $0xd0] sm:$0xff] %v3928
        %3969 = vst [vmem:[%s352 + $0xd8] sm:$0xff] %v3930
        %3970 = vst [vmem:[%s352 + $0xe0] sm:$0xff] %v3933
        %3971 = vst [vmem:[%s352 + $0xe8] sm:$0xff] %v3935
        %3972 = vst [vmem:[%s352 + $0xf0] sm:$0xff] %v3938
        %3973 = vst [vmem:[%s352 + $0xf8] sm:$0xff] %v3940
        %s3974 = sand.u32 %s247, 1
        %s3975 = scalar_lea.sflag [#allocation3], %s3974
        %s3976 = sand.u32 %s247, 1
        %s3977 = smul.addr %s3976, 256
        %s3978 = scalar_lea.vmem [#allocation2], %s3977
        // Predicated region
        $region61: #{apply.1} parent=59 // pred_check
          %p3979 = pneg %p257
        $region62: #{apply.1} parent=59 // pred_check_branch
          %3981 = sbr.rel (%p3979) target = $region64
        $region63: #{apply.1} parent=59 // pred_region
          %3983 = vsyncadd %s3975, 0
          %s3984 = smul.addr %s24, 32
          %s3985 = smul.addr %s3984, 8
          %s3986 = scalar_lea.hbm %s10, %s3985
          %s3987 = sshll.u32 %s3978, 4
          %s3988 = int_to_ptr.vmem [resolvable:$true] %s3987
          %s3989 = sshll.u32 %s3986, 4
          %s3990 = int_to_ptr.hbm [resolvable:$true] %s3989
          %3995 = dma.vmem_to_hbm [thread:$0]  %s3988, 4096, %s3990, %s3975, 128, 128, 8
        $region64: #{apply.1} parent=59 // pred_fallthru
          _
      $region60: #{apply.1} parent=5 // pred_fallthru
        _
      %p3996 = scmp.le.s32.totalorder 2, %s19
      // Predicated region
      $region65: #{apply.1} parent=5 // pred_check
        %p3997 = pneg %p3996
      $region66: #{apply.1} parent=5 // pred_check_branch
        %3999 = sbr.rel (%p3997) target = $region68
      $region67: #{apply.1} parent=5 // pred_region
        %s4000 = ssub.s32 %s19, 2
        // Predicated region
        $region69: #{apply.1} parent=67 // pred_check
          %p4001 = pneg %p263
        $region70: #{apply.1} parent=67 // pred_check_branch
          %4003 = sbr.rel (%p4001) target = $region72
        $region71: #{apply.1} parent=67 // pred_region
          %s4004 = sand.u32 %s248, 1
          %s4005 = scalar_lea.sflag [#allocation3], %s4004
          %s4006 = sand.u32 %s248, 1
          %s4007 = smul.addr %s4006, 256
          %s4008 = scalar_lea.vmem [#allocation2], %s4007
          %4010 = dma.done %s4005, 4096
        $region72: #{apply.1} parent=67 // pred_fallthru
          _
      $region68: #{apply.1} parent=5 // pred_fallthru
        _
    $region6: #{apply.1} parent=1 // loop_footer
      %s23 = sadd.s32 1, %s19
    $region7: #{apply.1} parent=1 // loop_footer_branch
      %18 = sbr.rel target = $region3
    $region8: #{apply.1} parent=1 // loop_exit
      _
    %4011 = vsyncpa [#allocation3], 1
    %s4012 = scalar_lea.sflag [#allocation3], 1
    %4013 = vsyncpa %s4012, 1

</llo_original>
